<compile_context>
chip_gen: v6e
topology: v6e:2x2x1
jax: 0.10.0
libtpu: 0.0.40
codegen_flags: <defaults>
</compile_context>

<pallas_src>
import functools

import jax
import jax.numpy as jnp
from jax import lax
from jax.experimental import pallas as pl
from jax.experimental.pallas import tpu as pltpu


def _sigmoid(x):
    # One EUP transcendental (tanh) instead of exp + reciprocal.
    return 0.5 * jnp.tanh(0.5 * x) + 0.5


def _bilstm_kernel(xwf_ref, xwb_ref, whhf_ref, whhb_ref, h0_ref, c0_ref,
                   outf_ref, outb_ref, hn_ref, cn_ref,
                   hf_sc, cf_sc, hb_sc, cb_sc, *, chunk, hidden, unroll):
    """One grid step = one time-chunk, BOTH directions interleaved.

    xwf_ref/xwb_ref : (chunk, B, 4H)  precomputed x @ W_ih + bias per dir
    whhf_ref/whhb_ref: (H, 4H)        fused recurrent weights (i|f|g|o)
    h0/c0           : (2, B, H)       initial states (dir 0 = fwd, 1 = bwd)
    outf/outb       : (chunk, B, H)   per-timestep hidden outputs
    hn/cn           : (2, B, H)       final states (rewritten each chunk)
    *_sc            : (B, H) VMEM scratch carrying state across chunks
    """
    c = pl.program_id(0)
    H = hidden

    @pl.when(c == 0)
    def _():
        hf_sc[...] = h0_ref[0]
        cf_sc[...] = c0_ref[0]
        hb_sc[...] = h0_ref[1]
        cb_sc[...] = c0_ref[1]

    wf = whhf_ref[...]                      # (H, 4H)
    wb = whhb_ref[...]

    def gates(z):
        # PyTorch gate order (i, f, g, o), static lane slices of (B, 4H).
        i = _sigmoid(z[:, 0 * H:1 * H])
        f = _sigmoid(z[:, 1 * H:2 * H])
        g = jnp.tanh(z[:, 2 * H:3 * H])
        o = _sigmoid(z[:, 3 * H:4 * H])
        return i, f, g, o

    def step(s, carry):
        hf, cf, hb, cb = carry
        sb = chunk - 1 - s                  # backward walks the chunk reversed
        # One fused (B,H)@(H,4H) MXU push per direction; the two directions
        # are independent, so their matmuls/EUP work overlap.
        zf = xwf_ref[s] + jnp.dot(hf, wf, preferred_element_type=jnp.float32)
        zb = xwb_ref[sb] + jnp.dot(hb, wb, preferred_element_type=jnp.float32)
        fi, ff, fg, fo = gates(zf)
        bi, bf, bg, bo = gates(zb)
        cf_new = ff * cf + fi * fg
        hf_new = fo * jnp.tanh(cf_new)
        cb_new = bf * cb + bi * bg
        hb_new = bo * jnp.tanh(cb_new)
        outf_ref[s] = hf_new                # (B, H) slab, leading-axis index
        outb_ref[sb] = hb_new
        return hf_new, cf_new, hb_new, cb_new

    init = (hf_sc[...], cf_sc[...], hb_sc[...], cb_sc[...])
    hf_fin, cf_fin, hb_fin, cb_fin = lax.fori_loop(
        0, chunk, step, init, unroll=unroll)

    # Carry state to the next time-chunk.
    hf_sc[...] = hf_fin
    cf_sc[...] = cf_fin
    hb_sc[...] = hb_fin
    cb_sc[...] = cb_fin

    # Final states: rewritten every chunk (cheap; robust to early writeback).
    hn_ref[0] = hf_fin
    hn_ref[1] = hb_fin
    cn_ref[0] = cf_fin
    cn_ref[1] = cb_fin


def _vmem_estimate(chunk, B, H):
    f32 = 4
    xw = 2 * 2 * chunk * B * 4 * H * f32          # 2 dirs, double-buffered
    out = 2 * 2 * chunk * B * H * f32
    whh = 2 * 2 * H * 4 * H * f32
    states = 8 * 2 * B * H * f32                  # h0/c0/hn/cn, double-buffered
    scratch = 4 * B * H * f32
    return xw + out + whh + states + scratch


def _pick_chunk(T, B, H, budget=24 << 20, cap=256):
    """Largest divisor of T whose double-buffered footprint fits the budget."""
    best = 1
    for c in range(1, T + 1):
        if T % c == 0 and c <= cap and _vmem_estimate(c, B, H) <= budget:
            best = c
    return best


def bilstm_pallas(xw_f, xw_b, whh_f, whh_b, h0, c0, *, chunk=None):
    """Bidirectional LSTM recurrence (both directions interleaved).

    xw_f, xw_b : (T, B, 4H)  precomputed x @ W_ih + (b_ih + b_hh), fused gates
    whh_f/whh_b: (H, 4H)     fused recurrent weights per direction
    h0, c0     : (2, B, H)   initial states
    Returns out_f (T,B,H), out_b (T,B,H), h_n (2,B,H), c_n (2,B,H).
    """
    T, B, G4H = xw_f.shape
    H = whh_f.shape[0]
    assert G4H == 4 * H
    if chunk is None:
        chunk = _pick_chunk(T, B, H)
    assert T % chunk == 0
    nc = T // chunk
    unroll = max(u for u in (1, 2, 4, 8) if chunk % u == 0)

    grid_spec = pltpu.PrefetchScalarGridSpec(
        num_scalar_prefetch=0,
        grid=(nc,),
        in_specs=[
            # forward consumes chunk c, backward consumes chunk nc-1-c
            pl.BlockSpec((chunk, B, 4 * H), lambda c: (c, 0, 0)),
            pl.BlockSpec((chunk, B, 4 * H), lambda c: (nc - 1 - c, 0, 0)),
            # time-invariant blocks: constant index -> DMA'd once
            pl.BlockSpec((H, 4 * H), lambda c: (0, 0)),
            pl.BlockSpec((H, 4 * H), lambda c: (0, 0)),
            pl.BlockSpec((2, B, H), lambda c: (0, 0, 0)),   # h0
            pl.BlockSpec((2, B, H), lambda c: (0, 0, 0)),   # c0
        ],
        out_specs=[
            pl.BlockSpec((chunk, B, H), lambda c: (c, 0, 0)),           # out_f
            pl.BlockSpec((chunk, B, H), lambda c: (nc - 1 - c, 0, 0)),  # out_b
            pl.BlockSpec((2, B, H), lambda c: (0, 0, 0)),               # h_n
            pl.BlockSpec((2, B, H), lambda c: (0, 0, 0)),               # c_n
        ],
        scratch_shapes=[
            pltpu.VMEM((B, H), jnp.float32),   # h forward
            pltpu.VMEM((B, H), jnp.float32),   # c forward
            pltpu.VMEM((B, H), jnp.float32),   # h backward
            pltpu.VMEM((B, H), jnp.float32),   # c backward
        ],
    )

    vmem_limit = int(min(64 << 20,
                         max(32 << 20, 1.5 * _vmem_estimate(chunk, B, H))))

    return pl.pallas_call(
        functools.partial(_bilstm_kernel, chunk=chunk, hidden=H,
                          unroll=unroll),
        grid_spec=grid_spec,
        out_shape=(
            jax.ShapeDtypeStruct((T, B, H), jnp.float32),
            jax.ShapeDtypeStruct((T, B, H), jnp.float32),
            jax.ShapeDtypeStruct((2, B, H), jnp.float32),
            jax.ShapeDtypeStruct((2, B, H), jnp.float32),
        ),
        compiler_params=pltpu.CompilerParams(
            # Time must stay sequential: state is carried across chunks.
            dimension_semantics=("arbitrary",),
            vmem_limit_bytes=vmem_limit),
    )(xw_f, xw_b, whh_f, whh_b, h0, c0)


def encoder_lstm_forward(params, inputs, hidden):
    """Mirrors EncoderLSTM.forward: embedding -> bidirectional LSTM.

    inputs: (B, T) int32 token ids.  hidden = (h0, c0), each (2, B, H).
    Returns (output (B, T, 2H), (h_n (2, B, H), c_n (2, B, H))).
    """
    embedded = jnp.take(params["embedding"], inputs, axis=0)       # (B, T, H)
    embedded = embedded.astype(jnp.float32)
    h0, c0 = hidden
    B = inputs.shape[0]
    H = params["whh"].shape[1]

    # Pad batch up to a sublane multiple (8) BEFORE the hoisted projection so
    # the kernel sees full (8, 128)-aligned tiles and unmasked stores.
    B_pad = -(-B // 8) * 8
    if B_pad != B:
        pb = B_pad - B
        embedded = jnp.pad(embedded, ((0, pb), (0, 0), (0, 0)))
        h0 = jnp.pad(h0, ((0, 0), (0, pb), (0, 0)))
        c0 = jnp.pad(c0, ((0, 0), (0, pb), (0, 0)))

    # Hoisted non-recurrent input projection as one big XLA matmul per
    # direction, produced directly in the kernel's lane-dense (T, B, 4H)
    # fused-gate layout (gate order i, f, g, o).
    xw_f = jnp.einsum("bth,hk->tbk", embedded, params["wih"][0],
                      preferred_element_type=jnp.float32) + params["bias"][0]
    xw_b = jnp.einsum("bth,hk->tbk", embedded, params["wih"][1],
                      preferred_element_type=jnp.float32) + params["bias"][1]

    out_f, out_b, h_n, c_n = bilstm_pallas(
        xw_f, xw_b, params["whh"][0], params["whh"][1], h0, c0)

    # PyTorch nn.LSTM(bidirectional=True, batch_first=True) output layout.
    output = jnp.concatenate([out_f, out_b], axis=-1)              # (T, Bp, 2H)
    output = jnp.transpose(output, (1, 0, 2))                      # (Bp, T, 2H)
    if B_pad != B:
        output = output[:B]
        h_n = h_n[:, :B]
        c_n = c_n[:, :B]
    return output, (h_n, c_n)


def _reference_forward(params, inputs, hidden):
    """Pure-JAX (lax.scan) reference replicating torch.nn.LSTM semantics."""
    embedded = jnp.take(params["embedding"], inputs, axis=0).astype(jnp.float32)
    x_tbh = jnp.transpose(embedded, (1, 0, 2))                     # (T, B, H)
    h0, c0 = hidden
    H = params["whh"].shape[1]

    def run_dir(d, reverse):
        wih = params["wih"][d]    # (H, 4H)
        whh = params["whh"][d]    # (H, 4H)
        b = params["bias"][d]     # (4H,)

        def step(carry, x_t):
            h, c = carry
            z = x_t @ wih + h @ whh + b
            i = jax.nn.sigmoid(z[:, 0:H])
            f = jax.nn.sigmoid(z[:, H:2 * H])
            g = jnp.tanh(z[:, 2 * H:3 * H])
            o = jax.nn.sigmoid(z[:, 3 * H:4 * H])
            c = f * c + i * g
            h = o * jnp.tanh(c)
            return (h, c), h

        (hn, cn), ys = lax.scan(step, (h0[d], c0[d]), x_tbh, reverse=reverse)
        return ys, hn, cn

    yf, hf, cf = run_dir(0, reverse=False)
    yb, hb, cb = run_dir(1, reverse=True)
    output = jnp.transpose(jnp.concatenate([yf, yb], axis=-1), (1, 0, 2))
    return output, (jnp.stack([hf, hb]), jnp.stack([cf, cb]))


def init_params(key, input_size, hidden_size):
    H = hidden_size
    k = 1.0 / jnp.sqrt(jnp.float32(H))
    ks = jax.random.split(key, 5)
    emb = jax.random.normal(ks[0], (input_size, H), jnp.float32)
    # PyTorch nn.LSTM stores weight_ih/_hh as (4H, H) per direction with gate
    # order (i, f, g, o); here they are kept pre-transposed and gate-fused:
    # wih[d][:, g*H:(g+1)*H] == weight_ih_l0{_reverse}[g*H:(g+1)*H, :].T
    wih = jax.random.uniform(ks[1], (2, H, 4 * H), jnp.float32, -k, k)
    whh = jax.random.uniform(ks[2], (2, H, 4 * H), jnp.float32, -k, k)
    b_ih = jax.random.uniform(ks[3], (2, 4 * H), jnp.float32, -k, k)
    b_hh = jax.random.uniform(ks[4], (2, 4 * H), jnp.float32, -k, k)
    # layer1 (Linear(2H, vocab_size)) exists in __init__ but is unused in
    # forward(); it is not needed for the forward pass.
    return {"embedding": emb, "wih": wih, "whh": whh, "bias": b_ih + b_hh}


if __name__ == "__main__":
    B, T, H = 2, 8, 32
    INPUT_SIZE = 50  # embedding vocabulary size

    key = jax.random.PRNGKey(0)
    pkey, ikey, hkey, ckey = jax.random.split(key, 4)
    params = init_params(pkey, INPUT_SIZE, H)

    inputs = jax.random.randint(ikey, (B, T), 0, INPUT_SIZE, dtype=jnp.int32)
    hidden = (0.1 * jax.random.normal(hkey, (2, B, H), jnp.float32),
              0.1 * jax.random.normal(ckey, (2, B, H), jnp.float32))

    fwd = jax.jit(encoder_lstm_forward)
    output, (h_n, c_n) = fwd(params, inputs, hidden)
    jax.block_until_ready((output, h_n, c_n))

    assert output.shape == (B, T, 2 * H)
    assert h_n.shape == (2, B, H) and c_n.shape == (2, B, H)

    ref_out, (ref_h, ref_c) = _reference_forward(params, inputs, hidden)
    assert jnp.allclose(output, ref_out, atol=1e-4, rtol=1e-4)
    assert jnp.allclose(h_n, ref_h, atol=1e-4, rtol=1e-4)
    assert jnp.allclose(c_n, ref_c, atol=1e-4, rtol=1e-4)

    print("KERNEL_OK")
</pallas_src>

<mosaic_0001>
module attributes {stable_mosaic.version = 11 : i64} {
  func.func @_bilstm_kernel(%arg0: i32, %arg1: memref<8x8x128xf32, #tpu.memory_space<vmem>>, %arg2: memref<8x8x128xf32, #tpu.memory_space<vmem>>, %arg3: memref<32x128xf32, #tpu.memory_space<vmem>>, %arg4: memref<32x128xf32, #tpu.memory_space<vmem>>, %arg5: memref<2x8x32xf32, #tpu.memory_space<vmem>>, %arg6: memref<2x8x32xf32, #tpu.memory_space<vmem>>, %arg7: memref<8x8x32xf32, #tpu.memory_space<vmem>>, %arg8: memref<8x8x32xf32, #tpu.memory_space<vmem>>, %arg9: memref<2x8x32xf32, #tpu.memory_space<vmem>>, %arg10: memref<2x8x32xf32, #tpu.memory_space<vmem>>, %arg11: memref<8x32xf32, #tpu.memory_space<vmem>>, %arg12: memref<8x32xf32, #tpu.memory_space<vmem>>, %arg13: memref<8x32xf32, #tpu.memory_space<vmem>>, %arg14: memref<8x32xf32, #tpu.memory_space<vmem>>) attributes {dimension_semantics = [#tpu.dimension_semantics<arbitrary>], iteration_bounds = array<i64: 1>, scalar_prefetch = 0 : i64, scratch_operands = 4 : i64, tpu.core_type = #tpu.core_type<tc>, window_params = [{transform_indices = @transform_0, window_bounds = array<i64: 8, 8, 128>}, {transform_indices = @transform_1, window_bounds = array<i64: 8, 8, 128>}, {pipeline_mode = #tpu.pipeline_mode<synchronous>, transform_indices = @transform_2, window_bounds = array<i64: 32, 128>}, {pipeline_mode = #tpu.pipeline_mode<synchronous>, transform_indices = @transform_3, window_bounds = array<i64: 32, 128>}, {pipeline_mode = #tpu.pipeline_mode<synchronous>, transform_indices = @transform_4, window_bounds = array<i64: 2, 8, 32>}, {pipeline_mode = #tpu.pipeline_mode<synchronous>, transform_indices = @transform_5, window_bounds = array<i64: 2, 8, 32>}, {transform_indices = @transform_6, window_bounds = array<i64: 8, 8, 32>}, {transform_indices = @transform_7, window_bounds = array<i64: 8, 8, 32>}, {pipeline_mode = #tpu.pipeline_mode<synchronous>, transform_indices = @transform_8, window_bounds = array<i64: 2, 8, 32>}, {pipeline_mode = #tpu.pipeline_mode<synchronous>, transform_indices = @transform_9, window_bounds = array<i64: 2, 8, 32>}]} {
    %c0_i32 = arith.constant 0 : i32
    %0 = arith.cmpi eq, %arg0, %c0_i32 : i32
    %1 = arith.extui %0 : i1 to i32
    %c0_i32_0 = arith.constant 0 : i32
    %2 = arith.cmpi ne, %1, %c0_i32_0 : i32
    scf.if %2 {
      %c0_263 = arith.constant 0 : index
      %c0_264 = arith.constant 0 : index
      %c0_265 = arith.constant 0 : index
      %673 = vector.load %arg5[%c0_263, %c0_264, %c0_265] : memref<2x8x32xf32, #tpu.memory_space<vmem>>, vector<1x8x32xf32>
      %674 = vector.shape_cast %673 : vector<1x8x32xf32> to vector<8x32xf32>
      %c0_266 = arith.constant 0 : index
      %c0_267 = arith.constant 0 : index
      %675 = vector.load %arg11[%c0_266, %c0_267] : memref<8x32xf32, #tpu.memory_space<vmem>>, vector<8x32xf32>
      tpu.vector_store %arg11[%c0_266, %c0_267], %674 {strides = array<i32>} : memref<8x32xf32, #tpu.memory_space<vmem>>, vector<8x32xf32>,
      %c0_268 = arith.constant 0 : index
      %c0_269 = arith.constant 0 : index
      %c0_270 = arith.constant 0 : index
      %676 = vector.load %arg6[%c0_268, %c0_269, %c0_270] : memref<2x8x32xf32, #tpu.memory_space<vmem>>, vector<1x8x32xf32>
      %677 = vector.shape_cast %676 : vector<1x8x32xf32> to vector<8x32xf32>
      %c0_271 = arith.constant 0 : index
      %c0_272 = arith.constant 0 : index
      %678 = vector.load %arg12[%c0_271, %c0_272] : memref<8x32xf32, #tpu.memory_space<vmem>>, vector<8x32xf32>
      tpu.vector_store %arg12[%c0_271, %c0_272], %677 {strides = array<i32>} : memref<8x32xf32, #tpu.memory_space<vmem>>, vector<8x32xf32>,
      %c1_273 = arith.constant 1 : index
      %c0_274 = arith.constant 0 : index
      %c0_275 = arith.constant 0 : index
      %679 = vector.load %arg5[%c1_273, %c0_274, %c0_275] : memref<2x8x32xf32, #tpu.memory_space<vmem>>, vector<1x8x32xf32>
      %680 = vector.shape_cast %679 : vector<1x8x32xf32> to vector<8x32xf32>
      %c0_276 = arith.constant 0 : index
      %c0_277 = arith.constant 0 : index
      %681 = vector.load %arg13[%c0_276, %c0_277] : memref<8x32xf32, #tpu.memory_space<vmem>>, vector<8x32xf32>
      tpu.vector_store %arg13[%c0_276, %c0_277], %680 {strides = array<i32>} : memref<8x32xf32, #tpu.memory_space<vmem>>, vector<8x32xf32>,
      %c1_278 = arith.constant 1 : index
      %c0_279 = arith.constant 0 : index
      %c0_280 = arith.constant 0 : index
      %682 = vector.load %arg6[%c1_278, %c0_279, %c0_280] : memref<2x8x32xf32, #tpu.memory_space<vmem>>, vector<1x8x32xf32>
      %683 = vector.shape_cast %682 : vector<1x8x32xf32> to vector<8x32xf32>
      %c0_281 = arith.constant 0 : index
      %c0_282 = arith.constant 0 : index
      %684 = vector.load %arg14[%c0_281, %c0_282] : memref<8x32xf32, #tpu.memory_space<vmem>>, vector<8x32xf32>
      tpu.vector_store %arg14[%c0_281, %c0_282], %683 {strides = array<i32>} : memref<8x32xf32, #tpu.memory_space<vmem>>, vector<8x32xf32>,
    } else {
    }
    %c0 = arith.constant 0 : index
    %c0_1 = arith.constant 0 : index
    %3 = vector.load %arg3[%c0, %c0_1] : memref<32x128xf32, #tpu.memory_space<vmem>>, vector<32x128xf32>
    %c0_2 = arith.constant 0 : index
    %c0_3 = arith.constant 0 : index
    %4 = vector.load %arg4[%c0_2, %c0_3] : memref<32x128xf32, #tpu.memory_space<vmem>>, vector<32x128xf32>
    %c0_4 = arith.constant 0 : index
    %c0_5 = arith.constant 0 : index
    %5 = vector.load %arg11[%c0_4, %c0_5] : memref<8x32xf32, #tpu.memory_space<vmem>>, vector<8x32xf32>
    %c0_6 = arith.constant 0 : index
    %c0_7 = arith.constant 0 : index
    %6 = vector.load %arg12[%c0_6, %c0_7] : memref<8x32xf32, #tpu.memory_space<vmem>>, vector<8x32xf32>
    %c0_8 = arith.constant 0 : index
    %c0_9 = arith.constant 0 : index
    %7 = vector.load %arg13[%c0_8, %c0_9] : memref<8x32xf32, #tpu.memory_space<vmem>>, vector<8x32xf32>
    %c0_10 = arith.constant 0 : index
    %c0_11 = arith.constant 0 : index
    %8 = vector.load %arg14[%c0_10, %c0_11] : memref<8x32xf32, #tpu.memory_space<vmem>>, vector<8x32xf32>
    %c0_i32_12 = arith.constant 0 : i32
    %c7_i32 = arith.constant 7 : i32
    %9 = arith.subi %c7_i32, %c0_i32_12 : i32
    %10 = arith.index_cast %c0_i32_12 : i32 to index
    %c0_13 = arith.constant 0 : index
    %c0_14 = arith.constant 0 : index
    %11 = vector.load %arg1[%10, %c0_13, %c0_14] : memref<8x8x128xf32, #tpu.memory_space<vmem>>, vector<1x8x128xf32>
    %12 = vector.shape_cast %11 : vector<1x8x128xf32> to vector<8x128xf32>
    %cst = arith.constant dense<0.000000e+00> : vector<8x128xf32>
    %13 = tpu.matmul %5, %3, %cst {dimension_numbers = #tpu.dot_dimension_numbers<[1], [0], [0], [1], [0, 0, 1, 1], [], []>} : vector<8x32xf32>, vector<32x128xf32>, vector<8x128xf32> -> vector<8x128xf32>
    %14 = arith.addf %12, %13 : vector<8x128xf32>
    %15 = arith.index_cast %9 : i32 to index
    %c0_15 = arith.constant 0 : index
    %c0_16 = arith.constant 0 : index
    %16 = vector.load %arg2[%15, %c0_15, %c0_16] : memref<8x8x128xf32, #tpu.memory_space<vmem>>, vector<1x8x128xf32>
    %17 = vector.shape_cast %16 : vector<1x8x128xf32> to vector<8x128xf32>
    %cst_17 = arith.constant dense<0.000000e+00> : vector<8x128xf32>
    %18 = tpu.matmul %7, %4, %cst_17 {dimension_numbers = #tpu.dot_dimension_numbers<[1], [0], [0], [1], [0, 0, 1, 1], [], []>} : vector<8x32xf32>, vector<32x128xf32>, vector<8x128xf32> -> vector<8x128xf32>
    %19 = arith.addf %17, %18 : vector<8x128xf32>
    %20 = vector.extract_strided_slice %14 {offsets = [0, 0], sizes = [8, 32], strides = [1, 1]} : vector<8x128xf32> to vector<8x32xf32>
    %cst_18 = arith.constant 5.000000e-01 : f32
    %21 = vector.broadcast %cst_18 : f32 to vector<8x32xf32>
    %22 = arith.mulf %21, %20 : vector<8x32xf32>
    %23 = math.tanh %22 : vector<8x32xf32>
    %cst_19 = arith.constant 5.000000e-01 : f32
    %24 = vector.broadcast %cst_19 : f32 to vector<8x32xf32>
    %25 = arith.mulf %24, %23 : vector<8x32xf32>
    %cst_20 = arith.constant 5.000000e-01 : f32
    %26 = vector.broadcast %cst_20 : f32 to vector<8x32xf32>
    %27 = arith.addf %25, %26 : vector<8x32xf32>
    %28 = vector.extract_strided_slice %14 {offsets = [0, 32], sizes = [8, 32], strides = [1, 1]} : vector<8x128xf32> to vector<8x32xf32>
    %cst_21 = arith.constant 5.000000e-01 : f32
    %29 = vector.broadcast %cst_21 : f32 to vector<8x32xf32>
    %30 = arith.mulf %29, %28 : vector<8x32xf32>
    %31 = math.tanh %30 : vector<8x32xf32>
    %cst_22 = arith.constant 5.000000e-01 : f32
    %32 = vector.broadcast %cst_22 : f32 to vector<8x32xf32>
    %33 = arith.mulf %32, %31 : vector<8x32xf32>
    %cst_23 = arith.constant 5.000000e-01 : f32
    %34 = vector.broadcast %cst_23 : f32 to vector<8x32xf32>
    %35 = arith.addf %33, %34 : vector<8x32xf32>
    %36 = vector.extract_strided_slice %14 {offsets = [0, 64], sizes = [8, 32], strides = [1, 1]} : vector<8x128xf32> to vector<8x32xf32>
    %37 = math.tanh %36 : vector<8x32xf32>
    %38 = vector.extract_strided_slice %14 {offsets = [0, 96], sizes = [8, 32], strides = [1, 1]} : vector<8x128xf32> to vector<8x32xf32>
    %cst_24 = arith.constant 5.000000e-01 : f32
    %39 = vector.broadcast %cst_24 : f32 to vector<8x32xf32>
    %40 = arith.mulf %39, %38 : vector<8x32xf32>
    %41 = math.tanh %40 : vector<8x32xf32>
    %cst_25 = arith.constant 5.000000e-01 : f32
    %42 = vector.broadcast %cst_25 : f32 to vector<8x32xf32>
    %43 = arith.mulf %42, %41 : vector<8x32xf32>
    %cst_26 = arith.constant 5.000000e-01 : f32
    %44 = vector.broadcast %cst_26 : f32 to vector<8x32xf32>
    %45 = arith.addf %43, %44 : vector<8x32xf32>
    %46 = vector.extract_strided_slice %19 {offsets = [0, 0], sizes = [8, 32], strides = [1, 1]} : vector<8x128xf32> to vector<8x32xf32>
    %cst_27 = arith.constant 5.000000e-01 : f32
    %47 = vector.broadcast %cst_27 : f32 to vector<8x32xf32>
    %48 = arith.mulf %47, %46 : vector<8x32xf32>
    %49 = math.tanh %48 : vector<8x32xf32>
    %cst_28 = arith.constant 5.000000e-01 : f32
    %50 = vector.broadcast %cst_28 : f32 to vector<8x32xf32>
    %51 = arith.mulf %50, %49 : vector<8x32xf32>
    %cst_29 = arith.constant 5.000000e-01 : f32
    %52 = vector.broadcast %cst_29 : f32 to vector<8x32xf32>
    %53 = arith.addf %51, %52 : vector<8x32xf32>
    %54 = vector.extract_strided_slice %19 {offsets = [0, 32], sizes = [8, 32], strides = [1, 1]} : vector<8x128xf32> to vector<8x32xf32>
    %cst_30 = arith.constant 5.000000e-01 : f32
    %55 = vector.broadcast %cst_30 : f32 to vector<8x32xf32>
    %56 = arith.mulf %55, %54 : vector<8x32xf32>
    %57 = math.tanh %56 : vector<8x32xf32>
    %cst_31 = arith.constant 5.000000e-01 : f32
    %58 = vector.broadcast %cst_31 : f32 to vector<8x32xf32>
    %59 = arith.mulf %58, %57 : vector<8x32xf32>
    %cst_32 = arith.constant 5.000000e-01 : f32
    %60 = vector.broadcast %cst_32 : f32 to vector<8x32xf32>
    %61 = arith.addf %59, %60 : vector<8x32xf32>
    %62 = vector.extract_strided_slice %19 {offsets = [0, 64], sizes = [8, 32], strides = [1, 1]} : vector<8x128xf32> to vector<8x32xf32>
    %63 = math.tanh %62 : vector<8x32xf32>
    %64 = vector.extract_strided_slice %19 {offsets = [0, 96], sizes = [8, 32], strides = [1, 1]} : vector<8x128xf32> to vector<8x32xf32>
    %cst_33 = arith.constant 5.000000e-01 : f32
    %65 = vector.broadcast %cst_33 : f32 to vector<8x32xf32>
    %66 = arith.mulf %65, %64 : vector<8x32xf32>
    %67 = math.tanh %66 : vector<8x32xf32>
    %cst_34 = arith.constant 5.000000e-01 : f32
    %68 = vector.broadcast %cst_34 : f32 to vector<8x32xf32>
    %69 = arith.mulf %68, %67 : vector<8x32xf32>
    %cst_35 = arith.constant 5.000000e-01 : f32
    %70 = vector.broadcast %cst_35 : f32 to vector<8x32xf32>
    %71 = arith.addf %69, %70 : vector<8x32xf32>
    %72 = arith.mulf %35, %6 : vector<8x32xf32>
    %73 = arith.mulf %27, %37 : vector<8x32xf32>
    %74 = arith.addf %72, %73 : vector<8x32xf32>
    %75 = math.tanh %74 : vector<8x32xf32>
    %76 = arith.mulf %45, %75 : vector<8x32xf32>
    %77 = arith.mulf %61, %8 : vector<8x32xf32>
    %78 = arith.mulf %53, %63 : vector<8x32xf32>
    %79 = arith.addf %77, %78 : vector<8x32xf32>
    %80 = math.tanh %79 : vector<8x32xf32>
    %81 = arith.mulf %71, %80 : vector<8x32xf32>
    %82 = arith.index_cast %c0_i32_12 : i32 to index
    %c0_36 = arith.constant 0 : index
    %c0_37 = arith.constant 0 : index
    %83 = vector.load %arg7[%82, %c0_36, %c0_37] : memref<8x8x32xf32, #tpu.memory_space<vmem>>, vector<1x8x32xf32>
    %84 = vector.shape_cast %83 : vector<1x8x32xf32> to vector<8x32xf32>
    %85 = vector.shape_cast %76 : vector<8x32xf32> to vector<1x8x32xf32>
    tpu.vector_store %arg7[%82, %c0_36, %c0_37], %85 {strides = array<i32>} : memref<8x8x32xf32, #tpu.memory_space<vmem>>, vector<1x8x32xf32>,
    %86 = arith.index_cast %9 : i32 to index
    %c0_38 = arith.constant 0 : index
    %c0_39 = arith.constant 0 : index
    %87 = vector.load %arg8[%86, %c0_38, %c0_39] : memref<8x8x32xf32, #tpu.memory_space<vmem>>, vector<1x8x32xf32>
    %88 = vector.shape_cast %87 : vector<1x8x32xf32> to vector<8x32xf32>
    %89 = vector.shape_cast %81 : vector<8x32xf32> to vector<1x8x32xf32>
    tpu.vector_store %arg8[%86, %c0_38, %c0_39], %89 {strides = array<i32>} : memref<8x8x32xf32, #tpu.memory_space<vmem>>, vector<1x8x32xf32>,
    %c1_i32 = arith.constant 1 : i32
    %c7_i32_40 = arith.constant 7 : i32
    %90 = arith.subi %c7_i32_40, %c1_i32 : i32
    %91 = arith.index_cast %c1_i32 : i32 to index
    %c0_41 = arith.constant 0 : index
    %c0_42 = arith.constant 0 : index
    %92 = vector.load %arg1[%91, %c0_41, %c0_42] : memref<8x8x128xf32, #tpu.memory_space<vmem>>, vector<1x8x128xf32>
    %93 = vector.shape_cast %92 : vector<1x8x128xf32> to vector<8x128xf32>
    %cst_43 = arith.constant dense<0.000000e+00> : vector<8x128xf32>
    %94 = tpu.matmul %76, %3, %cst_43 {dimension_numbers = #tpu.dot_dimension_numbers<[1], [0], [0], [1], [0, 0, 1, 1], [], []>} : vector<8x32xf32>, vector<32x128xf32>, vector<8x128xf32> -> vector<8x128xf32>
    %95 = arith.addf %93, %94 : vector<8x128xf32>
    %96 = arith.index_cast %90 : i32 to index
    %c0_44 = arith.constant 0 : index
    %c0_45 = arith.constant 0 : index
    %97 = vector.load %arg2[%96, %c0_44, %c0_45] : memref<8x8x128xf32, #tpu.memory_space<vmem>>, vector<1x8x128xf32>
    %98 = vector.shape_cast %97 : vector<1x8x128xf32> to vector<8x128xf32>
    %cst_46 = arith.constant dense<0.000000e+00> : vector<8x128xf32>
    %99 = tpu.matmul %81, %4, %cst_46 {dimension_numbers = #tpu.dot_dimension_numbers<[1], [0], [0], [1], [0, 0, 1, 1], [], []>} : vector<8x32xf32>, vector<32x128xf32>, vector<8x128xf32> -> vector<8x128xf32>
    %100 = arith.addf %98, %99 : vector<8x128xf32>
    %101 = vector.extract_strided_slice %95 {offsets = [0, 0], sizes = [8, 32], strides = [1, 1]} : vector<8x128xf32> to vector<8x32xf32>
    %cst_47 = arith.constant 5.000000e-01 : f32
    %102 = vector.broadcast %cst_47 : f32 to vector<8x32xf32>
    %103 = arith.mulf %102, %101 : vector<8x32xf32>
    %104 = math.tanh %103 : vector<8x32xf32>
    %cst_48 = arith.constant 5.000000e-01 : f32
    %105 = vector.broadcast %cst_48 : f32 to vector<8x32xf32>
    %106 = arith.mulf %105, %104 : vector<8x32xf32>
    %cst_49 = arith.constant 5.000000e-01 : f32
    %107 = vector.broadcast %cst_49 : f32 to vector<8x32xf32>
    %108 = arith.addf %106, %107 : vector<8x32xf32>
    %109 = vector.extract_strided_slice %95 {offsets = [0, 32], sizes = [8, 32], strides = [1, 1]} : vector<8x128xf32> to vector<8x32xf32>
    %cst_50 = arith.constant 5.000000e-01 : f32
    %110 = vector.broadcast %cst_50 : f32 to vector<8x32xf32>
    %111 = arith.mulf %110, %109 : vector<8x32xf32>
    %112 = math.tanh %111 : vector<8x32xf32>
    %cst_51 = arith.constant 5.000000e-01 : f32
    %113 = vector.broadcast %cst_51 : f32 to vector<8x32xf32>
    %114 = arith.mulf %113, %112 : vector<8x32xf32>
    %cst_52 = arith.constant 5.000000e-01 : f32
    %115 = vector.broadcast %cst_52 : f32 to vector<8x32xf32>
    %116 = arith.addf %114, %115 : vector<8x32xf32>
    %117 = vector.extract_strided_slice %95 {offsets = [0, 64], sizes = [8, 32], strides = [1, 1]} : vector<8x128xf32> to vector<8x32xf32>
    %118 = math.tanh %117 : vector<8x32xf32>
    %119 = vector.extract_strided_slice %95 {offsets = [0, 96], sizes = [8, 32], strides = [1, 1]} : vector<8x128xf32> to vector<8x32xf32>
    %cst_53 = arith.constant 5.000000e-01 : f32
    %120 = vector.broadcast %cst_53 : f32 to vector<8x32xf32>
    %121 = arith.mulf %120, %119 : vector<8x32xf32>
    %122 = math.tanh %121 : vector<8x32xf32>
    %cst_54 = arith.constant 5.000000e-01 : f32
    %123 = vector.broadcast %cst_54 : f32 to vector<8x32xf32>
    %124 = arith.mulf %123, %122 : vector<8x32xf32>
    %cst_55 = arith.constant 5.000000e-01 : f32
    %125 = vector.broadcast %cst_55 : f32 to vector<8x32xf32>
    %126 = arith.addf %124, %125 : vector<8x32xf32>
    %127 = vector.extract_strided_slice %100 {offsets = [0, 0], sizes = [8, 32], strides = [1, 1]} : vector<8x128xf32> to vector<8x32xf32>
    %cst_56 = arith.constant 5.000000e-01 : f32
    %128 = vector.broadcast %cst_56 : f32 to vector<8x32xf32>
    %129 = arith.mulf %128, %127 : vector<8x32xf32>
    %130 = math.tanh %129 : vector<8x32xf32>
    %cst_57 = arith.constant 5.000000e-01 : f32
    %131 = vector.broadcast %cst_57 : f32 to vector<8x32xf32>
    %132 = arith.mulf %131, %130 : vector<8x32xf32>
    %cst_58 = arith.constant 5.000000e-01 : f32
    %133 = vector.broadcast %cst_58 : f32 to vector<8x32xf32>
    %134 = arith.addf %132, %133 : vector<8x32xf32>
    %135 = vector.extract_strided_slice %100 {offsets = [0, 32], sizes = [8, 32], strides = [1, 1]} : vector<8x128xf32> to vector<8x32xf32>
    %cst_59 = arith.constant 5.000000e-01 : f32
    %136 = vector.broadcast %cst_59 : f32 to vector<8x32xf32>
    %137 = arith.mulf %136, %135 : vector<8x32xf32>
    %138 = math.tanh %137 : vector<8x32xf32>
    %cst_60 = arith.constant 5.000000e-01 : f32
    %139 = vector.broadcast %cst_60 : f32 to vector<8x32xf32>
    %140 = arith.mulf %139, %138 : vector<8x32xf32>
    %cst_61 = arith.constant 5.000000e-01 : f32
    %141 = vector.broadcast %cst_61 : f32 to vector<8x32xf32>
    %142 = arith.addf %140, %141 : vector<8x32xf32>
    %143 = vector.extract_strided_slice %100 {offsets = [0, 64], sizes = [8, 32], strides = [1, 1]} : vector<8x128xf32> to vector<8x32xf32>
    %144 = math.tanh %143 : vector<8x32xf32>
    %145 = vector.extract_strided_slice %100 {offsets = [0, 96], sizes = [8, 32], strides = [1, 1]} : vector<8x128xf32> to vector<8x32xf32>
    %cst_62 = arith.constant 5.000000e-01 : f32
    %146 = vector.broadcast %cst_62 : f32 to vector<8x32xf32>
    %147 = arith.mulf %146, %145 : vector<8x32xf32>
    %148 = math.tanh %147 : vector<8x32xf32>
    %cst_63 = arith.constant 5.000000e-01 : f32
    %149 = vector.broadcast %cst_63 : f32 to vector<8x32xf32>
    %150 = arith.mulf %149, %148 : vector<8x32xf32>
    %cst_64 = arith.constant 5.000000e-01 : f32
    %151 = vector.broadcast %cst_64 : f32 to vector<8x32xf32>
    %152 = arith.addf %150, %151 : vector<8x32xf32>
    %153 = arith.mulf %116, %74 : vector<8x32xf32>
    %154 = arith.mulf %108, %118 : vector<8x32xf32>
    %155 = arith.addf %153, %154 : vector<8x32xf32>
    %156 = math.tanh %155 : vector<8x32xf32>
    %157 = arith.mulf %126, %156 : vector<8x32xf32>
    %158 = arith.mulf %142, %79 : vector<8x32xf32>
    %159 = arith.mulf %134, %144 : vector<8x32xf32>
    %160 = arith.addf %158, %159 : vector<8x32xf32>
    %161 = math.tanh %160 : vector<8x32xf32>
    %162 = arith.mulf %152, %161 : vector<8x32xf32>
    %163 = arith.index_cast %c1_i32 : i32 to index
    %c0_65 = arith.constant 0 : index
    %c0_66 = arith.constant 0 : index
    %164 = vector.load %arg7[%163, %c0_65, %c0_66] : memref<8x8x32xf32, #tpu.memory_space<vmem>>, vector<1x8x32xf32>
    %165 = vector.shape_cast %164 : vector<1x8x32xf32> to vector<8x32xf32>
    %166 = vector.shape_cast %157 : vector<8x32xf32> to vector<1x8x32xf32>
    tpu.vector_store %arg7[%163, %c0_65, %c0_66], %166 {strides = array<i32>} : memref<8x8x32xf32, #tpu.memory_space<vmem>>, vector<1x8x32xf32>,
    %167 = arith.index_cast %90 : i32 to index
    %c0_67 = arith.constant 0 : index
    %c0_68 = arith.constant 0 : index
    %168 = vector.load %arg8[%167, %c0_67, %c0_68] : memref<8x8x32xf32, #tpu.memory_space<vmem>>, vector<1x8x32xf32>
    %169 = vector.shape_cast %168 : vector<1x8x32xf32> to vector<8x32xf32>
    %170 = vector.shape_cast %162 : vector<8x32xf32> to vector<1x8x32xf32>
    tpu.vector_store %arg8[%167, %c0_67, %c0_68], %170 {strides = array<i32>} : memref<8x8x32xf32, #tpu.memory_space<vmem>>, vector<1x8x32xf32>,
    %c2_i32 = arith.constant 2 : i32
    %c7_i32_69 = arith.constant 7 : i32
    %171 = arith.subi %c7_i32_69, %c2_i32 : i32
    %172 = arith.index_cast %c2_i32 : i32 to index
    %c0_70 = arith.constant 0 : index
    %c0_71 = arith.constant 0 : index
    %173 = vector.load %arg1[%172, %c0_70, %c0_71] : memref<8x8x128xf32, #tpu.memory_space<vmem>>, vector<1x8x128xf32>
    %174 = vector.shape_cast %173 : vector<1x8x128xf32> to vector<8x128xf32>
    %cst_72 = arith.constant dense<0.000000e+00> : vector<8x128xf32>
    %175 = tpu.matmul %157, %3, %cst_72 {dimension_numbers = #tpu.dot_dimension_numbers<[1], [0], [0], [1], [0, 0, 1, 1], [], []>} : vector<8x32xf32>, vector<32x128xf32>, vector<8x128xf32> -> vector<8x128xf32>
    %176 = arith.addf %174, %175 : vector<8x128xf32>
    %177 = arith.index_cast %171 : i32 to index
    %c0_73 = arith.constant 0 : index
    %c0_74 = arith.constant 0 : index
    %178 = vector.load %arg2[%177, %c0_73, %c0_74] : memref<8x8x128xf32, #tpu.memory_space<vmem>>, vector<1x8x128xf32>
    %179 = vector.shape_cast %178 : vector<1x8x128xf32> to vector<8x128xf32>
    %cst_75 = arith.constant dense<0.000000e+00> : vector<8x128xf32>
    %180 = tpu.matmul %162, %4, %cst_75 {dimension_numbers = #tpu.dot_dimension_numbers<[1], [0], [0], [1], [0, 0, 1, 1], [], []>} : vector<8x32xf32>, vector<32x128xf32>, vector<8x128xf32> -> vector<8x128xf32>
    %181 = arith.addf %179, %180 : vector<8x128xf32>
    %182 = vector.extract_strided_slice %176 {offsets = [0, 0], sizes = [8, 32], strides = [1, 1]} : vector<8x128xf32> to vector<8x32xf32>
    %cst_76 = arith.constant 5.000000e-01 : f32
    %183 = vector.broadcast %cst_76 : f32 to vector<8x32xf32>
    %184 = arith.mulf %183, %182 : vector<8x32xf32>
    %185 = math.tanh %184 : vector<8x32xf32>
    %cst_77 = arith.constant 5.000000e-01 : f32
    %186 = vector.broadcast %cst_77 : f32 to vector<8x32xf32>
    %187 = arith.mulf %186, %185 : vector<8x32xf32>
    %cst_78 = arith.constant 5.000000e-01 : f32
    %188 = vector.broadcast %cst_78 : f32 to vector<8x32xf32>
    %189 = arith.addf %187, %188 : vector<8x32xf32>
    %190 = vector.extract_strided_slice %176 {offsets = [0, 32], sizes = [8, 32], strides = [1, 1]} : vector<8x128xf32> to vector<8x32xf32>
    %cst_79 = arith.constant 5.000000e-01 : f32
    %191 = vector.broadcast %cst_79 : f32 to vector<8x32xf32>
    %192 = arith.mulf %191, %190 : vector<8x32xf32>
    %193 = math.tanh %192 : vector<8x32xf32>
    %cst_80 = arith.constant 5.000000e-01 : f32
    %194 = vector.broadcast %cst_80 : f32 to vector<8x32xf32>
    %195 = arith.mulf %194, %193 : vector<8x32xf32>
    %cst_81 = arith.constant 5.000000e-01 : f32
    %196 = vector.broadcast %cst_81 : f32 to vector<8x32xf32>
    %197 = arith.addf %195, %196 : vector<8x32xf32>
    %198 = vector.extract_strided_slice %176 {offsets = [0, 64], sizes = [8, 32], strides = [1, 1]} : vector<8x128xf32> to vector<8x32xf32>
    %199 = math.tanh %198 : vector<8x32xf32>
    %200 = vector.extract_strided_slice %176 {offsets = [0, 96], sizes = [8, 32], strides = [1, 1]} : vector<8x128xf32> to vector<8x32xf32>
    %cst_82 = arith.constant 5.000000e-01 : f32
    %201 = vector.broadcast %cst_82 : f32 to vector<8x32xf32>
    %202 = arith.mulf %201, %200 : vector<8x32xf32>
    %203 = math.tanh %202 : vector<8x32xf32>
    %cst_83 = arith.constant 5.000000e-01 : f32
    %204 = vector.broadcast %cst_83 : f32 to vector<8x32xf32>
    %205 = arith.mulf %204, %203 : vector<8x32xf32>
    %cst_84 = arith.constant 5.000000e-01 : f32
    %206 = vector.broadcast %cst_84 : f32 to vector<8x32xf32>
    %207 = arith.addf %205, %206 : vector<8x32xf32>
    %208 = vector.extract_strided_slice %181 {offsets = [0, 0], sizes = [8, 32], strides = [1, 1]} : vector<8x128xf32> to vector<8x32xf32>
    %cst_85 = arith.constant 5.000000e-01 : f32
    %209 = vector.broadcast %cst_85 : f32 to vector<8x32xf32>
    %210 = arith.mulf %209, %208 : vector<8x32xf32>
    %211 = math.tanh %210 : vector<8x32xf32>
    %cst_86 = arith.constant 5.000000e-01 : f32
    %212 = vector.broadcast %cst_86 : f32 to vector<8x32xf32>
    %213 = arith.mulf %212, %211 : vector<8x32xf32>
    %cst_87 = arith.constant 5.000000e-01 : f32
    %214 = vector.broadcast %cst_87 : f32 to vector<8x32xf32>
    %215 = arith.addf %213, %214 : vector<8x32xf32>
    %216 = vector.extract_strided_slice %181 {offsets = [0, 32], sizes = [8, 32], strides = [1, 1]} : vector<8x128xf32> to vector<8x32xf32>
    %cst_88 = arith.constant 5.000000e-01 : f32
    %217 = vector.broadcast %cst_88 : f32 to vector<8x32xf32>
    %218 = arith.mulf %217, %216 : vector<8x32xf32>
    %219 = math.tanh %218 : vector<8x32xf32>
    %cst_89 = arith.constant 5.000000e-01 : f32
    %220 = vector.broadcast %cst_89 : f32 to vector<8x32xf32>
    %221 = arith.mulf %220, %219 : vector<8x32xf32>
    %cst_90 = arith.constant 5.000000e-01 : f32
    %222 = vector.broadcast %cst_90 : f32 to vector<8x32xf32>
    %223 = arith.addf %221, %222 : vector<8x32xf32>
    %224 = vector.extract_strided_slice %181 {offsets = [0, 64], sizes = [8, 32], strides = [1, 1]} : vector<8x128xf32> to vector<8x32xf32>
    %225 = math.tanh %224 : vector<8x32xf32>
    %226 = vector.extract_strided_slice %181 {offsets = [0, 96], sizes = [8, 32], strides = [1, 1]} : vector<8x128xf32> to vector<8x32xf32>
    %cst_91 = arith.constant 5.000000e-01 : f32
    %227 = vector.broadcast %cst_91 : f32 to vector<8x32xf32>
    %228 = arith.mulf %227, %226 : vector<8x32xf32>
    %229 = math.tanh %228 : vector<8x32xf32>
    %cst_92 = arith.constant 5.000000e-01 : f32
    %230 = vector.broadcast %cst_92 : f32 to vector<8x32xf32>
    %231 = arith.mulf %230, %229 : vector<8x32xf32>
    %cst_93 = arith.constant 5.000000e-01 : f32
    %232 = vector.broadcast %cst_93 : f32 to vector<8x32xf32>
    %233 = arith.addf %231, %232 : vector<8x32xf32>
    %234 = arith.mulf %197, %155 : vector<8x32xf32>
    %235 = arith.mulf %189, %199 : vector<8x32xf32>
    %236 = arith.addf %234, %235 : vector<8x32xf32>
    %237 = math.tanh %236 : vector<8x32xf32>
    %238 = arith.mulf %207, %237 : vector<8x32xf32>
    %239 = arith.mulf %223, %160 : vector<8x32xf32>
    %240 = arith.mulf %215, %225 : vector<8x32xf32>
    %241 = arith.addf %239, %240 : vector<8x32xf32>
    %242 = math.tanh %241 : vector<8x32xf32>
    %243 = arith.mulf %233, %242 : vector<8x32xf32>
    %244 = arith.index_cast %c2_i32 : i32 to index
    %c0_94 = arith.constant 0 : index
    %c0_95 = arith.constant 0 : index
    %245 = vector.load %arg7[%244, %c0_94, %c0_95] : memref<8x8x32xf32, #tpu.memory_space<vmem>>, vector<1x8x32xf32>
    %246 = vector.shape_cast %245 : vector<1x8x32xf32> to vector<8x32xf32>
    %247 = vector.shape_cast %238 : vector<8x32xf32> to vector<1x8x32xf32>
    tpu.vector_store %arg7[%244, %c0_94, %c0_95], %247 {strides = array<i32>} : memref<8x8x32xf32, #tpu.memory_space<vmem>>, vector<1x8x32xf32>,
    %248 = arith.index_cast %171 : i32 to index
    %c0_96 = arith.constant 0 : index
    %c0_97 = arith.constant 0 : index
    %249 = vector.load %arg8[%248, %c0_96, %c0_97] : memref<8x8x32xf32, #tpu.memory_space<vmem>>, vector<1x8x32xf32>
    %250 = vector.shape_cast %249 : vector<1x8x32xf32> to vector<8x32xf32>
    %251 = vector.shape_cast %243 : vector<8x32xf32> to vector<1x8x32xf32>
    tpu.vector_store %arg8[%248, %c0_96, %c0_97], %251 {strides = array<i32>} : memref<8x8x32xf32, #tpu.memory_space<vmem>>, vector<1x8x32xf32>,
    %c3_i32 = arith.constant 3 : i32
    %c7_i32_98 = arith.constant 7 : i32
    %252 = arith.subi %c7_i32_98, %c3_i32 : i32
    %253 = arith.index_cast %c3_i32 : i32 to index
    %c0_99 = arith.constant 0 : index
    %c0_100 = arith.constant 0 : index
    %254 = vector.load %arg1[%253, %c0_99, %c0_100] : memref<8x8x128xf32, #tpu.memory_space<vmem>>, vector<1x8x128xf32>
    %255 = vector.shape_cast %254 : vector<1x8x128xf32> to vector<8x128xf32>
    %cst_101 = arith.constant dense<0.000000e+00> : vector<8x128xf32>
    %256 = tpu.matmul %238, %3, %cst_101 {dimension_numbers = #tpu.dot_dimension_numbers<[1], [0], [0], [1], [0, 0, 1, 1], [], []>} : vector<8x32xf32>, vector<32x128xf32>, vector<8x128xf32> -> vector<8x128xf32>
    %257 = arith.addf %255, %256 : vector<8x128xf32>
    %258 = arith.index_cast %252 : i32 to index
    %c0_102 = arith.constant 0 : index
    %c0_103 = arith.constant 0 : index
    %259 = vector.load %arg2[%258, %c0_102, %c0_103] : memref<8x8x128xf32, #tpu.memory_space<vmem>>, vector<1x8x128xf32>
    %260 = vector.shape_cast %259 : vector<1x8x128xf32> to vector<8x128xf32>
    %cst_104 = arith.constant dense<0.000000e+00> : vector<8x128xf32>
    %261 = tpu.matmul %243, %4, %cst_104 {dimension_numbers = #tpu.dot_dimension_numbers<[1], [0], [0], [1], [0, 0, 1, 1], [], []>} : vector<8x32xf32>, vector<32x128xf32>, vector<8x128xf32> -> vector<8x128xf32>
    %262 = arith.addf %260, %261 : vector<8x128xf32>
    %263 = vector.extract_strided_slice %257 {offsets = [0, 0], sizes = [8, 32], strides = [1, 1]} : vector<8x128xf32> to vector<8x32xf32>
    %cst_105 = arith.constant 5.000000e-01 : f32
    %264 = vector.broadcast %cst_105 : f32 to vector<8x32xf32>
    %265 = arith.mulf %264, %263 : vector<8x32xf32>
    %266 = math.tanh %265 : vector<8x32xf32>
    %cst_106 = arith.constant 5.000000e-01 : f32
    %267 = vector.broadcast %cst_106 : f32 to vector<8x32xf32>
    %268 = arith.mulf %267, %266 : vector<8x32xf32>
    %cst_107 = arith.constant 5.000000e-01 : f32
    %269 = vector.broadcast %cst_107 : f32 to vector<8x32xf32>
    %270 = arith.addf %268, %269 : vector<8x32xf32>
    %271 = vector.extract_strided_slice %257 {offsets = [0, 32], sizes = [8, 32], strides = [1, 1]} : vector<8x128xf32> to vector<8x32xf32>
    %cst_108 = arith.constant 5.000000e-01 : f32
    %272 = vector.broadcast %cst_108 : f32 to vector<8x32xf32>
    %273 = arith.mulf %272, %271 : vector<8x32xf32>
    %274 = math.tanh %273 : vector<8x32xf32>
    %cst_109 = arith.constant 5.000000e-01 : f32
    %275 = vector.broadcast %cst_109 : f32 to vector<8x32xf32>
    %276 = arith.mulf %275, %274 : vector<8x32xf32>
    %cst_110 = arith.constant 5.000000e-01 : f32
    %277 = vector.broadcast %cst_110 : f32 to vector<8x32xf32>
    %278 = arith.addf %276, %277 : vector<8x32xf32>
    %279 = vector.extract_strided_slice %257 {offsets = [0, 64], sizes = [8, 32], strides = [1, 1]} : vector<8x128xf32> to vector<8x32xf32>
    %280 = math.tanh %279 : vector<8x32xf32>
    %281 = vector.extract_strided_slice %257 {offsets = [0, 96], sizes = [8, 32], strides = [1, 1]} : vector<8x128xf32> to vector<8x32xf32>
    %cst_111 = arith.constant 5.000000e-01 : f32
    %282 = vector.broadcast %cst_111 : f32 to vector<8x32xf32>
    %283 = arith.mulf %282, %281 : vector<8x32xf32>
    %284 = math.tanh %283 : vector<8x32xf32>
    %cst_112 = arith.constant 5.000000e-01 : f32
    %285 = vector.broadcast %cst_112 : f32 to vector<8x32xf32>
    %286 = arith.mulf %285, %284 : vector<8x32xf32>
    %cst_113 = arith.constant 5.000000e-01 : f32
    %287 = vector.broadcast %cst_113 : f32 to vector<8x32xf32>
    %288 = arith.addf %286, %287 : vector<8x32xf32>
    %289 = vector.extract_strided_slice %262 {offsets = [0, 0], sizes = [8, 32], strides = [1, 1]} : vector<8x128xf32> to vector<8x32xf32>
    %cst_114 = arith.constant 5.000000e-01 : f32
    %290 = vector.broadcast %cst_114 : f32 to vector<8x32xf32>
    %291 = arith.mulf %290, %289 : vector<8x32xf32>
    %292 = math.tanh %291 : vector<8x32xf32>
    %cst_115 = arith.constant 5.000000e-01 : f32
    %293 = vector.broadcast %cst_115 : f32 to vector<8x32xf32>
    %294 = arith.mulf %293, %292 : vector<8x32xf32>
    %cst_116 = arith.constant 5.000000e-01 : f32
    %295 = vector.broadcast %cst_116 : f32 to vector<8x32xf32>
    %296 = arith.addf %294, %295 : vector<8x32xf32>
    %297 = vector.extract_strided_slice %262 {offsets = [0, 32], sizes = [8, 32], strides = [1, 1]} : vector<8x128xf32> to vector<8x32xf32>
    %cst_117 = arith.constant 5.000000e-01 : f32
    %298 = vector.broadcast %cst_117 : f32 to vector<8x32xf32>
    %299 = arith.mulf %298, %297 : vector<8x32xf32>
    %300 = math.tanh %299 : vector<8x32xf32>
    %cst_118 = arith.constant 5.000000e-01 : f32
    %301 = vector.broadcast %cst_118 : f32 to vector<8x32xf32>
    %302 = arith.mulf %301, %300 : vector<8x32xf32>
    %cst_119 = arith.constant 5.000000e-01 : f32
    %303 = vector.broadcast %cst_119 : f32 to vector<8x32xf32>
    %304 = arith.addf %302, %303 : vector<8x32xf32>
    %305 = vector.extract_strided_slice %262 {offsets = [0, 64], sizes = [8, 32], strides = [1, 1]} : vector<8x128xf32> to vector<8x32xf32>
    %306 = math.tanh %305 : vector<8x32xf32>
    %307 = vector.extract_strided_slice %262 {offsets = [0, 96], sizes = [8, 32], strides = [1, 1]} : vector<8x128xf32> to vector<8x32xf32>
    %cst_120 = arith.constant 5.000000e-01 : f32
    %308 = vector.broadcast %cst_120 : f32 to vector<8x32xf32>
    %309 = arith.mulf %308, %307 : vector<8x32xf32>
    %310 = math.tanh %309 : vector<8x32xf32>
    %cst_121 = arith.constant 5.000000e-01 : f32
    %311 = vector.broadcast %cst_121 : f32 to vector<8x32xf32>
    %312 = arith.mulf %311, %310 : vector<8x32xf32>
    %cst_122 = arith.constant 5.000000e-01 : f32
    %313 = vector.broadcast %cst_122 : f32 to vector<8x32xf32>
    %314 = arith.addf %312, %313 : vector<8x32xf32>
    %315 = arith.mulf %278, %236 : vector<8x32xf32>
    %316 = arith.mulf %270, %280 : vector<8x32xf32>
    %317 = arith.addf %315, %316 : vector<8x32xf32>
    %318 = math.tanh %317 : vector<8x32xf32>
    %319 = arith.mulf %288, %318 : vector<8x32xf32>
    %320 = arith.mulf %304, %241 : vector<8x32xf32>
    %321 = arith.mulf %296, %306 : vector<8x32xf32>
    %322 = arith.addf %320, %321 : vector<8x32xf32>
    %323 = math.tanh %322 : vector<8x32xf32>
    %324 = arith.mulf %314, %323 : vector<8x32xf32>
    %325 = arith.index_cast %c3_i32 : i32 to index
    %c0_123 = arith.constant 0 : index
    %c0_124 = arith.constant 0 : index
    %326 = vector.load %arg7[%325, %c0_123, %c0_124] : memref<8x8x32xf32, #tpu.memory_space<vmem>>, vector<1x8x32xf32>
    %327 = vector.shape_cast %326 : vector<1x8x32xf32> to vector<8x32xf32>
    %328 = vector.shape_cast %319 : vector<8x32xf32> to vector<1x8x32xf32>
    tpu.vector_store %arg7[%325, %c0_123, %c0_124], %328 {strides = array<i32>} : memref<8x8x32xf32, #tpu.memory_space<vmem>>, vector<1x8x32xf32>,
    %329 = arith.index_cast %252 : i32 to index
    %c0_125 = arith.constant 0 : index
    %c0_126 = arith.constant 0 : index
    %330 = vector.load %arg8[%329, %c0_125, %c0_126] : memref<8x8x32xf32, #tpu.memory_space<vmem>>, vector<1x8x32xf32>
    %331 = vector.shape_cast %330 : vector<1x8x32xf32> to vector<8x32xf32>
    %332 = vector.shape_cast %324 : vector<8x32xf32> to vector<1x8x32xf32>
    tpu.vector_store %arg8[%329, %c0_125, %c0_126], %332 {strides = array<i32>} : memref<8x8x32xf32, #tpu.memory_space<vmem>>, vector<1x8x32xf32>,
    %c4_i32 = arith.constant 4 : i32
    %c7_i32_127 = arith.constant 7 : i32
    %333 = arith.subi %c7_i32_127, %c4_i32 : i32
    %334 = arith.index_cast %c4_i32 : i32 to index
    %c0_128 = arith.constant 0 : index
    %c0_129 = arith.constant 0 : index
    %335 = vector.load %arg1[%334, %c0_128, %c0_129] : memref<8x8x128xf32, #tpu.memory_space<vmem>>, vector<1x8x128xf32>
    %336 = vector.shape_cast %335 : vector<1x8x128xf32> to vector<8x128xf32>
    %cst_130 = arith.constant dense<0.000000e+00> : vector<8x128xf32>
    %337 = tpu.matmul %319, %3, %cst_130 {dimension_numbers = #tpu.dot_dimension_numbers<[1], [0], [0], [1], [0, 0, 1, 1], [], []>} : vector<8x32xf32>, vector<32x128xf32>, vector<8x128xf32> -> vector<8x128xf32>
    %338 = arith.addf %336, %337 : vector<8x128xf32>
    %339 = arith.index_cast %333 : i32 to index
    %c0_131 = arith.constant 0 : index
    %c0_132 = arith.constant 0 : index
    %340 = vector.load %arg2[%339, %c0_131, %c0_132] : memref<8x8x128xf32, #tpu.memory_space<vmem>>, vector<1x8x128xf32>
    %341 = vector.shape_cast %340 : vector<1x8x128xf32> to vector<8x128xf32>
    %cst_133 = arith.constant dense<0.000000e+00> : vector<8x128xf32>
    %342 = tpu.matmul %324, %4, %cst_133 {dimension_numbers = #tpu.dot_dimension_numbers<[1], [0], [0], [1], [0, 0, 1, 1], [], []>} : vector<8x32xf32>, vector<32x128xf32>, vector<8x128xf32> -> vector<8x128xf32>
    %343 = arith.addf %341, %342 : vector<8x128xf32>
    %344 = vector.extract_strided_slice %338 {offsets = [0, 0], sizes = [8, 32], strides = [1, 1]} : vector<8x128xf32> to vector<8x32xf32>
    %cst_134 = arith.constant 5.000000e-01 : f32
    %345 = vector.broadcast %cst_134 : f32 to vector<8x32xf32>
    %346 = arith.mulf %345, %344 : vector<8x32xf32>
    %347 = math.tanh %346 : vector<8x32xf32>
    %cst_135 = arith.constant 5.000000e-01 : f32
    %348 = vector.broadcast %cst_135 : f32 to vector<8x32xf32>
    %349 = arith.mulf %348, %347 : vector<8x32xf32>
    %cst_136 = arith.constant 5.000000e-01 : f32
    %350 = vector.broadcast %cst_136 : f32 to vector<8x32xf32>
    %351 = arith.addf %349, %350 : vector<8x32xf32>
    %352 = vector.extract_strided_slice %338 {offsets = [0, 32], sizes = [8, 32], strides = [1, 1]} : vector<8x128xf32> to vector<8x32xf32>
    %cst_137 = arith.constant 5.000000e-01 : f32
    %353 = vector.broadcast %cst_137 : f32 to vector<8x32xf32>
    %354 = arith.mulf %353, %352 : vector<8x32xf32>
    %355 = math.tanh %354 : vector<8x32xf32>
    %cst_138 = arith.constant 5.000000e-01 : f32
    %356 = vector.broadcast %cst_138 : f32 to vector<8x32xf32>
    %357 = arith.mulf %356, %355 : vector<8x32xf32>
    %cst_139 = arith.constant 5.000000e-01 : f32
    %358 = vector.broadcast %cst_139 : f32 to vector<8x32xf32>
    %359 = arith.addf %357, %358 : vector<8x32xf32>
    %360 = vector.extract_strided_slice %338 {offsets = [0, 64], sizes = [8, 32], strides = [1, 1]} : vector<8x128xf32> to vector<8x32xf32>
    %361 = math.tanh %360 : vector<8x32xf32>
    %362 = vector.extract_strided_slice %338 {offsets = [0, 96], sizes = [8, 32], strides = [1, 1]} : vector<8x128xf32> to vector<8x32xf32>
    %cst_140 = arith.constant 5.000000e-01 : f32
    %363 = vector.broadcast %cst_140 : f32 to vector<8x32xf32>
    %364 = arith.mulf %363, %362 : vector<8x32xf32>
    %365 = math.tanh %364 : vector<8x32xf32>
    %cst_141 = arith.constant 5.000000e-01 : f32
    %366 = vector.broadcast %cst_141 : f32 to vector<8x32xf32>
    %367 = arith.mulf %366, %365 : vector<8x32xf32>
    %cst_142 = arith.constant 5.000000e-01 : f32
    %368 = vector.broadcast %cst_142 : f32 to vector<8x32xf32>
    %369 = arith.addf %367, %368 : vector<8x32xf32>
    %370 = vector.extract_strided_slice %343 {offsets = [0, 0], sizes = [8, 32], strides = [1, 1]} : vector<8x128xf32> to vector<8x32xf32>
    %cst_143 = arith.constant 5.000000e-01 : f32
    %371 = vector.broadcast %cst_143 : f32 to vector<8x32xf32>
    %372 = arith.mulf %371, %370 : vector<8x32xf32>
    %373 = math.tanh %372 : vector<8x32xf32>
    %cst_144 = arith.constant 5.000000e-01 : f32
    %374 = vector.broadcast %cst_144 : f32 to vector<8x32xf32>
    %375 = arith.mulf %374, %373 : vector<8x32xf32>
    %cst_145 = arith.constant 5.000000e-01 : f32
    %376 = vector.broadcast %cst_145 : f32 to vector<8x32xf32>
    %377 = arith.addf %375, %376 : vector<8x32xf32>
    %378 = vector.extract_strided_slice %343 {offsets = [0, 32], sizes = [8, 32], strides = [1, 1]} : vector<8x128xf32> to vector<8x32xf32>
    %cst_146 = arith.constant 5.000000e-01 : f32
    %379 = vector.broadcast %cst_146 : f32 to vector<8x32xf32>
    %380 = arith.mulf %379, %378 : vector<8x32xf32>
    %381 = math.tanh %380 : vector<8x32xf32>
    %cst_147 = arith.constant 5.000000e-01 : f32
    %382 = vector.broadcast %cst_147 : f32 to vector<8x32xf32>
    %383 = arith.mulf %382, %381 : vector<8x32xf32>
    %cst_148 = arith.constant 5.000000e-01 : f32
    %384 = vector.broadcast %cst_148 : f32 to vector<8x32xf32>
    %385 = arith.addf %383, %384 : vector<8x32xf32>
    %386 = vector.extract_strided_slice %343 {offsets = [0, 64], sizes = [8, 32], strides = [1, 1]} : vector<8x128xf32> to vector<8x32xf32>
    %387 = math.tanh %386 : vector<8x32xf32>
    %388 = vector.extract_strided_slice %343 {offsets = [0, 96], sizes = [8, 32], strides = [1, 1]} : vector<8x128xf32> to vector<8x32xf32>
    %cst_149 = arith.constant 5.000000e-01 : f32
    %389 = vector.broadcast %cst_149 : f32 to vector<8x32xf32>
    %390 = arith.mulf %389, %388 : vector<8x32xf32>
    %391 = math.tanh %390 : vector<8x32xf32>
    %cst_150 = arith.constant 5.000000e-01 : f32
    %392 = vector.broadcast %cst_150 : f32 to vector<8x32xf32>
    %393 = arith.mulf %392, %391 : vector<8x32xf32>
    %cst_151 = arith.constant 5.000000e-01 : f32
    %394 = vector.broadcast %cst_151 : f32 to vector<8x32xf32>
    %395 = arith.addf %393, %394 : vector<8x32xf32>
    %396 = arith.mulf %359, %317 : vector<8x32xf32>
    %397 = arith.mulf %351, %361 : vector<8x32xf32>
    %398 = arith.addf %396, %397 : vector<8x32xf32>
    %399 = math.tanh %398 : vector<8x32xf32>
    %400 = arith.mulf %369, %399 : vector<8x32xf32>
    %401 = arith.mulf %385, %322 : vector<8x32xf32>
    %402 = arith.mulf %377, %387 : vector<8x32xf32>
    %403 = arith.addf %401, %402 : vector<8x32xf32>
    %404 = math.tanh %403 : vector<8x32xf32>
    %405 = arith.mulf %395, %404 : vector<8x32xf32>
    %406 = arith.index_cast %c4_i32 : i32 to index
    %c0_152 = arith.constant 0 : index
    %c0_153 = arith.constant 0 : index
    %407 = vector.load %arg7[%406, %c0_152, %c0_153] : memref<8x8x32xf32, #tpu.memory_space<vmem>>, vector<1x8x32xf32>
    %408 = vector.shape_cast %407 : vector<1x8x32xf32> to vector<8x32xf32>
    %409 = vector.shape_cast %400 : vector<8x32xf32> to vector<1x8x32xf32>
    tpu.vector_store %arg7[%406, %c0_152, %c0_153], %409 {strides = array<i32>} : memref<8x8x32xf32, #tpu.memory_space<vmem>>, vector<1x8x32xf32>,
    %410 = arith.index_cast %333 : i32 to index
    %c0_154 = arith.constant 0 : index
    %c0_155 = arith.constant 0 : index
    %411 = vector.load %arg8[%410, %c0_154, %c0_155] : memref<8x8x32xf32, #tpu.memory_space<vmem>>, vector<1x8x32xf32>
    %412 = vector.shape_cast %411 : vector<1x8x32xf32> to vector<8x32xf32>
    %413 = vector.shape_cast %405 : vector<8x32xf32> to vector<1x8x32xf32>
    tpu.vector_store %arg8[%410, %c0_154, %c0_155], %413 {strides = array<i32>} : memref<8x8x32xf32, #tpu.memory_space<vmem>>, vector<1x8x32xf32>,
    %c5_i32 = arith.constant 5 : i32
    %c7_i32_156 = arith.constant 7 : i32
    %414 = arith.subi %c7_i32_156, %c5_i32 : i32
    %415 = arith.index_cast %c5_i32 : i32 to index
    %c0_157 = arith.constant 0 : index
    %c0_158 = arith.constant 0 : index
    %416 = vector.load %arg1[%415, %c0_157, %c0_158] : memref<8x8x128xf32, #tpu.memory_space<vmem>>, vector<1x8x128xf32>
    %417 = vector.shape_cast %416 : vector<1x8x128xf32> to vector<8x128xf32>
    %cst_159 = arith.constant dense<0.000000e+00> : vector<8x128xf32>
    %418 = tpu.matmul %400, %3, %cst_159 {dimension_numbers = #tpu.dot_dimension_numbers<[1], [0], [0], [1], [0, 0, 1, 1], [], []>} : vector<8x32xf32>, vector<32x128xf32>, vector<8x128xf32> -> vector<8x128xf32>
    %419 = arith.addf %417, %418 : vector<8x128xf32>
    %420 = arith.index_cast %414 : i32 to index
    %c0_160 = arith.constant 0 : index
    %c0_161 = arith.constant 0 : index
    %421 = vector.load %arg2[%420, %c0_160, %c0_161] : memref<8x8x128xf32, #tpu.memory_space<vmem>>, vector<1x8x128xf32>
    %422 = vector.shape_cast %421 : vector<1x8x128xf32> to vector<8x128xf32>
    %cst_162 = arith.constant dense<0.000000e+00> : vector<8x128xf32>
    %423 = tpu.matmul %405, %4, %cst_162 {dimension_numbers = #tpu.dot_dimension_numbers<[1], [0], [0], [1], [0, 0, 1, 1], [], []>} : vector<8x32xf32>, vector<32x128xf32>, vector<8x128xf32> -> vector<8x128xf32>
    %424 = arith.addf %422, %423 : vector<8x128xf32>
    %425 = vector.extract_strided_slice %419 {offsets = [0, 0], sizes = [8, 32], strides = [1, 1]} : vector<8x128xf32> to vector<8x32xf32>
    %cst_163 = arith.constant 5.000000e-01 : f32
    %426 = vector.broadcast %cst_163 : f32 to vector<8x32xf32>
    %427 = arith.mulf %426, %425 : vector<8x32xf32>
    %428 = math.tanh %427 : vector<8x32xf32>
    %cst_164 = arith.constant 5.000000e-01 : f32
    %429 = vector.broadcast %cst_164 : f32 to vector<8x32xf32>
    %430 = arith.mulf %429, %428 : vector<8x32xf32>
    %cst_165 = arith.constant 5.000000e-01 : f32
    %431 = vector.broadcast %cst_165 : f32 to vector<8x32xf32>
    %432 = arith.addf %430, %431 : vector<8x32xf32>
    %433 = vector.extract_strided_slice %419 {offsets = [0, 32], sizes = [8, 32], strides = [1, 1]} : vector<8x128xf32> to vector<8x32xf32>
    %cst_166 = arith.constant 5.000000e-01 : f32
    %434 = vector.broadcast %cst_166 : f32 to vector<8x32xf32>
    %435 = arith.mulf %434, %433 : vector<8x32xf32>
    %436 = math.tanh %435 : vector<8x32xf32>
    %cst_167 = arith.constant 5.000000e-01 : f32
    %437 = vector.broadcast %cst_167 : f32 to vector<8x32xf32>
    %438 = arith.mulf %437, %436 : vector<8x32xf32>
    %cst_168 = arith.constant 5.000000e-01 : f32
    %439 = vector.broadcast %cst_168 : f32 to vector<8x32xf32>
    %440 = arith.addf %438, %439 : vector<8x32xf32>
    %441 = vector.extract_strided_slice %419 {offsets = [0, 64], sizes = [8, 32], strides = [1, 1]} : vector<8x128xf32> to vector<8x32xf32>
    %442 = math.tanh %441 : vector<8x32xf32>
    %443 = vector.extract_strided_slice %419 {offsets = [0, 96], sizes = [8, 32], strides = [1, 1]} : vector<8x128xf32> to vector<8x32xf32>
    %cst_169 = arith.constant 5.000000e-01 : f32
    %444 = vector.broadcast %cst_169 : f32 to vector<8x32xf32>
    %445 = arith.mulf %444, %443 : vector<8x32xf32>
    %446 = math.tanh %445 : vector<8x32xf32>
    %cst_170 = arith.constant 5.000000e-01 : f32
    %447 = vector.broadcast %cst_170 : f32 to vector<8x32xf32>
    %448 = arith.mulf %447, %446 : vector<8x32xf32>
    %cst_171 = arith.constant 5.000000e-01 : f32
    %449 = vector.broadcast %cst_171 : f32 to vector<8x32xf32>
    %450 = arith.addf %448, %449 : vector<8x32xf32>
    %451 = vector.extract_strided_slice %424 {offsets = [0, 0], sizes = [8, 32], strides = [1, 1]} : vector<8x128xf32> to vector<8x32xf32>
    %cst_172 = arith.constant 5.000000e-01 : f32
    %452 = vector.broadcast %cst_172 : f32 to vector<8x32xf32>
    %453 = arith.mulf %452, %451 : vector<8x32xf32>
    %454 = math.tanh %453 : vector<8x32xf32>
    %cst_173 = arith.constant 5.000000e-01 : f32
    %455 = vector.broadcast %cst_173 : f32 to vector<8x32xf32>
    %456 = arith.mulf %455, %454 : vector<8x32xf32>
    %cst_174 = arith.constant 5.000000e-01 : f32
    %457 = vector.broadcast %cst_174 : f32 to vector<8x32xf32>
    %458 = arith.addf %456, %457 : vector<8x32xf32>
    %459 = vector.extract_strided_slice %424 {offsets = [0, 32], sizes = [8, 32], strides = [1, 1]} : vector<8x128xf32> to vector<8x32xf32>
    %cst_175 = arith.constant 5.000000e-01 : f32
    %460 = vector.broadcast %cst_175 : f32 to vector<8x32xf32>
    %461 = arith.mulf %460, %459 : vector<8x32xf32>
    %462 = math.tanh %461 : vector<8x32xf32>
    %cst_176 = arith.constant 5.000000e-01 : f32
    %463 = vector.broadcast %cst_176 : f32 to vector<8x32xf32>
    %464 = arith.mulf %463, %462 : vector<8x32xf32>
    %cst_177 = arith.constant 5.000000e-01 : f32
    %465 = vector.broadcast %cst_177 : f32 to vector<8x32xf32>
    %466 = arith.addf %464, %465 : vector<8x32xf32>
    %467 = vector.extract_strided_slice %424 {offsets = [0, 64], sizes = [8, 32], strides = [1, 1]} : vector<8x128xf32> to vector<8x32xf32>
    %468 = math.tanh %467 : vector<8x32xf32>
    %469 = vector.extract_strided_slice %424 {offsets = [0, 96], sizes = [8, 32], strides = [1, 1]} : vector<8x128xf32> to vector<8x32xf32>
    %cst_178 = arith.constant 5.000000e-01 : f32
    %470 = vector.broadcast %cst_178 : f32 to vector<8x32xf32>
    %471 = arith.mulf %470, %469 : vector<8x32xf32>
    %472 = math.tanh %471 : vector<8x32xf32>
    %cst_179 = arith.constant 5.000000e-01 : f32
    %473 = vector.broadcast %cst_179 : f32 to vector<8x32xf32>
    %474 = arith.mulf %473, %472 : vector<8x32xf32>
    %cst_180 = arith.constant 5.000000e-01 : f32
    %475 = vector.broadcast %cst_180 : f32 to vector<8x32xf32>
    %476 = arith.addf %474, %475 : vector<8x32xf32>
    %477 = arith.mulf %440, %398 : vector<8x32xf32>
    %478 = arith.mulf %432, %442 : vector<8x32xf32>
    %479 = arith.addf %477, %478 : vector<8x32xf32>
    %480 = math.tanh %479 : vector<8x32xf32>
    %481 = arith.mulf %450, %480 : vector<8x32xf32>
    %482 = arith.mulf %466, %403 : vector<8x32xf32>
    %483 = arith.mulf %458, %468 : vector<8x32xf32>
    %484 = arith.addf %482, %483 : vector<8x32xf32>
    %485 = math.tanh %484 : vector<8x32xf32>
    %486 = arith.mulf %476, %485 : vector<8x32xf32>
    %487 = arith.index_cast %c5_i32 : i32 to index
    %c0_181 = arith.constant 0 : index
    %c0_182 = arith.constant 0 : index
    %488 = vector.load %arg7[%487, %c0_181, %c0_182] : memref<8x8x32xf32, #tpu.memory_space<vmem>>, vector<1x8x32xf32>
    %489 = vector.shape_cast %488 : vector<1x8x32xf32> to vector<8x32xf32>
    %490 = vector.shape_cast %481 : vector<8x32xf32> to vector<1x8x32xf32>
    tpu.vector_store %arg7[%487, %c0_181, %c0_182], %490 {strides = array<i32>} : memref<8x8x32xf32, #tpu.memory_space<vmem>>, vector<1x8x32xf32>,
    %491 = arith.index_cast %414 : i32 to index
    %c0_183 = arith.constant 0 : index
    %c0_184 = arith.constant 0 : index
    %492 = vector.load %arg8[%491, %c0_183, %c0_184] : memref<8x8x32xf32, #tpu.memory_space<vmem>>, vector<1x8x32xf32>
    %493 = vector.shape_cast %492 : vector<1x8x32xf32> to vector<8x32xf32>
    %494 = vector.shape_cast %486 : vector<8x32xf32> to vector<1x8x32xf32>
    tpu.vector_store %arg8[%491, %c0_183, %c0_184], %494 {strides = array<i32>} : memref<8x8x32xf32, #tpu.memory_space<vmem>>, vector<1x8x32xf32>,
    %c6_i32 = arith.constant 6 : i32
    %c7_i32_185 = arith.constant 7 : i32
    %495 = arith.subi %c7_i32_185, %c6_i32 : i32
    %496 = arith.index_cast %c6_i32 : i32 to index
    %c0_186 = arith.constant 0 : index
    %c0_187 = arith.constant 0 : index
    %497 = vector.load %arg1[%496, %c0_186, %c0_187] : memref<8x8x128xf32, #tpu.memory_space<vmem>>, vector<1x8x128xf32>
    %498 = vector.shape_cast %497 : vector<1x8x128xf32> to vector<8x128xf32>
    %cst_188 = arith.constant dense<0.000000e+00> : vector<8x128xf32>
    %499 = tpu.matmul %481, %3, %cst_188 {dimension_numbers = #tpu.dot_dimension_numbers<[1], [0], [0], [1], [0, 0, 1, 1], [], []>} : vector<8x32xf32>, vector<32x128xf32>, vector<8x128xf32> -> vector<8x128xf32>
    %500 = arith.addf %498, %499 : vector<8x128xf32>
    %501 = arith.index_cast %495 : i32 to index
    %c0_189 = arith.constant 0 : index
    %c0_190 = arith.constant 0 : index
    %502 = vector.load %arg2[%501, %c0_189, %c0_190] : memref<8x8x128xf32, #tpu.memory_space<vmem>>, vector<1x8x128xf32>
    %503 = vector.shape_cast %502 : vector<1x8x128xf32> to vector<8x128xf32>
    %cst_191 = arith.constant dense<0.000000e+00> : vector<8x128xf32>
    %504 = tpu.matmul %486, %4, %cst_191 {dimension_numbers = #tpu.dot_dimension_numbers<[1], [0], [0], [1], [0, 0, 1, 1], [], []>} : vector<8x32xf32>, vector<32x128xf32>, vector<8x128xf32> -> vector<8x128xf32>
    %505 = arith.addf %503, %504 : vector<8x128xf32>
    %506 = vector.extract_strided_slice %500 {offsets = [0, 0], sizes = [8, 32], strides = [1, 1]} : vector<8x128xf32> to vector<8x32xf32>
    %cst_192 = arith.constant 5.000000e-01 : f32
    %507 = vector.broadcast %cst_192 : f32 to vector<8x32xf32>
    %508 = arith.mulf %507, %506 : vector<8x32xf32>
    %509 = math.tanh %508 : vector<8x32xf32>
    %cst_193 = arith.constant 5.000000e-01 : f32
    %510 = vector.broadcast %cst_193 : f32 to vector<8x32xf32>
    %511 = arith.mulf %510, %509 : vector<8x32xf32>
    %cst_194 = arith.constant 5.000000e-01 : f32
    %512 = vector.broadcast %cst_194 : f32 to vector<8x32xf32>
    %513 = arith.addf %511, %512 : vector<8x32xf32>
    %514 = vector.extract_strided_slice %500 {offsets = [0, 32], sizes = [8, 32], strides = [1, 1]} : vector<8x128xf32> to vector<8x32xf32>
    %cst_195 = arith.constant 5.000000e-01 : f32
    %515 = vector.broadcast %cst_195 : f32 to vector<8x32xf32>
    %516 = arith.mulf %515, %514 : vector<8x32xf32>
    %517 = math.tanh %516 : vector<8x32xf32>
    %cst_196 = arith.constant 5.000000e-01 : f32
    %518 = vector.broadcast %cst_196 : f32 to vector<8x32xf32>
    %519 = arith.mulf %518, %517 : vector<8x32xf32>
    %cst_197 = arith.constant 5.000000e-01 : f32
    %520 = vector.broadcast %cst_197 : f32 to vector<8x32xf32>
    %521 = arith.addf %519, %520 : vector<8x32xf32>
    %522 = vector.extract_strided_slice %500 {offsets = [0, 64], sizes = [8, 32], strides = [1, 1]} : vector<8x128xf32> to vector<8x32xf32>
    %523 = math.tanh %522 : vector<8x32xf32>
    %524 = vector.extract_strided_slice %500 {offsets = [0, 96], sizes = [8, 32], strides = [1, 1]} : vector<8x128xf32> to vector<8x32xf32>
    %cst_198 = arith.constant 5.000000e-01 : f32
    %525 = vector.broadcast %cst_198 : f32 to vector<8x32xf32>
    %526 = arith.mulf %525, %524 : vector<8x32xf32>
    %527 = math.tanh %526 : vector<8x32xf32>
    %cst_199 = arith.constant 5.000000e-01 : f32
    %528 = vector.broadcast %cst_199 : f32 to vector<8x32xf32>
    %529 = arith.mulf %528, %527 : vector<8x32xf32>
    %cst_200 = arith.constant 5.000000e-01 : f32
    %530 = vector.broadcast %cst_200 : f32 to vector<8x32xf32>
    %531 = arith.addf %529, %530 : vector<8x32xf32>
    %532 = vector.extract_strided_slice %505 {offsets = [0, 0], sizes = [8, 32], strides = [1, 1]} : vector<8x128xf32> to vector<8x32xf32>
    %cst_201 = arith.constant 5.000000e-01 : f32
    %533 = vector.broadcast %cst_201 : f32 to vector<8x32xf32>
    %534 = arith.mulf %533, %532 : vector<8x32xf32>
    %535 = math.tanh %534 : vector<8x32xf32>
    %cst_202 = arith.constant 5.000000e-01 : f32
    %536 = vector.broadcast %cst_202 : f32 to vector<8x32xf32>
    %537 = arith.mulf %536, %535 : vector<8x32xf32>
    %cst_203 = arith.constant 5.000000e-01 : f32
    %538 = vector.broadcast %cst_203 : f32 to vector<8x32xf32>
    %539 = arith.addf %537, %538 : vector<8x32xf32>
    %540 = vector.extract_strided_slice %505 {offsets = [0, 32], sizes = [8, 32], strides = [1, 1]} : vector<8x128xf32> to vector<8x32xf32>
    %cst_204 = arith.constant 5.000000e-01 : f32
    %541 = vector.broadcast %cst_204 : f32 to vector<8x32xf32>
    %542 = arith.mulf %541, %540 : vector<8x32xf32>
    %543 = math.tanh %542 : vector<8x32xf32>
    %cst_205 = arith.constant 5.000000e-01 : f32
    %544 = vector.broadcast %cst_205 : f32 to vector<8x32xf32>
    %545 = arith.mulf %544, %543 : vector<8x32xf32>
    %cst_206 = arith.constant 5.000000e-01 : f32
    %546 = vector.broadcast %cst_206 : f32 to vector<8x32xf32>
    %547 = arith.addf %545, %546 : vector<8x32xf32>
    %548 = vector.extract_strided_slice %505 {offsets = [0, 64], sizes = [8, 32], strides = [1, 1]} : vector<8x128xf32> to vector<8x32xf32>
    %549 = math.tanh %548 : vector<8x32xf32>
    %550 = vector.extract_strided_slice %505 {offsets = [0, 96], sizes = [8, 32], strides = [1, 1]} : vector<8x128xf32> to vector<8x32xf32>
    %cst_207 = arith.constant 5.000000e-01 : f32
    %551 = vector.broadcast %cst_207 : f32 to vector<8x32xf32>
    %552 = arith.mulf %551, %550 : vector<8x32xf32>
    %553 = math.tanh %552 : vector<8x32xf32>
    %cst_208 = arith.constant 5.000000e-01 : f32
    %554 = vector.broadcast %cst_208 : f32 to vector<8x32xf32>
    %555 = arith.mulf %554, %553 : vector<8x32xf32>
    %cst_209 = arith.constant 5.000000e-01 : f32
    %556 = vector.broadcast %cst_209 : f32 to vector<8x32xf32>
    %557 = arith.addf %555, %556 : vector<8x32xf32>
    %558 = arith.mulf %521, %479 : vector<8x32xf32>
    %559 = arith.mulf %513, %523 : vector<8x32xf32>
    %560 = arith.addf %558, %559 : vector<8x32xf32>
    %561 = math.tanh %560 : vector<8x32xf32>
    %562 = arith.mulf %531, %561 : vector<8x32xf32>
    %563 = arith.mulf %547, %484 : vector<8x32xf32>
    %564 = arith.mulf %539, %549 : vector<8x32xf32>
    %565 = arith.addf %563, %564 : vector<8x32xf32>
    %566 = math.tanh %565 : vector<8x32xf32>
    %567 = arith.mulf %557, %566 : vector<8x32xf32>
    %568 = arith.index_cast %c6_i32 : i32 to index
    %c0_210 = arith.constant 0 : index
    %c0_211 = arith.constant 0 : index
    %569 = vector.load %arg7[%568, %c0_210, %c0_211] : memref<8x8x32xf32, #tpu.memory_space<vmem>>, vector<1x8x32xf32>
    %570 = vector.shape_cast %569 : vector<1x8x32xf32> to vector<8x32xf32>
    %571 = vector.shape_cast %562 : vector<8x32xf32> to vector<1x8x32xf32>
    tpu.vector_store %arg7[%568, %c0_210, %c0_211], %571 {strides = array<i32>} : memref<8x8x32xf32, #tpu.memory_space<vmem>>, vector<1x8x32xf32>,
    %572 = arith.index_cast %495 : i32 to index
    %c0_212 = arith.constant 0 : index
    %c0_213 = arith.constant 0 : index
    %573 = vector.load %arg8[%572, %c0_212, %c0_213] : memref<8x8x32xf32, #tpu.memory_space<vmem>>, vector<1x8x32xf32>
    %574 = vector.shape_cast %573 : vector<1x8x32xf32> to vector<8x32xf32>
    %575 = vector.shape_cast %567 : vector<8x32xf32> to vector<1x8x32xf32>
    tpu.vector_store %arg8[%572, %c0_212, %c0_213], %575 {strides = array<i32>} : memref<8x8x32xf32, #tpu.memory_space<vmem>>, vector<1x8x32xf32>,
    %c7_i32_214 = arith.constant 7 : i32
    %c7_i32_215 = arith.constant 7 : i32
    %576 = arith.subi %c7_i32_215, %c7_i32_214 : i32
    %577 = arith.index_cast %c7_i32_214 : i32 to index
    %c0_216 = arith.constant 0 : index
    %c0_217 = arith.constant 0 : index
    %578 = vector.load %arg1[%577, %c0_216, %c0_217] : memref<8x8x128xf32, #tpu.memory_space<vmem>>, vector<1x8x128xf32>
    %579 = vector.shape_cast %578 : vector<1x8x128xf32> to vector<8x128xf32>
    %cst_218 = arith.constant dense<0.000000e+00> : vector<8x128xf32>
    %580 = tpu.matmul %562, %3, %cst_218 {dimension_numbers = #tpu.dot_dimension_numbers<[1], [0], [0], [1], [0, 0, 1, 1], [], []>} : vector<8x32xf32>, vector<32x128xf32>, vector<8x128xf32> -> vector<8x128xf32>
    %581 = arith.addf %579, %580 : vector<8x128xf32>
    %582 = arith.index_cast %576 : i32 to index
    %c0_219 = arith.constant 0 : index
    %c0_220 = arith.constant 0 : index
    %583 = vector.load %arg2[%582, %c0_219, %c0_220] : memref<8x8x128xf32, #tpu.memory_space<vmem>>, vector<1x8x128xf32>
    %584 = vector.shape_cast %583 : vector<1x8x128xf32> to vector<8x128xf32>
    %cst_221 = arith.constant dense<0.000000e+00> : vector<8x128xf32>
    %585 = tpu.matmul %567, %4, %cst_221 {dimension_numbers = #tpu.dot_dimension_numbers<[1], [0], [0], [1], [0, 0, 1, 1], [], []>} : vector<8x32xf32>, vector<32x128xf32>, vector<8x128xf32> -> vector<8x128xf32>
    %586 = arith.addf %584, %585 : vector<8x128xf32>
    %587 = vector.extract_strided_slice %581 {offsets = [0, 0], sizes = [8, 32], strides = [1, 1]} : vector<8x128xf32> to vector<8x32xf32>
    %cst_222 = arith.constant 5.000000e-01 : f32
    %588 = vector.broadcast %cst_222 : f32 to vector<8x32xf32>
    %589 = arith.mulf %588, %587 : vector<8x32xf32>
    %590 = math.tanh %589 : vector<8x32xf32>
    %cst_223 = arith.constant 5.000000e-01 : f32
    %591 = vector.broadcast %cst_223 : f32 to vector<8x32xf32>
    %592 = arith.mulf %591, %590 : vector<8x32xf32>
    %cst_224 = arith.constant 5.000000e-01 : f32
    %593 = vector.broadcast %cst_224 : f32 to vector<8x32xf32>
    %594 = arith.addf %592, %593 : vector<8x32xf32>
    %595 = vector.extract_strided_slice %581 {offsets = [0, 32], sizes = [8, 32], strides = [1, 1]} : vector<8x128xf32> to vector<8x32xf32>
    %cst_225 = arith.constant 5.000000e-01 : f32
    %596 = vector.broadcast %cst_225 : f32 to vector<8x32xf32>
    %597 = arith.mulf %596, %595 : vector<8x32xf32>
    %598 = math.tanh %597 : vector<8x32xf32>
    %cst_226 = arith.constant 5.000000e-01 : f32
    %599 = vector.broadcast %cst_226 : f32 to vector<8x32xf32>
    %600 = arith.mulf %599, %598 : vector<8x32xf32>
    %cst_227 = arith.constant 5.000000e-01 : f32
    %601 = vector.broadcast %cst_227 : f32 to vector<8x32xf32>
    %602 = arith.addf %600, %601 : vector<8x32xf32>
    %603 = vector.extract_strided_slice %581 {offsets = [0, 64], sizes = [8, 32], strides = [1, 1]} : vector<8x128xf32> to vector<8x32xf32>
    %604 = math.tanh %603 : vector<8x32xf32>
    %605 = vector.extract_strided_slice %581 {offsets = [0, 96], sizes = [8, 32], strides = [1, 1]} : vector<8x128xf32> to vector<8x32xf32>
    %cst_228 = arith.constant 5.000000e-01 : f32
    %606 = vector.broadcast %cst_228 : f32 to vector<8x32xf32>
    %607 = arith.mulf %606, %605 : vector<8x32xf32>
    %608 = math.tanh %607 : vector<8x32xf32>
    %cst_229 = arith.constant 5.000000e-01 : f32
    %609 = vector.broadcast %cst_229 : f32 to vector<8x32xf32>
    %610 = arith.mulf %609, %608 : vector<8x32xf32>
    %cst_230 = arith.constant 5.000000e-01 : f32
    %611 = vector.broadcast %cst_230 : f32 to vector<8x32xf32>
    %612 = arith.addf %610, %611 : vector<8x32xf32>
    %613 = vector.extract_strided_slice %586 {offsets = [0, 0], sizes = [8, 32], strides = [1, 1]} : vector<8x128xf32> to vector<8x32xf32>
    %cst_231 = arith.constant 5.000000e-01 : f32
    %614 = vector.broadcast %cst_231 : f32 to vector<8x32xf32>
    %615 = arith.mulf %614, %613 : vector<8x32xf32>
    %616 = math.tanh %615 : vector<8x32xf32>
    %cst_232 = arith.constant 5.000000e-01 : f32
    %617 = vector.broadcast %cst_232 : f32 to vector<8x32xf32>
    %618 = arith.mulf %617, %616 : vector<8x32xf32>
    %cst_233 = arith.constant 5.000000e-01 : f32
    %619 = vector.broadcast %cst_233 : f32 to vector<8x32xf32>
    %620 = arith.addf %618, %619 : vector<8x32xf32>
    %621 = vector.extract_strided_slice %586 {offsets = [0, 32], sizes = [8, 32], strides = [1, 1]} : vector<8x128xf32> to vector<8x32xf32>
    %cst_234 = arith.constant 5.000000e-01 : f32
    %622 = vector.broadcast %cst_234 : f32 to vector<8x32xf32>
    %623 = arith.mulf %622, %621 : vector<8x32xf32>
    %624 = math.tanh %623 : vector<8x32xf32>
    %cst_235 = arith.constant 5.000000e-01 : f32
    %625 = vector.broadcast %cst_235 : f32 to vector<8x32xf32>
    %626 = arith.mulf %625, %624 : vector<8x32xf32>
    %cst_236 = arith.constant 5.000000e-01 : f32
    %627 = vector.broadcast %cst_236 : f32 to vector<8x32xf32>
    %628 = arith.addf %626, %627 : vector<8x32xf32>
    %629 = vector.extract_strided_slice %586 {offsets = [0, 64], sizes = [8, 32], strides = [1, 1]} : vector<8x128xf32> to vector<8x32xf32>
    %630 = math.tanh %629 : vector<8x32xf32>
    %631 = vector.extract_strided_slice %586 {offsets = [0, 96], sizes = [8, 32], strides = [1, 1]} : vector<8x128xf32> to vector<8x32xf32>
    %cst_237 = arith.constant 5.000000e-01 : f32
    %632 = vector.broadcast %cst_237 : f32 to vector<8x32xf32>
    %633 = arith.mulf %632, %631 : vector<8x32xf32>
    %634 = math.tanh %633 : vector<8x32xf32>
    %cst_238 = arith.constant 5.000000e-01 : f32
    %635 = vector.broadcast %cst_238 : f32 to vector<8x32xf32>
    %636 = arith.mulf %635, %634 : vector<8x32xf32>
    %cst_239 = arith.constant 5.000000e-01 : f32
    %637 = vector.broadcast %cst_239 : f32 to vector<8x32xf32>
    %638 = arith.addf %636, %637 : vector<8x32xf32>
    %639 = arith.mulf %602, %560 : vector<8x32xf32>
    %640 = arith.mulf %594, %604 : vector<8x32xf32>
    %641 = arith.addf %639, %640 : vector<8x32xf32>
    %642 = math.tanh %641 : vector<8x32xf32>
    %643 = arith.mulf %612, %642 : vector<8x32xf32>
    %644 = arith.mulf %628, %565 : vector<8x32xf32>
    %645 = arith.mulf %620, %630 : vector<8x32xf32>
    %646 = arith.addf %644, %645 : vector<8x32xf32>
    %647 = math.tanh %646 : vector<8x32xf32>
    %648 = arith.mulf %638, %647 : vector<8x32xf32>
    %649 = arith.index_cast %c7_i32_214 : i32 to index
    %c0_240 = arith.constant 0 : index
    %c0_241 = arith.constant 0 : index
    %650 = vector.load %arg7[%649, %c0_240, %c0_241] : memref<8x8x32xf32, #tpu.memory_space<vmem>>, vector<1x8x32xf32>
    %651 = vector.shape_cast %650 : vector<1x8x32xf32> to vector<8x32xf32>
    %652 = vector.shape_cast %643 : vector<8x32xf32> to vector<1x8x32xf32>
    tpu.vector_store %arg7[%649, %c0_240, %c0_241], %652 {strides = array<i32>} : memref<8x8x32xf32, #tpu.memory_space<vmem>>, vector<1x8x32xf32>,
    %653 = arith.index_cast %576 : i32 to index
    %c0_242 = arith.constant 0 : index
    %c0_243 = arith.constant 0 : index
    %654 = vector.load %arg8[%653, %c0_242, %c0_243] : memref<8x8x32xf32, #tpu.memory_space<vmem>>, vector<1x8x32xf32>
    %655 = vector.shape_cast %654 : vector<1x8x32xf32> to vector<8x32xf32>
    %656 = vector.shape_cast %648 : vector<8x32xf32> to vector<1x8x32xf32>
    tpu.vector_store %arg8[%653, %c0_242, %c0_243], %656 {strides = array<i32>} : memref<8x8x32xf32, #tpu.memory_space<vmem>>, vector<1x8x32xf32>,
    %c8_i32 = arith.constant 8 : i32
    %c0_244 = arith.constant 0 : index
    %c0_245 = arith.constant 0 : index
    %657 = vector.load %arg11[%c0_244, %c0_245] : memref<8x32xf32, #tpu.memory_space<vmem>>, vector<8x32xf32>
    tpu.vector_store %arg11[%c0_244, %c0_245], %643 {strides = array<i32>} : memref<8x32xf32, #tpu.memory_space<vmem>>, vector<8x32xf32>,
    %c0_246 = arith.constant 0 : index
    %c0_247 = arith.constant 0 : index
    %658 = vector.load %arg12[%c0_246, %c0_247] : memref<8x32xf32, #tpu.memory_space<vmem>>, vector<8x32xf32>
    tpu.vector_store %arg12[%c0_246, %c0_247], %641 {strides = array<i32>} : memref<8x32xf32, #tpu.memory_space<vmem>>, vector<8x32xf32>,
    %c0_248 = arith.constant 0 : index
    %c0_249 = arith.constant 0 : index
    %659 = vector.load %arg13[%c0_248, %c0_249] : memref<8x32xf32, #tpu.memory_space<vmem>>, vector<8x32xf32>
    tpu.vector_store %arg13[%c0_248, %c0_249], %648 {strides = array<i32>} : memref<8x32xf32, #tpu.memory_space<vmem>>, vector<8x32xf32>,
    %c0_250 = arith.constant 0 : index
    %c0_251 = arith.constant 0 : index
    %660 = vector.load %arg14[%c0_250, %c0_251] : memref<8x32xf32, #tpu.memory_space<vmem>>, vector<8x32xf32>
    tpu.vector_store %arg14[%c0_250, %c0_251], %646 {strides = array<i32>} : memref<8x32xf32, #tpu.memory_space<vmem>>, vector<8x32xf32>,
    %c0_252 = arith.constant 0 : index
    %c0_253 = arith.constant 0 : index
    %c0_254 = arith.constant 0 : index
    %661 = vector.load %arg9[%c0_252, %c0_253, %c0_254] : memref<2x8x32xf32, #tpu.memory_space<vmem>>, vector<1x8x32xf32>
    %662 = vector.shape_cast %661 : vector<1x8x32xf32> to vector<8x32xf32>
    %663 = vector.shape_cast %643 : vector<8x32xf32> to vector<1x8x32xf32>
    tpu.vector_store %arg9[%c0_252, %c0_253, %c0_254], %663 {strides = array<i32>} : memref<2x8x32xf32, #tpu.memory_space<vmem>>, vector<1x8x32xf32>,
    %c1 = arith.constant 1 : index
    %c0_255 = arith.constant 0 : index
    %c0_256 = arith.constant 0 : index
    %664 = vector.load %arg9[%c1, %c0_255, %c0_256] : memref<2x8x32xf32, #tpu.memory_space<vmem>>, vector<1x8x32xf32>
    %665 = vector.shape_cast %664 : vector<1x8x32xf32> to vector<8x32xf32>
    %666 = vector.shape_cast %648 : vector<8x32xf32> to vector<1x8x32xf32>
    tpu.vector_store %arg9[%c1, %c0_255, %c0_256], %666 {strides = array<i32>} : memref<2x8x32xf32, #tpu.memory_space<vmem>>, vector<1x8x32xf32>,
    %c0_257 = arith.constant 0 : index
    %c0_258 = arith.constant 0 : index
    %c0_259 = arith.constant 0 : index
    %667 = vector.load %arg10[%c0_257, %c0_258, %c0_259] : memref<2x8x32xf32, #tpu.memory_space<vmem>>, vector<1x8x32xf32>
    %668 = vector.shape_cast %667 : vector<1x8x32xf32> to vector<8x32xf32>
    %669 = vector.shape_cast %641 : vector<8x32xf32> to vector<1x8x32xf32>
    tpu.vector_store %arg10[%c0_257, %c0_258, %c0_259], %669 {strides = array<i32>} : memref<2x8x32xf32, #tpu.memory_space<vmem>>, vector<1x8x32xf32>,
    %c1_260 = arith.constant 1 : index
    %c0_261 = arith.constant 0 : index
    %c0_262 = arith.constant 0 : index
    %670 = vector.load %arg10[%c1_260, %c0_261, %c0_262] : memref<2x8x32xf32, #tpu.memory_space<vmem>>, vector<1x8x32xf32>
    %671 = vector.shape_cast %670 : vector<1x8x32xf32> to vector<8x32xf32>
    %672 = vector.shape_cast %646 : vector<8x32xf32> to vector<1x8x32xf32>
    tpu.vector_store %arg10[%c1_260, %c0_261, %c0_262], %672 {strides = array<i32>} : memref<2x8x32xf32, #tpu.memory_space<vmem>>, vector<1x8x32xf32>,
    return
  }
  func.func @transform_0(%arg0: i32) -> (i32, i32, i32) {
    %c0_i32 = arith.constant 0 : i32
    %c0_i32_0 = arith.constant 0 : i32
    %c0_i32_1 = arith.constant 0 : i32
    return %arg0, %c0_i32, %c0_i32_0 : i32, i32, i32
  }
  func.func @transform_1(%arg0: i32) -> (i32, i32, i32) {
    %c0_i32 = arith.constant 0 : i32
    %0 = arith.subi %c0_i32, %arg0 : i32
    %c0_i32_0 = arith.constant 0 : i32
    %c0_i32_1 = arith.constant 0 : i32
    %c0_i32_2 = arith.constant 0 : i32
    return %0, %c0_i32_0, %c0_i32_1 : i32, i32, i32
  }
  func.func @transform_2(%arg0: i32) -> (i32, i32) {
    %c0_i32 = arith.constant 0 : i32
    %c0_i32_0 = arith.constant 0 : i32
    %c0_i32_1 = arith.constant 0 : i32
    return %c0_i32, %c0_i32_0 : i32, i32
  }
  func.func @transform_3(%arg0: i32) -> (i32, i32) {
    %c0_i32 = arith.constant 0 : i32
    %c0_i32_0 = arith.constant 0 : i32
    %c0_i32_1 = arith.constant 0 : i32
    return %c0_i32, %c0_i32_0 : i32, i32
  }
  func.func @transform_4(%arg0: i32) -> (i32, i32, i32) {
    %c0_i32 = arith.constant 0 : i32
    %c0_i32_0 = arith.constant 0 : i32
    %c0_i32_1 = arith.constant 0 : i32
    %c0_i32_2 = arith.constant 0 : i32
    return %c0_i32, %c0_i32_0, %c0_i32_1 : i32, i32, i32
  }
  func.func @transform_5(%arg0: i32) -> (i32, i32, i32) {
    %c0_i32 = arith.constant 0 : i32
    %c0_i32_0 = arith.constant 0 : i32
    %c0_i32_1 = arith.constant 0 : i32
    %c0_i32_2 = arith.constant 0 : i32
    return %c0_i32, %c0_i32_0, %c0_i32_1 : i32, i32, i32
  }
  func.func @transform_6(%arg0: i32) -> (i32, i32, i32) {
    %c0_i32 = arith.constant 0 : i32
    %c0_i32_0 = arith.constant 0 : i32
    %c0_i32_1 = arith.constant 0 : i32
    return %arg0, %c0_i32, %c0_i32_0 : i32, i32, i32
  }
  func.func @transform_7(%arg0: i32) -> (i32, i32, i32) {
    %c0_i32 = arith.constant 0 : i32
    %0 = arith.subi %c0_i32, %arg0 : i32
    %c0_i32_0 = arith.constant 0 : i32
    %c0_i32_1 = arith.constant 0 : i32
    %c0_i32_2 = arith.constant 0 : i32
    return %0, %c0_i32_0, %c0_i32_1 : i32, i32, i32
  }
  func.func @transform_8(%arg0: i32) -> (i32, i32, i32) {
    %c0_i32 = arith.constant 0 : i32
    %c0_i32_0 = arith.constant 0 : i32
    %c0_i32_1 = arith.constant 0 : i32
    %c0_i32_2 = arith.constant 0 : i32
    return %c0_i32, %c0_i32_0, %c0_i32_1 : i32, i32, i32
  }
  func.func @transform_9(%arg0: i32) -> (i32, i32, i32) {
    %c0_i32 = arith.constant 0 : i32
    %c0_i32_0 = arith.constant 0 : i32
    %c0_i32_1 = arith.constant 0 : i32
    %c0_i32_2 = arith.constant 0 : i32
    return %c0_i32, %c0_i32_0, %c0_i32_1 : i32, i32, i32
  }
}

</mosaic_0001>

<llo_original>
// kernel: encoder_lstm_forward.1
$region0: #{encoder_lstm_forward.1}
  #allocation0 [shape = 'u32[]', space=smem, size = 0x4, offset = 0x4, fixed_abs, tag = 'smem constant byte address 0x4 - core index']
  #allocation1 [shape = 'u32[144,128]{1,0:T(1,128)}', space=vmem, size = 0x12000, scoped, tag = 'internal scratch']
  #allocation2 [shape = 'f32[8,32]{1,0:T(8,128)}', space=vmem, size = 0x1000, scoped, tag = 'scratch operand']
  #allocation3 [shape = 'f32[8,32]{1,0:T(8,128)}', space=vmem, size = 0x1000, scoped, tag = 'scratch operand']
  #allocation4 [shape = 'f32[8,32]{1,0:T(8,128)}', space=vmem, size = 0x1000, scoped, tag = 'scratch operand']
  #allocation5 [shape = 'f32[8,32]{1,0:T(8,128)}', space=vmem, size = 0x1000, scoped, tag = 'scratch operand']
  %s0 = inlined_call_operand.vmem [shape: f32[8,8,128], index: 0, kind: input, shape index: {}]
  %s1 = inlined_call_operand.vmem [shape: f32[8,8,128], index: 1, kind: input, shape index: {}]
  %s2 = inlined_call_operand.vmem [shape: f32[32,128], index: 2, kind: input, shape index: {}]
  %s3 = inlined_call_operand.vmem [shape: f32[32,128], index: 3, kind: input, shape index: {}]
  %s4 = inlined_call_operand.vmem [shape: f32[2,8,32], index: 4, kind: input, shape index: {}]
  %s5 = inlined_call_operand.vmem [shape: f32[2,8,32], index: 5, kind: input, shape index: {}]
  %s6 = inlined_call_operand.vmem [shape: f32[8,8,32], index: 6, kind: output, shape index: {0}]
  %s7 = inlined_call_operand.vmem [shape: f32[8,8,32], index: 7, kind: output, shape index: {1}]
  %s8 = inlined_call_operand.vmem [shape: f32[2,8,32], index: 8, kind: output, shape index: {2}]
  %s9 = inlined_call_operand.vmem [shape: f32[2,8,32], index: 9, kind: output, shape index: {3}]
  %10 = xla_tuple %s6, %s7, %s8, %s9
  %s11 = sld [smem:[#allocation0]]
  $region62: #{encoder_lstm_forward.1} parent=0
    _
  %s13 = ssub.s32 1, %s11
  %s14 = scalar_select 0, %s13, %s11
  // Predicated region
  $region2: #{encoder_lstm_forward.1} parent=0 // pred_check
    _
  $region3: #{encoder_lstm_forward.1} parent=0 // pred_check_branch
    %16 = sbr.rel (0) target = $region5
  $region4: #{encoder_lstm_forward.1} parent=0 // pred_region
    _
  $region5: #{encoder_lstm_forward.1} parent=0 // pred_fallthru
    _
  // Predicated region
  $region6: #{encoder_lstm_forward.1} parent=0 // pred_check
    _
  $region7: #{encoder_lstm_forward.1} parent=0 // pred_check_branch
    %18 = sbr.rel (0) target = $region9
  $region8: #{encoder_lstm_forward.1} parent=0 // pred_region
    %s19 = ssub.s32 0, 0
    %s20 = smul.u32 8, %s19
    %p21 = scmp.lt.s32.totalorder %s20, 7
    %s22 = scalar_select %p21, %s20, 7
    %s23 = smul.addr %s22, 8
    %s24 = scalar_lea.vmem %s1, %s23
    %s25 = ssub.s32 0, 0
    %s26 = smul.u32 8, %s25
  $region9: #{encoder_lstm_forward.1} parent=0 // pred_fallthru
    _
  // Predicated region
  $region10: #{encoder_lstm_forward.1} parent=0 // pred_check
    _
  $region11: #{encoder_lstm_forward.1} parent=0 // pred_check_branch
    %28 = sbr.rel (0) target = $region13
  $region12: #{encoder_lstm_forward.1} parent=0 // pred_region
    _
  $region13: #{encoder_lstm_forward.1} parent=0 // pred_fallthru
    _
  // Predicated region
  $region14: #{encoder_lstm_forward.1} parent=0 // pred_check
    _
  $region15: #{encoder_lstm_forward.1} parent=0 // pred_check_branch
    %30 = sbr.rel (0) target = $region17
  $region16: #{encoder_lstm_forward.1} parent=0 // pred_region
    _
  $region17: #{encoder_lstm_forward.1} parent=0 // pred_fallthru
    _
  // Predicated region
  $region18: #{encoder_lstm_forward.1} parent=0 // pred_check
    _
  $region19: #{encoder_lstm_forward.1} parent=0 // pred_check_branch
    %32 = sbr.rel (0) target = $region21
  $region20: #{encoder_lstm_forward.1} parent=0 // pred_region
    _
  $region21: #{encoder_lstm_forward.1} parent=0 // pred_fallthru
    _
  // Predicated region
  $region22: #{encoder_lstm_forward.1} parent=0 // pred_check
    _
  $region23: #{encoder_lstm_forward.1} parent=0 // pred_check_branch
    %34 = sbr.rel (0) target = $region25
  $region24: #{encoder_lstm_forward.1} parent=0 // pred_region
    _
  $region25: #{encoder_lstm_forward.1} parent=0 // pred_fallthru
    _
  %s35 = ssub.s32 0, 0
  %s36 = smul.u32 8, %s35
  %p37 = scmp.lt.s32.totalorder %s36, 7
  %s38 = scalar_select %p37, %s36, 7
  %s39 = smul.addr %s38, 8
  %s40 = scalar_lea.vmem %s1, %s39
  %s41 = ssub.s32 0, 0
  %s42 = smul.u32 8, %s41
  %p43 = scmp.lt.s32.totalorder %s42, 7
  %s44 = scalar_select %p43, %s42, 7
  %s45 = smul.addr %s44, 8
  %s46 = scalar_lea.vmem %s7, %s45
  %s47 = ssub.s32 0, 0
  %s48 = smul.u32 8, %s47
  %p49 = scmp.lt.s32.totalorder %s48, 7
  %s50 = scalar_select %p49, %s48, 7
  %s51 = smul.addr %s50, 8
  %s52 = scalar_lea.vmem %s1, %s51
  %s53 = ssub.s32 0, 0
  %s54 = smul.u32 8, %s53
  %s55 = ssub.s32 0, 0
  %s56 = smul.u32 8, %s55
  %p57 = scmp.lt.s32.totalorder %s56, 7
  %s58 = scalar_select %p57, %s56, 7
  %s59 = smul.addr %s58, 8
  %s60 = scalar_lea.vmem %s7, %s59
  %s61 = ssub.s32 0, 0
  %s62 = smul.u32 8, %s61
  %p63 = scmp.eq.s32.totalorder 0, 0
  // Predicated region
  $region26: #{encoder_lstm_forward.1} parent=0 // pred_check
    %p64 = pneg %p63
  $region27: #{encoder_lstm_forward.1} parent=0 // pred_check_branch
    %66 = sbr.rel (%p64) target = $region29
  $region28: #{encoder_lstm_forward.1} parent=0 // pred_region
    %v67 = vld [vmem:[%s4] sm:$0xff]
    %vm68 = vcmask 261120
    %69 = vst.msk [vmem:[#allocation2] sm:$0xff] %vm68, %v67
    %v70 = vld [vmem:[%s5] sm:$0xff]
    %71 = vst.msk [vmem:[#allocation3] sm:$0xff] %vm68, %v70
    %s72 = scalar_lea.vmem %s4, 8
    %v73 = vld [vmem:[%s72] sm:$0xff]
    %74 = vst.msk [vmem:[#allocation4] sm:$0xff] %vm68, %v73
    %s75 = scalar_lea.vmem %s5, 8
    %v76 = vld [vmem:[%s75] sm:$0xff]
    %77 = vst.msk [vmem:[#allocation5] sm:$0xff] %vm68, %v76
  $region29: #{encoder_lstm_forward.1} parent=0 // pred_fallthru
    _
  %v78 = vld [vmem:[%s2] sm:$0xff]
  %v79 = vld [vmem:[%s2 + $0x8] sm:$0xff]
  %v80 = vld [vmem:[%s2 + $0x10] sm:$0xff]
  %v81 = vld [vmem:[%s2 + $0x18] sm:$0xff]
  %v82 = vld [vmem:[%s3] sm:$0xff]
  %v83 = vld [vmem:[%s3 + $0x8] sm:$0xff]
  %v84 = vld [vmem:[%s3 + $0x10] sm:$0xff]
  %v85 = vld [vmem:[%s3 + $0x18] sm:$0xff]
  %v86 = vld [vmem:[#allocation2] sm:$0xff]
  %v87 = vld [vmem:[#allocation3] sm:$0xff]
  %v88 = vld [vmem:[#allocation4] sm:$0xff]
  %v89 = vld [vmem:[#allocation5] sm:$0xff]
  %v90 = vld [vmem:[%s0] sm:$0xff]
  %vm91 = vcmask 261120
  %v93 = vsel %vm91, %v86, 0
  %95 = vmatprep.subr.mxu0 0.0
  %96 = vmatpush1.msra.mxu0 0.0
  %97 = vmatprep.subr.mxu0 0.0
  %98 = vmatpush1.msra.mxu0 0.0
  %99 = vmatprep.subr.mxu0 0.0
  %100 = vmatpush1.msra.mxu0 0.0
  %101 = vmatprep.subr.mxu0 0.0
  %102 = vmatpush1.msra.mxu0 0.0
  %103 = vmatprep.subr.mxu0 0.0
  %104 = vmatpush1.msra.mxu0 0.0
  %105 = vmatprep.subr.mxu0 0.0
  %106 = vmatpush1.msra.mxu0 0.0
  %107 = vmatprep.subr.mxu0 0.0
  %108 = vmatpush1.msra.mxu0 0.0
  %109 = vmatprep.subr.mxu0 0.0
  %110 = vmatpush1.msra.mxu0 0.0
  %111 = vmatprep.subr.mxu0 0.0
  %112 = vmatpush1.msra.mxu0 0.0
  %113 = vmatprep.subr.mxu0 0.0
  %114 = vmatpush1.msra.mxu0 0.0
  %115 = vmatprep.subr.mxu0 0.0
  %116 = vmatpush1.msra.mxu0 0.0
  %117 = vmatprep.subr.mxu0 0.0
  %118 = vmatpush1.msra.mxu0 0.0
  %119 = vmatprep.subr.mxu0 0.0
  %120 = vmatpush1.msra.mxu0 %v81
  %121 = vmatprep.subr.mxu0 0.0
  %122 = vmatpush1.msra.mxu0 %v80
  %123 = vmatprep.subr.mxu0 0.0
  %124 = vmatpush1.msra.mxu0 %v79
  %125 = vmatprep.subr.mxu0 0.0
  %126 = vmatpush1.msra.mxu0 %v78
  %127 = vmatprep.subr.mxu0 0.0
  %128 = vmatpush2.msra.mxu0 0.0
  %129 = vmatprep.subr.mxu0 0.0
  %130 = vmatpush2.msra.mxu0 0.0
  %131 = vmatprep.subr.mxu0 0.0
  %132 = vmatpush2.msra.mxu0 0.0
  %133 = vmatprep.subr.mxu0 0.0
  %134 = vmatpush2.msra.mxu0 0.0
  %135 = vmatprep.subr.mxu0 0.0
  %136 = vmatpush2.msra.mxu0 0.0
  %137 = vmatprep.subr.mxu0 0.0
  %138 = vmatpush2.msra.mxu0 0.0
  %139 = vmatprep.subr.mxu0 0.0
  %140 = vmatpush2.msra.mxu0 0.0
  %141 = vmatprep.subr.mxu0 0.0
  %142 = vmatpush2.msra.mxu0 0.0
  %143 = vmatprep.subr.mxu0 0.0
  %144 = vmatpush2.msra.mxu0 0.0
  %145 = vmatprep.subr.mxu0 0.0
  %146 = vmatpush2.msra.mxu0 0.0
  %147 = vmatprep.subr.mxu0 0.0
  %148 = vmatpush2.msra.mxu0 0.0
  %149 = vmatprep.subr.mxu0 0.0
  %150 = vmatpush2.msra.mxu0 0.0
  %151 = vmatprep.subr.mxu0 0.0
  %152 = vmatpush2.msra.mxu0 0.0
  %153 = vmatprep.subr.mxu0 0.0
  %154 = vmatpush2.msra.mxu0 0.0
  %155 = vmatprep.subr.mxu0 0.0
  %156 = vmatpush2.msra.mxu0 0.0
  %157 = vmatprep.subr.mxu0 0.0
  %158 = vmatpush2.msra.mxu0 0.0
  %159 = vmatprep.mubr.f32.mxu0 0.0
  %160 = vmatmul.mubr.f32.gmra.mxu0 %v93
  %v161 = vpop.f32.mrf.mxu0
  %v162 = vadd.f32 0.0, %v161
  %v163 = vpop.f32.mrf.mxu0
  %164 = vdwg.mxu0
  %v165 = vadd.f32 %v90, %v162
  %s166 = scalar_lea.vmem %s52, 56
  %v167 = vld [vmem:[%s166] sm:$0xff]
  %v169 = vsel %vm91, %v88, 0
  %171 = vmatprep.subr.mxu0 0.0
  %172 = vmatpush1.msra.mxu0 0.0
  %173 = vmatprep.subr.mxu0 0.0
  %174 = vmatpush1.msra.mxu0 0.0
  %175 = vmatprep.subr.mxu0 0.0
  %176 = vmatpush1.msra.mxu0 0.0
  %177 = vmatprep.subr.mxu0 0.0
  %178 = vmatpush1.msra.mxu0 0.0
  %179 = vmatprep.subr.mxu0 0.0
  %180 = vmatpush1.msra.mxu0 0.0
  %181 = vmatprep.subr.mxu0 0.0
  %182 = vmatpush1.msra.mxu0 0.0
  %183 = vmatprep.subr.mxu0 0.0
  %184 = vmatpush1.msra.mxu0 0.0
  %185 = vmatprep.subr.mxu0 0.0
  %186 = vmatpush1.msra.mxu0 0.0
  %187 = vmatprep.subr.mxu0 0.0
  %188 = vmatpush1.msra.mxu0 0.0
  %189 = vmatprep.subr.mxu0 0.0
  %190 = vmatpush1.msra.mxu0 0.0
  %191 = vmatprep.subr.mxu0 0.0
  %192 = vmatpush1.msra.mxu0 0.0
  %193 = vmatprep.subr.mxu0 0.0
  %194 = vmatpush1.msra.mxu0 0.0
  %195 = vmatprep.subr.mxu0 0.0
  %196 = vmatpush1.msra.mxu0 %v85
  %197 = vmatprep.subr.mxu0 0.0
  %198 = vmatpush1.msra.mxu0 %v84
  %199 = vmatprep.subr.mxu0 0.0
  %200 = vmatpush1.msra.mxu0 %v83
  %201 = vmatprep.subr.mxu0 0.0
  %202 = vmatpush1.msra.mxu0 %v82
  %203 = vmatprep.subr.mxu0 0.0
  %204 = vmatpush2.msra.mxu0 0.0
  %205 = vmatprep.subr.mxu0 0.0
  %206 = vmatpush2.msra.mxu0 0.0
  %207 = vmatprep.subr.mxu0 0.0
  %208 = vmatpush2.msra.mxu0 0.0
  %209 = vmatprep.subr.mxu0 0.0
  %210 = vmatpush2.msra.mxu0 0.0
  %211 = vmatprep.subr.mxu0 0.0
  %212 = vmatpush2.msra.mxu0 0.0
  %213 = vmatprep.subr.mxu0 0.0
  %214 = vmatpush2.msra.mxu0 0.0
  %215 = vmatprep.subr.mxu0 0.0
  %216 = vmatpush2.msra.mxu0 0.0
  %217 = vmatprep.subr.mxu0 0.0
  %218 = vmatpush2.msra.mxu0 0.0
  %219 = vmatprep.subr.mxu0 0.0
  %220 = vmatpush2.msra.mxu0 0.0
  %221 = vmatprep.subr.mxu0 0.0
  %222 = vmatpush2.msra.mxu0 0.0
  %223 = vmatprep.subr.mxu0 0.0
  %224 = vmatpush2.msra.mxu0 0.0
  %225 = vmatprep.subr.mxu0 0.0
  %226 = vmatpush2.msra.mxu0 0.0
  %227 = vmatprep.subr.mxu0 0.0
  %228 = vmatpush2.msra.mxu0 0.0
  %229 = vmatprep.subr.mxu0 0.0
  %230 = vmatpush2.msra.mxu0 0.0
  %231 = vmatprep.subr.mxu0 0.0
  %232 = vmatpush2.msra.mxu0 0.0
  %233 = vmatprep.subr.mxu0 0.0
  %234 = vmatpush2.msra.mxu0 0.0
  %235 = vmatprep.mubr.f32.mxu0 0.0
  %236 = vmatmul.mubr.f32.gmra.mxu0 %v169
  %v237 = vpop.f32.mrf.mxu0
  %v238 = vadd.f32 0.0, %v237
  %v239 = vpop.f32.mrf.mxu0
  %240 = vdwg.mxu0
  %v241 = vadd.f32 %v167, %v238
  %v242 = vmul.f32 %v165, 0.5
  %v243 = vtanh.pop %v242
  %v244 = vmul.f32 %v243, 0.5
  %v245 = vadd.f32 %v244, 0.5
  %v246 = vtanh.pop %v165
  %v247 = vmul.f32 %v241, 0.5
  %v248 = vtanh.pop %v247
  %v249 = vmul.f32 %v248, 0.5
  %v250 = vadd.f32 %v249, 0.5
  %v251 = vtanh.pop %v241
  %253 = vrot.lane.b32.xlu0 %v87, 32
  %v254 = vpop.permute.xlu0 %253
  %v256 = vmul.f32 %v245, %v254
  %258 = vrot.lane.b32.xlu0 %v246, 64
  %v259 = vpop.permute.xlu0 %258
  %v261 = vmul.f32 %v245, %v259
  %263 = vrot.lane.b32.xlu0 %v261, 32
  %v264 = vpop.permute.xlu0 %263
  %v266 = vadd.f32 %v256, %v264
  %v267 = vtanh.pop %v266
  %269 = vrot.lane.b32.xlu0 %v267, 64
  %v270 = vpop.permute.xlu0 %269
  %v272 = vmul.f32 %v245, %v270
  %274 = vrot.lane.b32.xlu0 %v89, 32
  %v275 = vpop.permute.xlu0 %274
  %v277 = vmul.f32 %v250, %v275
  %279 = vrot.lane.b32.xlu0 %v251, 64
  %v280 = vpop.permute.xlu0 %279
  %v282 = vmul.f32 %v250, %v280
  %284 = vrot.lane.b32.xlu0 %v282, 32
  %v285 = vpop.permute.xlu0 %284
  %v287 = vadd.f32 %v277, %v285
  %v288 = vtanh.pop %v287
  %290 = vrot.lane.b32.xlu0 %v288, 64
  %v291 = vpop.permute.xlu0 %290
  %v293 = vmul.f32 %v250, %v291
  %295 = vrot.lane.b32.xlu0 %v272, 32
  %v296 = vpop.permute.xlu0 %295
  %298 = vst.msk [vmem:[%s6] sm:$0xff] %vm91, %v296
  %300 = vrot.lane.b32.xlu0 %v293, 32
  %v301 = vpop.permute.xlu0 %300
  %s303 = scalar_lea.vmem %s60, 56
  %304 = vst.msk [vmem:[%s303] sm:$0xff] %vm91, %v301
  %s305 = scalar_lea.vmem %s0, 8
  %v306 = vld [vmem:[%s305] sm:$0xff]
  %v307 = vsel %vm91, %v296, 0
  %309 = vmatprep.subr.mxu0 0.0
  %310 = vmatpush1.msra.mxu0 0.0
  %311 = vmatprep.subr.mxu0 0.0
  %312 = vmatpush1.msra.mxu0 0.0
  %313 = vmatprep.subr.mxu0 0.0
  %314 = vmatpush1.msra.mxu0 0.0
  %315 = vmatprep.subr.mxu0 0.0
  %316 = vmatpush1.msra.mxu0 0.0
  %317 = vmatprep.subr.mxu0 0.0
  %318 = vmatpush1.msra.mxu0 0.0
  %319 = vmatprep.subr.mxu0 0.0
  %320 = vmatpush1.msra.mxu0 0.0
  %321 = vmatprep.subr.mxu0 0.0
  %322 = vmatpush1.msra.mxu0 0.0
  %323 = vmatprep.subr.mxu0 0.0
  %324 = vmatpush1.msra.mxu0 0.0
  %325 = vmatprep.subr.mxu0 0.0
  %326 = vmatpush1.msra.mxu0 0.0
  %327 = vmatprep.subr.mxu0 0.0
  %328 = vmatpush1.msra.mxu0 0.0
  %329 = vmatprep.subr.mxu0 0.0
  %330 = vmatpush1.msra.mxu0 0.0
  %331 = vmatprep.subr.mxu0 0.0
  %332 = vmatpush1.msra.mxu0 0.0
  %333 = vmatprep.subr.mxu0 0.0
  %334 = vmatpush1.msra.mxu0 %v81
  %335 = vmatprep.subr.mxu0 0.0
  %336 = vmatpush1.msra.mxu0 %v80
  %337 = vmatprep.subr.mxu0 0.0
  %338 = vmatpush1.msra.mxu0 %v79
  %339 = vmatprep.subr.mxu0 0.0
  %340 = vmatpush1.msra.mxu0 %v78
  %341 = vmatprep.subr.mxu0 0.0
  %342 = vmatpush2.msra.mxu0 0.0
  %343 = vmatprep.subr.mxu0 0.0
  %344 = vmatpush2.msra.mxu0 0.0
  %345 = vmatprep.subr.mxu0 0.0
  %346 = vmatpush2.msra.mxu0 0.0
  %347 = vmatprep.subr.mxu0 0.0
  %348 = vmatpush2.msra.mxu0 0.0
  %349 = vmatprep.subr.mxu0 0.0
  %350 = vmatpush2.msra.mxu0 0.0
  %351 = vmatprep.subr.mxu0 0.0
  %352 = vmatpush2.msra.mxu0 0.0
  %353 = vmatprep.subr.mxu0 0.0
  %354 = vmatpush2.msra.mxu0 0.0
  %355 = vmatprep.subr.mxu0 0.0
  %356 = vmatpush2.msra.mxu0 0.0
  %357 = vmatprep.subr.mxu0 0.0
  %358 = vmatpush2.msra.mxu0 0.0
  %359 = vmatprep.subr.mxu0 0.0
  %360 = vmatpush2.msra.mxu0 0.0
  %361 = vmatprep.subr.mxu0 0.0
  %362 = vmatpush2.msra.mxu0 0.0
  %363 = vmatprep.subr.mxu0 0.0
  %364 = vmatpush2.msra.mxu0 0.0
  %365 = vmatprep.subr.mxu0 0.0
  %366 = vmatpush2.msra.mxu0 0.0
  %367 = vmatprep.subr.mxu0 0.0
  %368 = vmatpush2.msra.mxu0 0.0
  %369 = vmatprep.subr.mxu0 0.0
  %370 = vmatpush2.msra.mxu0 0.0
  %371 = vmatprep.subr.mxu0 0.0
  %372 = vmatpush2.msra.mxu0 0.0
  %373 = vmatprep.mubr.f32.mxu0 0.0
  %374 = vmatmul.mubr.f32.gmra.mxu0 %v307
  %v375 = vpop.f32.mrf.mxu0
  %v376 = vadd.f32 0.0, %v375
  %v377 = vpop.f32.mrf.mxu0
  %378 = vdwg.mxu0
  %v379 = vadd.f32 %v306, %v376
  %s380 = scalar_lea.vmem %s52, 48
  %v381 = vld [vmem:[%s380] sm:$0xff]
  %v382 = vsel %vm91, %v301, 0
  %384 = vmatprep.subr.mxu0 0.0
  %385 = vmatpush1.msra.mxu0 0.0
  %386 = vmatprep.subr.mxu0 0.0
  %387 = vmatpush1.msra.mxu0 0.0
  %388 = vmatprep.subr.mxu0 0.0
  %389 = vmatpush1.msra.mxu0 0.0
  %390 = vmatprep.subr.mxu0 0.0
  %391 = vmatpush1.msra.mxu0 0.0
  %392 = vmatprep.subr.mxu0 0.0
  %393 = vmatpush1.msra.mxu0 0.0
  %394 = vmatprep.subr.mxu0 0.0
  %395 = vmatpush1.msra.mxu0 0.0
  %396 = vmatprep.subr.mxu0 0.0
  %397 = vmatpush1.msra.mxu0 0.0
  %398 = vmatprep.subr.mxu0 0.0
  %399 = vmatpush1.msra.mxu0 0.0
  %400 = vmatprep.subr.mxu0 0.0
  %401 = vmatpush1.msra.mxu0 0.0
  %402 = vmatprep.subr.mxu0 0.0
  %403 = vmatpush1.msra.mxu0 0.0
  %404 = vmatprep.subr.mxu0 0.0
  %405 = vmatpush1.msra.mxu0 0.0
  %406 = vmatprep.subr.mxu0 0.0
  %407 = vmatpush1.msra.mxu0 0.0
  %408 = vmatprep.subr.mxu0 0.0
  %409 = vmatpush1.msra.mxu0 %v85
  %410 = vmatprep.subr.mxu0 0.0
  %411 = vmatpush1.msra.mxu0 %v84
  %412 = vmatprep.subr.mxu0 0.0
  %413 = vmatpush1.msra.mxu0 %v83
  %414 = vmatprep.subr.mxu0 0.0
  %415 = vmatpush1.msra.mxu0 %v82
  %416 = vmatprep.subr.mxu0 0.0
  %417 = vmatpush2.msra.mxu0 0.0
  %418 = vmatprep.subr.mxu0 0.0
  %419 = vmatpush2.msra.mxu0 0.0
  %420 = vmatprep.subr.mxu0 0.0
  %421 = vmatpush2.msra.mxu0 0.0
  %422 = vmatprep.subr.mxu0 0.0
  %423 = vmatpush2.msra.mxu0 0.0
  %424 = vmatprep.subr.mxu0 0.0
  %425 = vmatpush2.msra.mxu0 0.0
  %426 = vmatprep.subr.mxu0 0.0
  %427 = vmatpush2.msra.mxu0 0.0
  %428 = vmatprep.subr.mxu0 0.0
  %429 = vmatpush2.msra.mxu0 0.0
  %430 = vmatprep.subr.mxu0 0.0
  %431 = vmatpush2.msra.mxu0 0.0
  %432 = vmatprep.subr.mxu0 0.0
  %433 = vmatpush2.msra.mxu0 0.0
  %434 = vmatprep.subr.mxu0 0.0
  %435 = vmatpush2.msra.mxu0 0.0
  %436 = vmatprep.subr.mxu0 0.0
  %437 = vmatpush2.msra.mxu0 0.0
  %438 = vmatprep.subr.mxu0 0.0
  %439 = vmatpush2.msra.mxu0 0.0
  %440 = vmatprep.subr.mxu0 0.0
  %441 = vmatpush2.msra.mxu0 0.0
  %442 = vmatprep.subr.mxu0 0.0
  %443 = vmatpush2.msra.mxu0 0.0
  %444 = vmatprep.subr.mxu0 0.0
  %445 = vmatpush2.msra.mxu0 0.0
  %446 = vmatprep.subr.mxu0 0.0
  %447 = vmatpush2.msra.mxu0 0.0
  %448 = vmatprep.mubr.f32.mxu0 0.0
  %449 = vmatmul.mubr.f32.gmra.mxu0 %v382
  %v450 = vpop.f32.mrf.mxu0
  %v451 = vadd.f32 0.0, %v450
  %v452 = vpop.f32.mrf.mxu0
  %453 = vdwg.mxu0
  %v454 = vadd.f32 %v381, %v451
  %v455 = vmul.f32 %v379, 0.5
  %v456 = vtanh.pop %v455
  %v457 = vmul.f32 %v456, 0.5
  %v458 = vadd.f32 %v457, 0.5
  %v459 = vtanh.pop %v379
  %v460 = vmul.f32 %v454, 0.5
  %v461 = vtanh.pop %v460
  %v462 = vmul.f32 %v461, 0.5
  %v463 = vadd.f32 %v462, 0.5
  %v464 = vtanh.pop %v454
  %v465 = vmul.f32 %v458, %v266
  %467 = vrot.lane.b32.xlu0 %v459, 64
  %v468 = vpop.permute.xlu0 %467
  %v470 = vmul.f32 %v458, %v468
  %472 = vrot.lane.b32.xlu0 %v470, 32
  %v473 = vpop.permute.xlu0 %472
  %v475 = vadd.f32 %v465, %v473
  %v476 = vtanh.pop %v475
  %478 = vrot.lane.b32.xlu0 %v476, 64
  %v479 = vpop.permute.xlu0 %478
  %v481 = vmul.f32 %v458, %v479
  %v482 = vmul.f32 %v463, %v287
  %484 = vrot.lane.b32.xlu0 %v464, 64
  %v485 = vpop.permute.xlu0 %484
  %v487 = vmul.f32 %v463, %v485
  %489 = vrot.lane.b32.xlu0 %v487, 32
  %v490 = vpop.permute.xlu0 %489
  %v492 = vadd.f32 %v482, %v490
  %v493 = vtanh.pop %v492
  %495 = vrot.lane.b32.xlu0 %v493, 64
  %v496 = vpop.permute.xlu0 %495
  %v498 = vmul.f32 %v463, %v496
  %500 = vrot.lane.b32.xlu0 %v481, 32
  %v501 = vpop.permute.xlu0 %500
  %s503 = scalar_lea.vmem %s6, 8
  %504 = vst.msk [vmem:[%s503] sm:$0xff] %vm91, %v501
  %506 = vrot.lane.b32.xlu0 %v498, 32
  %v507 = vpop.permute.xlu0 %506
  %s509 = scalar_lea.vmem %s60, 48
  %510 = vst.msk [vmem:[%s509] sm:$0xff] %vm91, %v507
  %s511 = scalar_lea.vmem %s0, 16
  %v512 = vld [vmem:[%s511] sm:$0xff]
  %v513 = vsel %vm91, %v501, 0
  %515 = vmatprep.subr.mxu0 0.0
  %516 = vmatpush1.msra.mxu0 0.0
  %517 = vmatprep.subr.mxu0 0.0
  %518 = vmatpush1.msra.mxu0 0.0
  %519 = vmatprep.subr.mxu0 0.0
  %520 = vmatpush1.msra.mxu0 0.0
  %521 = vmatprep.subr.mxu0 0.0
  %522 = vmatpush1.msra.mxu0 0.0
  %523 = vmatprep.subr.mxu0 0.0
  %524 = vmatpush1.msra.mxu0 0.0
  %525 = vmatprep.subr.mxu0 0.0
  %526 = vmatpush1.msra.mxu0 0.0
  %527 = vmatprep.subr.mxu0 0.0
  %528 = vmatpush1.msra.mxu0 0.0
  %529 = vmatprep.subr.mxu0 0.0
  %530 = vmatpush1.msra.mxu0 0.0
  %531 = vmatprep.subr.mxu0 0.0
  %532 = vmatpush1.msra.mxu0 0.0
  %533 = vmatprep.subr.mxu0 0.0
  %534 = vmatpush1.msra.mxu0 0.0
  %535 = vmatprep.subr.mxu0 0.0
  %536 = vmatpush1.msra.mxu0 0.0
  %537 = vmatprep.subr.mxu0 0.0
  %538 = vmatpush1.msra.mxu0 0.0
  %539 = vmatprep.subr.mxu0 0.0
  %540 = vmatpush1.msra.mxu0 %v81
  %541 = vmatprep.subr.mxu0 0.0
  %542 = vmatpush1.msra.mxu0 %v80
  %543 = vmatprep.subr.mxu0 0.0
  %544 = vmatpush1.msra.mxu0 %v79
  %545 = vmatprep.subr.mxu0 0.0
  %546 = vmatpush1.msra.mxu0 %v78
  %547 = vmatprep.subr.mxu0 0.0
  %548 = vmatpush2.msra.mxu0 0.0
  %549 = vmatprep.subr.mxu0 0.0
  %550 = vmatpush2.msra.mxu0 0.0
  %551 = vmatprep.subr.mxu0 0.0
  %552 = vmatpush2.msra.mxu0 0.0
  %553 = vmatprep.subr.mxu0 0.0
  %554 = vmatpush2.msra.mxu0 0.0
  %555 = vmatprep.subr.mxu0 0.0
  %556 = vmatpush2.msra.mxu0 0.0
  %557 = vmatprep.subr.mxu0 0.0
  %558 = vmatpush2.msra.mxu0 0.0
  %559 = vmatprep.subr.mxu0 0.0
  %560 = vmatpush2.msra.mxu0 0.0
  %561 = vmatprep.subr.mxu0 0.0
  %562 = vmatpush2.msra.mxu0 0.0
  %563 = vmatprep.subr.mxu0 0.0
  %564 = vmatpush2.msra.mxu0 0.0
  %565 = vmatprep.subr.mxu0 0.0
  %566 = vmatpush2.msra.mxu0 0.0
  %567 = vmatprep.subr.mxu0 0.0
  %568 = vmatpush2.msra.mxu0 0.0
  %569 = vmatprep.subr.mxu0 0.0
  %570 = vmatpush2.msra.mxu0 0.0
  %571 = vmatprep.subr.mxu0 0.0
  %572 = vmatpush2.msra.mxu0 0.0
  %573 = vmatprep.subr.mxu0 0.0
  %574 = vmatpush2.msra.mxu0 0.0
  %575 = vmatprep.subr.mxu0 0.0
  %576 = vmatpush2.msra.mxu0 0.0
  %577 = vmatprep.subr.mxu0 0.0
  %578 = vmatpush2.msra.mxu0 0.0
  %579 = vmatprep.mubr.f32.mxu0 0.0
  %580 = vmatmul.mubr.f32.gmra.mxu0 %v513
  %v581 = vpop.f32.mrf.mxu0
  %v582 = vadd.f32 0.0, %v581
  %v583 = vpop.f32.mrf.mxu0
  %584 = vdwg.mxu0
  %v585 = vadd.f32 %v512, %v582
  %s586 = scalar_lea.vmem %s52, 40
  %v587 = vld [vmem:[%s586] sm:$0xff]
  %v588 = vsel %vm91, %v507, 0
  %590 = vmatprep.subr.mxu0 0.0
  %591 = vmatpush1.msra.mxu0 0.0
  %592 = vmatprep.subr.mxu0 0.0
  %593 = vmatpush1.msra.mxu0 0.0
  %594 = vmatprep.subr.mxu0 0.0
  %595 = vmatpush1.msra.mxu0 0.0
  %596 = vmatprep.subr.mxu0 0.0
  %597 = vmatpush1.msra.mxu0 0.0
  %598 = vmatprep.subr.mxu0 0.0
  %599 = vmatpush1.msra.mxu0 0.0
  %600 = vmatprep.subr.mxu0 0.0
  %601 = vmatpush1.msra.mxu0 0.0
  %602 = vmatprep.subr.mxu0 0.0
  %603 = vmatpush1.msra.mxu0 0.0
  %604 = vmatprep.subr.mxu0 0.0
  %605 = vmatpush1.msra.mxu0 0.0
  %606 = vmatprep.subr.mxu0 0.0
  %607 = vmatpush1.msra.mxu0 0.0
  %608 = vmatprep.subr.mxu0 0.0
  %609 = vmatpush1.msra.mxu0 0.0
  %610 = vmatprep.subr.mxu0 0.0
  %611 = vmatpush1.msra.mxu0 0.0
  %612 = vmatprep.subr.mxu0 0.0
  %613 = vmatpush1.msra.mxu0 0.0
  %614 = vmatprep.subr.mxu0 0.0
  %615 = vmatpush1.msra.mxu0 %v85
  %616 = vmatprep.subr.mxu0 0.0
  %617 = vmatpush1.msra.mxu0 %v84
  %618 = vmatprep.subr.mxu0 0.0
  %619 = vmatpush1.msra.mxu0 %v83
  %620 = vmatprep.subr.mxu0 0.0
  %621 = vmatpush1.msra.mxu0 %v82
  %622 = vmatprep.subr.mxu0 0.0
  %623 = vmatpush2.msra.mxu0 0.0
  %624 = vmatprep.subr.mxu0 0.0
  %625 = vmatpush2.msra.mxu0 0.0
  %626 = vmatprep.subr.mxu0 0.0
  %627 = vmatpush2.msra.mxu0 0.0
  %628 = vmatprep.subr.mxu0 0.0
  %629 = vmatpush2.msra.mxu0 0.0
  %630 = vmatprep.subr.mxu0 0.0
  %631 = vmatpush2.msra.mxu0 0.0
  %632 = vmatprep.subr.mxu0 0.0
  %633 = vmatpush2.msra.mxu0 0.0
  %634 = vmatprep.subr.mxu0 0.0
  %635 = vmatpush2.msra.mxu0 0.0
  %636 = vmatprep.subr.mxu0 0.0
  %637 = vmatpush2.msra.mxu0 0.0
  %638 = vmatprep.subr.mxu0 0.0
  %639 = vmatpush2.msra.mxu0 0.0
  %640 = vmatprep.subr.mxu0 0.0
  %641 = vmatpush2.msra.mxu0 0.0
  %642 = vmatprep.subr.mxu0 0.0
  %643 = vmatpush2.msra.mxu0 0.0
  %644 = vmatprep.subr.mxu0 0.0
  %645 = vmatpush2.msra.mxu0 0.0
  %646 = vmatprep.subr.mxu0 0.0
  %647 = vmatpush2.msra.mxu0 0.0
  %648 = vmatprep.subr.mxu0 0.0
  %649 = vmatpush2.msra.mxu0 0.0
  %650 = vmatprep.subr.mxu0 0.0
  %651 = vmatpush2.msra.mxu0 0.0
  %652 = vmatprep.subr.mxu0 0.0
  %653 = vmatpush2.msra.mxu0 0.0
  %654 = vmatprep.mubr.f32.mxu0 0.0
  %655 = vmatmul.mubr.f32.gmra.mxu0 %v588
  %v656 = vpop.f32.mrf.mxu0
  %v657 = vadd.f32 0.0, %v656
  %v658 = vpop.f32.mrf.mxu0
  %659 = vdwg.mxu0
  %v660 = vadd.f32 %v587, %v657
  %v661 = vmul.f32 %v585, 0.5
  %v662 = vtanh.pop %v661
  %v663 = vmul.f32 %v662, 0.5
  %v664 = vadd.f32 %v663, 0.5
  %v665 = vtanh.pop %v585
  %v666 = vmul.f32 %v660, 0.5
  %v667 = vtanh.pop %v666
  %v668 = vmul.f32 %v667, 0.5
  %v669 = vadd.f32 %v668, 0.5
  %v670 = vtanh.pop %v660
  %v671 = vmul.f32 %v664, %v475
  %673 = vrot.lane.b32.xlu0 %v665, 64
  %v674 = vpop.permute.xlu0 %673
  %v676 = vmul.f32 %v664, %v674
  %678 = vrot.lane.b32.xlu0 %v676, 32
  %v679 = vpop.permute.xlu0 %678
  %v681 = vadd.f32 %v671, %v679
  %v682 = vtanh.pop %v681
  %684 = vrot.lane.b32.xlu0 %v682, 64
  %v685 = vpop.permute.xlu0 %684
  %v687 = vmul.f32 %v664, %v685
  %v688 = vmul.f32 %v669, %v492
  %690 = vrot.lane.b32.xlu0 %v670, 64
  %v691 = vpop.permute.xlu0 %690
  %v693 = vmul.f32 %v669, %v691
  %695 = vrot.lane.b32.xlu0 %v693, 32
  %v696 = vpop.permute.xlu0 %695
  %v698 = vadd.f32 %v688, %v696
  %v699 = vtanh.pop %v698
  %701 = vrot.lane.b32.xlu0 %v699, 64
  %v702 = vpop.permute.xlu0 %701
  %v704 = vmul.f32 %v669, %v702
  %706 = vrot.lane.b32.xlu0 %v687, 32
  %v707 = vpop.permute.xlu0 %706
  %s709 = scalar_lea.vmem %s6, 16
  %710 = vst.msk [vmem:[%s709] sm:$0xff] %vm91, %v707
  %712 = vrot.lane.b32.xlu0 %v704, 32
  %v713 = vpop.permute.xlu0 %712
  %s715 = scalar_lea.vmem %s60, 40
  %716 = vst.msk [vmem:[%s715] sm:$0xff] %vm91, %v713
  %s717 = scalar_lea.vmem %s0, 24
  %v718 = vld [vmem:[%s717] sm:$0xff]
  %v719 = vsel %vm91, %v707, 0
  %721 = vmatprep.subr.mxu0 0.0
  %722 = vmatpush1.msra.mxu0 0.0
  %723 = vmatprep.subr.mxu0 0.0
  %724 = vmatpush1.msra.mxu0 0.0
  %725 = vmatprep.subr.mxu0 0.0
  %726 = vmatpush1.msra.mxu0 0.0
  %727 = vmatprep.subr.mxu0 0.0
  %728 = vmatpush1.msra.mxu0 0.0
  %729 = vmatprep.subr.mxu0 0.0
  %730 = vmatpush1.msra.mxu0 0.0
  %731 = vmatprep.subr.mxu0 0.0
  %732 = vmatpush1.msra.mxu0 0.0
  %733 = vmatprep.subr.mxu0 0.0
  %734 = vmatpush1.msra.mxu0 0.0
  %735 = vmatprep.subr.mxu0 0.0
  %736 = vmatpush1.msra.mxu0 0.0
  %737 = vmatprep.subr.mxu0 0.0
  %738 = vmatpush1.msra.mxu0 0.0
  %739 = vmatprep.subr.mxu0 0.0
  %740 = vmatpush1.msra.mxu0 0.0
  %741 = vmatprep.subr.mxu0 0.0
  %742 = vmatpush1.msra.mxu0 0.0
  %743 = vmatprep.subr.mxu0 0.0
  %744 = vmatpush1.msra.mxu0 0.0
  %745 = vmatprep.subr.mxu0 0.0
  %746 = vmatpush1.msra.mxu0 %v81
  %747 = vmatprep.subr.mxu0 0.0
  %748 = vmatpush1.msra.mxu0 %v80
  %749 = vmatprep.subr.mxu0 0.0
  %750 = vmatpush1.msra.mxu0 %v79
  %751 = vmatprep.subr.mxu0 0.0
  %752 = vmatpush1.msra.mxu0 %v78
  %753 = vmatprep.subr.mxu0 0.0
  %754 = vmatpush2.msra.mxu0 0.0
  %755 = vmatprep.subr.mxu0 0.0
  %756 = vmatpush2.msra.mxu0 0.0
  %757 = vmatprep.subr.mxu0 0.0
  %758 = vmatpush2.msra.mxu0 0.0
  %759 = vmatprep.subr.mxu0 0.0
  %760 = vmatpush2.msra.mxu0 0.0
  %761 = vmatprep.subr.mxu0 0.0
  %762 = vmatpush2.msra.mxu0 0.0
  %763 = vmatprep.subr.mxu0 0.0
  %764 = vmatpush2.msra.mxu0 0.0
  %765 = vmatprep.subr.mxu0 0.0
  %766 = vmatpush2.msra.mxu0 0.0
  %767 = vmatprep.subr.mxu0 0.0
  %768 = vmatpush2.msra.mxu0 0.0
  %769 = vmatprep.subr.mxu0 0.0
  %770 = vmatpush2.msra.mxu0 0.0
  %771 = vmatprep.subr.mxu0 0.0
  %772 = vmatpush2.msra.mxu0 0.0
  %773 = vmatprep.subr.mxu0 0.0
  %774 = vmatpush2.msra.mxu0 0.0
  %775 = vmatprep.subr.mxu0 0.0
  %776 = vmatpush2.msra.mxu0 0.0
  %777 = vmatprep.subr.mxu0 0.0
  %778 = vmatpush2.msra.mxu0 0.0
  %779 = vmatprep.subr.mxu0 0.0
  %780 = vmatpush2.msra.mxu0 0.0
  %781 = vmatprep.subr.mxu0 0.0
  %782 = vmatpush2.msra.mxu0 0.0
  %783 = vmatprep.subr.mxu0 0.0
  %784 = vmatpush2.msra.mxu0 0.0
  %785 = vmatprep.mubr.f32.mxu0 0.0
  %786 = vmatmul.mubr.f32.gmra.mxu0 %v719
  %v787 = vpop.f32.mrf.mxu0
  %v788 = vadd.f32 0.0, %v787
  %v789 = vpop.f32.mrf.mxu0
  %790 = vdwg.mxu0
  %v791 = vadd.f32 %v718, %v788
  %s792 = scalar_lea.vmem %s52, 32
  %v793 = vld [vmem:[%s792] sm:$0xff]
  %v794 = vsel %vm91, %v713, 0
  %796 = vmatprep.subr.mxu0 0.0
  %797 = vmatpush1.msra.mxu0 0.0
  %798 = vmatprep.subr.mxu0 0.0
  %799 = vmatpush1.msra.mxu0 0.0
  %800 = vmatprep.subr.mxu0 0.0
  %801 = vmatpush1.msra.mxu0 0.0
  %802 = vmatprep.subr.mxu0 0.0
  %803 = vmatpush1.msra.mxu0 0.0
  %804 = vmatprep.subr.mxu0 0.0
  %805 = vmatpush1.msra.mxu0 0.0
  %806 = vmatprep.subr.mxu0 0.0
  %807 = vmatpush1.msra.mxu0 0.0
  %808 = vmatprep.subr.mxu0 0.0
  %809 = vmatpush1.msra.mxu0 0.0
  %810 = vmatprep.subr.mxu0 0.0
  %811 = vmatpush1.msra.mxu0 0.0
  %812 = vmatprep.subr.mxu0 0.0
  %813 = vmatpush1.msra.mxu0 0.0
  %814 = vmatprep.subr.mxu0 0.0
  %815 = vmatpush1.msra.mxu0 0.0
  %816 = vmatprep.subr.mxu0 0.0
  %817 = vmatpush1.msra.mxu0 0.0
  %818 = vmatprep.subr.mxu0 0.0
  %819 = vmatpush1.msra.mxu0 0.0
  %820 = vmatprep.subr.mxu0 0.0
  %821 = vmatpush1.msra.mxu0 %v85
  %822 = vmatprep.subr.mxu0 0.0
  %823 = vmatpush1.msra.mxu0 %v84
  %824 = vmatprep.subr.mxu0 0.0
  %825 = vmatpush1.msra.mxu0 %v83
  %826 = vmatprep.subr.mxu0 0.0
  %827 = vmatpush1.msra.mxu0 %v82
  %828 = vmatprep.subr.mxu0 0.0
  %829 = vmatpush2.msra.mxu0 0.0
  %830 = vmatprep.subr.mxu0 0.0
  %831 = vmatpush2.msra.mxu0 0.0
  %832 = vmatprep.subr.mxu0 0.0
  %833 = vmatpush2.msra.mxu0 0.0
  %834 = vmatprep.subr.mxu0 0.0
  %835 = vmatpush2.msra.mxu0 0.0
  %836 = vmatprep.subr.mxu0 0.0
  %837 = vmatpush2.msra.mxu0 0.0
  %838 = vmatprep.subr.mxu0 0.0
  %839 = vmatpush2.msra.mxu0 0.0
  %840 = vmatprep.subr.mxu0 0.0
  %841 = vmatpush2.msra.mxu0 0.0
  %842 = vmatprep.subr.mxu0 0.0
  %843 = vmatpush2.msra.mxu0 0.0
  %844 = vmatprep.subr.mxu0 0.0
  %845 = vmatpush2.msra.mxu0 0.0
  %846 = vmatprep.subr.mxu0 0.0
  %847 = vmatpush2.msra.mxu0 0.0
  %848 = vmatprep.subr.mxu0 0.0
  %849 = vmatpush2.msra.mxu0 0.0
  %850 = vmatprep.subr.mxu0 0.0
  %851 = vmatpush2.msra.mxu0 0.0
  %852 = vmatprep.subr.mxu0 0.0
  %853 = vmatpush2.msra.mxu0 0.0
  %854 = vmatprep.subr.mxu0 0.0
  %855 = vmatpush2.msra.mxu0 0.0
  %856 = vmatprep.subr.mxu0 0.0
  %857 = vmatpush2.msra.mxu0 0.0
  %858 = vmatprep.subr.mxu0 0.0
  %859 = vmatpush2.msra.mxu0 0.0
  %860 = vmatprep.mubr.f32.mxu0 0.0
  %861 = vmatmul.mubr.f32.gmra.mxu0 %v794
  %v862 = vpop.f32.mrf.mxu0
  %v863 = vadd.f32 0.0, %v862
  %v864 = vpop.f32.mrf.mxu0
  %865 = vdwg.mxu0
  %v866 = vadd.f32 %v793, %v863
  %v867 = vmul.f32 %v791, 0.5
  %v868 = vtanh.pop %v867
  %v869 = vmul.f32 %v868, 0.5
  %v870 = vadd.f32 %v869, 0.5
  %v871 = vtanh.pop %v791
  %v872 = vmul.f32 %v866, 0.5
  %v873 = vtanh.pop %v872
  %v874 = vmul.f32 %v873, 0.5
  %v875 = vadd.f32 %v874, 0.5
  %v876 = vtanh.pop %v866
  %v877 = vmul.f32 %v870, %v681
  %879 = vrot.lane.b32.xlu0 %v871, 64
  %v880 = vpop.permute.xlu0 %879
  %v882 = vmul.f32 %v870, %v880
  %884 = vrot.lane.b32.xlu0 %v882, 32
  %v885 = vpop.permute.xlu0 %884
  %v887 = vadd.f32 %v877, %v885
  %v888 = vtanh.pop %v887
  %890 = vrot.lane.b32.xlu0 %v888, 64
  %v891 = vpop.permute.xlu0 %890
  %v893 = vmul.f32 %v870, %v891
  %v894 = vmul.f32 %v875, %v698
  %896 = vrot.lane.b32.xlu0 %v876, 64
  %v897 = vpop.permute.xlu0 %896
  %v899 = vmul.f32 %v875, %v897
  %901 = vrot.lane.b32.xlu0 %v899, 32
  %v902 = vpop.permute.xlu0 %901
  %v904 = vadd.f32 %v894, %v902
  %v905 = vtanh.pop %v904
  %907 = vrot.lane.b32.xlu0 %v905, 64
  %v908 = vpop.permute.xlu0 %907
  %v910 = vmul.f32 %v875, %v908
  %912 = vrot.lane.b32.xlu0 %v893, 32
  %v913 = vpop.permute.xlu0 %912
  %s915 = scalar_lea.vmem %s6, 24
  %916 = vst.msk [vmem:[%s915] sm:$0xff] %vm91, %v913
  %918 = vrot.lane.b32.xlu0 %v910, 32
  %v919 = vpop.permute.xlu0 %918
  %s921 = scalar_lea.vmem %s60, 32
  %922 = vst.msk [vmem:[%s921] sm:$0xff] %vm91, %v919
  %s923 = scalar_lea.vmem %s0, 32
  %v924 = vld [vmem:[%s923] sm:$0xff]
  %v925 = vsel %vm91, %v913, 0
  %927 = vmatprep.subr.mxu0 0.0
  %928 = vmatpush1.msra.mxu0 0.0
  %929 = vmatprep.subr.mxu0 0.0
  %930 = vmatpush1.msra.mxu0 0.0
  %931 = vmatprep.subr.mxu0 0.0
  %932 = vmatpush1.msra.mxu0 0.0
  %933 = vmatprep.subr.mxu0 0.0
  %934 = vmatpush1.msra.mxu0 0.0
  %935 = vmatprep.subr.mxu0 0.0
  %936 = vmatpush1.msra.mxu0 0.0
  %937 = vmatprep.subr.mxu0 0.0
  %938 = vmatpush1.msra.mxu0 0.0
  %939 = vmatprep.subr.mxu0 0.0
  %940 = vmatpush1.msra.mxu0 0.0
  %941 = vmatprep.subr.mxu0 0.0
  %942 = vmatpush1.msra.mxu0 0.0
  %943 = vmatprep.subr.mxu0 0.0
  %944 = vmatpush1.msra.mxu0 0.0
  %945 = vmatprep.subr.mxu0 0.0
  %946 = vmatpush1.msra.mxu0 0.0
  %947 = vmatprep.subr.mxu0 0.0
  %948 = vmatpush1.msra.mxu0 0.0
  %949 = vmatprep.subr.mxu0 0.0
  %950 = vmatpush1.msra.mxu0 0.0
  %951 = vmatprep.subr.mxu0 0.0
  %952 = vmatpush1.msra.mxu0 %v81
  %953 = vmatprep.subr.mxu0 0.0
  %954 = vmatpush1.msra.mxu0 %v80
  %955 = vmatprep.subr.mxu0 0.0
  %956 = vmatpush1.msra.mxu0 %v79
  %957 = vmatprep.subr.mxu0 0.0
  %958 = vmatpush1.msra.mxu0 %v78
  %959 = vmatprep.subr.mxu0 0.0
  %960 = vmatpush2.msra.mxu0 0.0
  %961 = vmatprep.subr.mxu0 0.0
  %962 = vmatpush2.msra.mxu0 0.0
  %963 = vmatprep.subr.mxu0 0.0
  %964 = vmatpush2.msra.mxu0 0.0
  %965 = vmatprep.subr.mxu0 0.0
  %966 = vmatpush2.msra.mxu0 0.0
  %967 = vmatprep.subr.mxu0 0.0
  %968 = vmatpush2.msra.mxu0 0.0
  %969 = vmatprep.subr.mxu0 0.0
  %970 = vmatpush2.msra.mxu0 0.0
  %971 = vmatprep.subr.mxu0 0.0
  %972 = vmatpush2.msra.mxu0 0.0
  %973 = vmatprep.subr.mxu0 0.0
  %974 = vmatpush2.msra.mxu0 0.0
  %975 = vmatprep.subr.mxu0 0.0
  %976 = vmatpush2.msra.mxu0 0.0
  %977 = vmatprep.subr.mxu0 0.0
  %978 = vmatpush2.msra.mxu0 0.0
  %979 = vmatprep.subr.mxu0 0.0
  %980 = vmatpush2.msra.mxu0 0.0
  %981 = vmatprep.subr.mxu0 0.0
  %982 = vmatpush2.msra.mxu0 0.0
  %983 = vmatprep.subr.mxu0 0.0
  %984 = vmatpush2.msra.mxu0 0.0
  %985 = vmatprep.subr.mxu0 0.0
  %986 = vmatpush2.msra.mxu0 0.0
  %987 = vmatprep.subr.mxu0 0.0
  %988 = vmatpush2.msra.mxu0 0.0
  %989 = vmatprep.subr.mxu0 0.0
  %990 = vmatpush2.msra.mxu0 0.0
  %991 = vmatprep.mubr.f32.mxu0 0.0
  %992 = vmatmul.mubr.f32.gmra.mxu0 %v925
  %v993 = vpop.f32.mrf.mxu0
  %v994 = vadd.f32 0.0, %v993
  %v995 = vpop.f32.mrf.mxu0
  %996 = vdwg.mxu0
  %v997 = vadd.f32 %v924, %v994
  %s998 = scalar_lea.vmem %s52, 24
  %v999 = vld [vmem:[%s998] sm:$0xff]
  %v1000 = vsel %vm91, %v919, 0
  %1002 = vmatprep.subr.mxu0 0.0
  %1003 = vmatpush1.msra.mxu0 0.0
  %1004 = vmatprep.subr.mxu0 0.0
  %1005 = vmatpush1.msra.mxu0 0.0
  %1006 = vmatprep.subr.mxu0 0.0
  %1007 = vmatpush1.msra.mxu0 0.0
  %1008 = vmatprep.subr.mxu0 0.0
  %1009 = vmatpush1.msra.mxu0 0.0
  %1010 = vmatprep.subr.mxu0 0.0
  %1011 = vmatpush1.msra.mxu0 0.0
  %1012 = vmatprep.subr.mxu0 0.0
  %1013 = vmatpush1.msra.mxu0 0.0
  %1014 = vmatprep.subr.mxu0 0.0
  %1015 = vmatpush1.msra.mxu0 0.0
  %1016 = vmatprep.subr.mxu0 0.0
  %1017 = vmatpush1.msra.mxu0 0.0
  %1018 = vmatprep.subr.mxu0 0.0
  %1019 = vmatpush1.msra.mxu0 0.0
  %1020 = vmatprep.subr.mxu0 0.0
  %1021 = vmatpush1.msra.mxu0 0.0
  %1022 = vmatprep.subr.mxu0 0.0
  %1023 = vmatpush1.msra.mxu0 0.0
  %1024 = vmatprep.subr.mxu0 0.0
  %1025 = vmatpush1.msra.mxu0 0.0
  %1026 = vmatprep.subr.mxu0 0.0
  %1027 = vmatpush1.msra.mxu0 %v85
  %1028 = vmatprep.subr.mxu0 0.0
  %1029 = vmatpush1.msra.mxu0 %v84
  %1030 = vmatprep.subr.mxu0 0.0
  %1031 = vmatpush1.msra.mxu0 %v83
  %1032 = vmatprep.subr.mxu0 0.0
  %1033 = vmatpush1.msra.mxu0 %v82
  %1034 = vmatprep.subr.mxu0 0.0
  %1035 = vmatpush2.msra.mxu0 0.0
  %1036 = vmatprep.subr.mxu0 0.0
  %1037 = vmatpush2.msra.mxu0 0.0
  %1038 = vmatprep.subr.mxu0 0.0
  %1039 = vmatpush2.msra.mxu0 0.0
  %1040 = vmatprep.subr.mxu0 0.0
  %1041 = vmatpush2.msra.mxu0 0.0
  %1042 = vmatprep.subr.mxu0 0.0
  %1043 = vmatpush2.msra.mxu0 0.0
  %1044 = vmatprep.subr.mxu0 0.0
  %1045 = vmatpush2.msra.mxu0 0.0
  %1046 = vmatprep.subr.mxu0 0.0
  %1047 = vmatpush2.msra.mxu0 0.0
  %1048 = vmatprep.subr.mxu0 0.0
  %1049 = vmatpush2.msra.mxu0 0.0
  %1050 = vmatprep.subr.mxu0 0.0
  %1051 = vmatpush2.msra.mxu0 0.0
  %1052 = vmatprep.subr.mxu0 0.0
  %1053 = vmatpush2.msra.mxu0 0.0
  %1054 = vmatprep.subr.mxu0 0.0
  %1055 = vmatpush2.msra.mxu0 0.0
  %1056 = vmatprep.subr.mxu0 0.0
  %1057 = vmatpush2.msra.mxu0 0.0
  %1058 = vmatprep.subr.mxu0 0.0
  %1059 = vmatpush2.msra.mxu0 0.0
  %1060 = vmatprep.subr.mxu0 0.0
  %1061 = vmatpush2.msra.mxu0 0.0
  %1062 = vmatprep.subr.mxu0 0.0
  %1063 = vmatpush2.msra.mxu0 0.0
  %1064 = vmatprep.subr.mxu0 0.0
  %1065 = vmatpush2.msra.mxu0 0.0
  %1066 = vmatprep.mubr.f32.mxu0 0.0
  %1067 = vmatmul.mubr.f32.gmra.mxu0 %v1000
  %v1068 = vpop.f32.mrf.mxu0
  %v1069 = vadd.f32 0.0, %v1068
  %v1070 = vpop.f32.mrf.mxu0
  %1071 = vdwg.mxu0
  %v1072 = vadd.f32 %v999, %v1069
  %v1073 = vmul.f32 %v997, 0.5
  %v1074 = vtanh.pop %v1073
  %v1075 = vmul.f32 %v1074, 0.5
  %v1076 = vadd.f32 %v1075, 0.5
  %v1077 = vtanh.pop %v997
  %v1078 = vmul.f32 %v1072, 0.5
  %v1079 = vtanh.pop %v1078
  %v1080 = vmul.f32 %v1079, 0.5
  %v1081 = vadd.f32 %v1080, 0.5
  %v1082 = vtanh.pop %v1072
  %v1083 = vmul.f32 %v1076, %v887
  %1085 = vrot.lane.b32.xlu0 %v1077, 64
  %v1086 = vpop.permute.xlu0 %1085
  %v1088 = vmul.f32 %v1076, %v1086
  %1090 = vrot.lane.b32.xlu0 %v1088, 32
  %v1091 = vpop.permute.xlu0 %1090
  %v1093 = vadd.f32 %v1083, %v1091
  %v1094 = vtanh.pop %v1093
  %1096 = vrot.lane.b32.xlu0 %v1094, 64
  %v1097 = vpop.permute.xlu0 %1096
  %v1099 = vmul.f32 %v1076, %v1097
  %v1100 = vmul.f32 %v1081, %v904
  %1102 = vrot.lane.b32.xlu0 %v1082, 64
  %v1103 = vpop.permute.xlu0 %1102
  %v1105 = vmul.f32 %v1081, %v1103
  %1107 = vrot.lane.b32.xlu0 %v1105, 32
  %v1108 = vpop.permute.xlu0 %1107
  %v1110 = vadd.f32 %v1100, %v1108
  %v1111 = vtanh.pop %v1110
  %1113 = vrot.lane.b32.xlu0 %v1111, 64
  %v1114 = vpop.permute.xlu0 %1113
  %v1116 = vmul.f32 %v1081, %v1114
  %1118 = vrot.lane.b32.xlu0 %v1099, 32
  %v1119 = vpop.permute.xlu0 %1118
  %s1121 = scalar_lea.vmem %s6, 32
  %1122 = vst.msk [vmem:[%s1121] sm:$0xff] %vm91, %v1119
  %1124 = vrot.lane.b32.xlu0 %v1116, 32
  %v1125 = vpop.permute.xlu0 %1124
  %s1127 = scalar_lea.vmem %s60, 24
  %1128 = vst.msk [vmem:[%s1127] sm:$0xff] %vm91, %v1125
  %s1129 = scalar_lea.vmem %s0, 40
  %v1130 = vld [vmem:[%s1129] sm:$0xff]
  %v1131 = vsel %vm91, %v1119, 0
  %1133 = vmatprep.subr.mxu0 0.0
  %1134 = vmatpush1.msra.mxu0 0.0
  %1135 = vmatprep.subr.mxu0 0.0
  %1136 = vmatpush1.msra.mxu0 0.0
  %1137 = vmatprep.subr.mxu0 0.0
  %1138 = vmatpush1.msra.mxu0 0.0
  %1139 = vmatprep.subr.mxu0 0.0
  %1140 = vmatpush1.msra.mxu0 0.0
  %1141 = vmatprep.subr.mxu0 0.0
  %1142 = vmatpush1.msra.mxu0 0.0
  %1143 = vmatprep.subr.mxu0 0.0
  %1144 = vmatpush1.msra.mxu0 0.0
  %1145 = vmatprep.subr.mxu0 0.0
  %1146 = vmatpush1.msra.mxu0 0.0
  %1147 = vmatprep.subr.mxu0 0.0
  %1148 = vmatpush1.msra.mxu0 0.0
  %1149 = vmatprep.subr.mxu0 0.0
  %1150 = vmatpush1.msra.mxu0 0.0
  %1151 = vmatprep.subr.mxu0 0.0
  %1152 = vmatpush1.msra.mxu0 0.0
  %1153 = vmatprep.subr.mxu0 0.0
  %1154 = vmatpush1.msra.mxu0 0.0
  %1155 = vmatprep.subr.mxu0 0.0
  %1156 = vmatpush1.msra.mxu0 0.0
  %1157 = vmatprep.subr.mxu0 0.0
  %1158 = vmatpush1.msra.mxu0 %v81
  %1159 = vmatprep.subr.mxu0 0.0
  %1160 = vmatpush1.msra.mxu0 %v80
  %1161 = vmatprep.subr.mxu0 0.0
  %1162 = vmatpush1.msra.mxu0 %v79
  %1163 = vmatprep.subr.mxu0 0.0
  %1164 = vmatpush1.msra.mxu0 %v78
  %1165 = vmatprep.subr.mxu0 0.0
  %1166 = vmatpush2.msra.mxu0 0.0
  %1167 = vmatprep.subr.mxu0 0.0
  %1168 = vmatpush2.msra.mxu0 0.0
  %1169 = vmatprep.subr.mxu0 0.0
  %1170 = vmatpush2.msra.mxu0 0.0
  %1171 = vmatprep.subr.mxu0 0.0
  %1172 = vmatpush2.msra.mxu0 0.0
  %1173 = vmatprep.subr.mxu0 0.0
  %1174 = vmatpush2.msra.mxu0 0.0
  %1175 = vmatprep.subr.mxu0 0.0
  %1176 = vmatpush2.msra.mxu0 0.0
  %1177 = vmatprep.subr.mxu0 0.0
  %1178 = vmatpush2.msra.mxu0 0.0
  %1179 = vmatprep.subr.mxu0 0.0
  %1180 = vmatpush2.msra.mxu0 0.0
  %1181 = vmatprep.subr.mxu0 0.0
  %1182 = vmatpush2.msra.mxu0 0.0
  %1183 = vmatprep.subr.mxu0 0.0
  %1184 = vmatpush2.msra.mxu0 0.0
  %1185 = vmatprep.subr.mxu0 0.0
  %1186 = vmatpush2.msra.mxu0 0.0
  %1187 = vmatprep.subr.mxu0 0.0
  %1188 = vmatpush2.msra.mxu0 0.0
  %1189 = vmatprep.subr.mxu0 0.0
  %1190 = vmatpush2.msra.mxu0 0.0
  %1191 = vmatprep.subr.mxu0 0.0
  %1192 = vmatpush2.msra.mxu0 0.0
  %1193 = vmatprep.subr.mxu0 0.0
  %1194 = vmatpush2.msra.mxu0 0.0
  %1195 = vmatprep.subr.mxu0 0.0
  %1196 = vmatpush2.msra.mxu0 0.0
  %1197 = vmatprep.mubr.f32.mxu0 0.0
  %1198 = vmatmul.mubr.f32.gmra.mxu0 %v1131
  %v1199 = vpop.f32.mrf.mxu0
  %v1200 = vadd.f32 0.0, %v1199
  %v1201 = vpop.f32.mrf.mxu0
  %1202 = vdwg.mxu0
  %v1203 = vadd.f32 %v1130, %v1200
  %s1204 = scalar_lea.vmem %s52, 16
  %v1205 = vld [vmem:[%s1204] sm:$0xff]
  %v1206 = vsel %vm91, %v1125, 0
  %1208 = vmatprep.subr.mxu0 0.0
  %1209 = vmatpush1.msra.mxu0 0.0
  %1210 = vmatprep.subr.mxu0 0.0
  %1211 = vmatpush1.msra.mxu0 0.0
  %1212 = vmatprep.subr.mxu0 0.0
  %1213 = vmatpush1.msra.mxu0 0.0
  %1214 = vmatprep.subr.mxu0 0.0
  %1215 = vmatpush1.msra.mxu0 0.0
  %1216 = vmatprep.subr.mxu0 0.0
  %1217 = vmatpush1.msra.mxu0 0.0
  %1218 = vmatprep.subr.mxu0 0.0
  %1219 = vmatpush1.msra.mxu0 0.0
  %1220 = vmatprep.subr.mxu0 0.0
  %1221 = vmatpush1.msra.mxu0 0.0
  %1222 = vmatprep.subr.mxu0 0.0
  %1223 = vmatpush1.msra.mxu0 0.0
  %1224 = vmatprep.subr.mxu0 0.0
  %1225 = vmatpush1.msra.mxu0 0.0
  %1226 = vmatprep.subr.mxu0 0.0
  %1227 = vmatpush1.msra.mxu0 0.0
  %1228 = vmatprep.subr.mxu0 0.0
  %1229 = vmatpush1.msra.mxu0 0.0
  %1230 = vmatprep.subr.mxu0 0.0
  %1231 = vmatpush1.msra.mxu0 0.0
  %1232 = vmatprep.subr.mxu0 0.0
  %1233 = vmatpush1.msra.mxu0 %v85
  %1234 = vmatprep.subr.mxu0 0.0
  %1235 = vmatpush1.msra.mxu0 %v84
  %1236 = vmatprep.subr.mxu0 0.0
  %1237 = vmatpush1.msra.mxu0 %v83
  %1238 = vmatprep.subr.mxu0 0.0
  %1239 = vmatpush1.msra.mxu0 %v82
  %1240 = vmatprep.subr.mxu0 0.0
  %1241 = vmatpush2.msra.mxu0 0.0
  %1242 = vmatprep.subr.mxu0 0.0
  %1243 = vmatpush2.msra.mxu0 0.0
  %1244 = vmatprep.subr.mxu0 0.0
  %1245 = vmatpush2.msra.mxu0 0.0
  %1246 = vmatprep.subr.mxu0 0.0
  %1247 = vmatpush2.msra.mxu0 0.0
  %1248 = vmatprep.subr.mxu0 0.0
  %1249 = vmatpush2.msra.mxu0 0.0
  %1250 = vmatprep.subr.mxu0 0.0
  %1251 = vmatpush2.msra.mxu0 0.0
  %1252 = vmatprep.subr.mxu0 0.0
  %1253 = vmatpush2.msra.mxu0 0.0
  %1254 = vmatprep.subr.mxu0 0.0
  %1255 = vmatpush2.msra.mxu0 0.0
  %1256 = vmatprep.subr.mxu0 0.0
  %1257 = vmatpush2.msra.mxu0 0.0
  %1258 = vmatprep.subr.mxu0 0.0
  %1259 = vmatpush2.msra.mxu0 0.0
  %1260 = vmatprep.subr.mxu0 0.0
  %1261 = vmatpush2.msra.mxu0 0.0
  %1262 = vmatprep.subr.mxu0 0.0
  %1263 = vmatpush2.msra.mxu0 0.0
  %1264 = vmatprep.subr.mxu0 0.0
  %1265 = vmatpush2.msra.mxu0 0.0
  %1266 = vmatprep.subr.mxu0 0.0
  %1267 = vmatpush2.msra.mxu0 0.0
  %1268 = vmatprep.subr.mxu0 0.0
  %1269 = vmatpush2.msra.mxu0 0.0
  %1270 = vmatprep.subr.mxu0 0.0
  %1271 = vmatpush2.msra.mxu0 0.0
  %1272 = vmatprep.mubr.f32.mxu0 0.0
  %1273 = vmatmul.mubr.f32.gmra.mxu0 %v1206
  %v1274 = vpop.f32.mrf.mxu0
  %v1275 = vadd.f32 0.0, %v1274
  %v1276 = vpop.f32.mrf.mxu0
  %1277 = vdwg.mxu0
  %v1278 = vadd.f32 %v1205, %v1275
  %v1279 = vmul.f32 %v1203, 0.5
  %v1280 = vtanh.pop %v1279
  %v1281 = vmul.f32 %v1280, 0.5
  %v1282 = vadd.f32 %v1281, 0.5
  %v1283 = vtanh.pop %v1203
  %v1284 = vmul.f32 %v1278, 0.5
  %v1285 = vtanh.pop %v1284
  %v1286 = vmul.f32 %v1285, 0.5
  %v1287 = vadd.f32 %v1286, 0.5
  %v1288 = vtanh.pop %v1278
  %v1289 = vmul.f32 %v1282, %v1093
  %1291 = vrot.lane.b32.xlu0 %v1283, 64
  %v1292 = vpop.permute.xlu0 %1291
  %v1294 = vmul.f32 %v1282, %v1292
  %1296 = vrot.lane.b32.xlu0 %v1294, 32
  %v1297 = vpop.permute.xlu0 %1296
  %v1299 = vadd.f32 %v1289, %v1297
  %v1300 = vtanh.pop %v1299
  %1302 = vrot.lane.b32.xlu0 %v1300, 64
  %v1303 = vpop.permute.xlu0 %1302
  %v1305 = vmul.f32 %v1282, %v1303
  %v1306 = vmul.f32 %v1287, %v1110
  %1308 = vrot.lane.b32.xlu0 %v1288, 64
  %v1309 = vpop.permute.xlu0 %1308
  %v1311 = vmul.f32 %v1287, %v1309
  %1313 = vrot.lane.b32.xlu0 %v1311, 32
  %v1314 = vpop.permute.xlu0 %1313
  %v1316 = vadd.f32 %v1306, %v1314
  %v1317 = vtanh.pop %v1316
  %1319 = vrot.lane.b32.xlu0 %v1317, 64
  %v1320 = vpop.permute.xlu0 %1319
  %v1322 = vmul.f32 %v1287, %v1320
  %1324 = vrot.lane.b32.xlu0 %v1305, 32
  %v1325 = vpop.permute.xlu0 %1324
  %s1327 = scalar_lea.vmem %s6, 40
  %1328 = vst.msk [vmem:[%s1327] sm:$0xff] %vm91, %v1325
  %1330 = vrot.lane.b32.xlu0 %v1322, 32
  %v1331 = vpop.permute.xlu0 %1330
  %s1333 = scalar_lea.vmem %s60, 16
  %1334 = vst.msk [vmem:[%s1333] sm:$0xff] %vm91, %v1331
  %s1335 = scalar_lea.vmem %s0, 48
  %v1336 = vld [vmem:[%s1335] sm:$0xff]
  %v1337 = vsel %vm91, %v1325, 0
  %1339 = vmatprep.subr.mxu0 0.0
  %1340 = vmatpush1.msra.mxu0 0.0
  %1341 = vmatprep.subr.mxu0 0.0
  %1342 = vmatpush1.msra.mxu0 0.0
  %1343 = vmatprep.subr.mxu0 0.0
  %1344 = vmatpush1.msra.mxu0 0.0
  %1345 = vmatprep.subr.mxu0 0.0
  %1346 = vmatpush1.msra.mxu0 0.0
  %1347 = vmatprep.subr.mxu0 0.0
  %1348 = vmatpush1.msra.mxu0 0.0
  %1349 = vmatprep.subr.mxu0 0.0
  %1350 = vmatpush1.msra.mxu0 0.0
  %1351 = vmatprep.subr.mxu0 0.0
  %1352 = vmatpush1.msra.mxu0 0.0
  %1353 = vmatprep.subr.mxu0 0.0
  %1354 = vmatpush1.msra.mxu0 0.0
  %1355 = vmatprep.subr.mxu0 0.0
  %1356 = vmatpush1.msra.mxu0 0.0
  %1357 = vmatprep.subr.mxu0 0.0
  %1358 = vmatpush1.msra.mxu0 0.0
  %1359 = vmatprep.subr.mxu0 0.0
  %1360 = vmatpush1.msra.mxu0 0.0
  %1361 = vmatprep.subr.mxu0 0.0
  %1362 = vmatpush1.msra.mxu0 0.0
  %1363 = vmatprep.subr.mxu0 0.0
  %1364 = vmatpush1.msra.mxu0 %v81
  %1365 = vmatprep.subr.mxu0 0.0
  %1366 = vmatpush1.msra.mxu0 %v80
  %1367 = vmatprep.subr.mxu0 0.0
  %1368 = vmatpush1.msra.mxu0 %v79
  %1369 = vmatprep.subr.mxu0 0.0
  %1370 = vmatpush1.msra.mxu0 %v78
  %1371 = vmatprep.subr.mxu0 0.0
  %1372 = vmatpush2.msra.mxu0 0.0
  %1373 = vmatprep.subr.mxu0 0.0
  %1374 = vmatpush2.msra.mxu0 0.0
  %1375 = vmatprep.subr.mxu0 0.0
  %1376 = vmatpush2.msra.mxu0 0.0
  %1377 = vmatprep.subr.mxu0 0.0
  %1378 = vmatpush2.msra.mxu0 0.0
  %1379 = vmatprep.subr.mxu0 0.0
  %1380 = vmatpush2.msra.mxu0 0.0
  %1381 = vmatprep.subr.mxu0 0.0
  %1382 = vmatpush2.msra.mxu0 0.0
  %1383 = vmatprep.subr.mxu0 0.0
  %1384 = vmatpush2.msra.mxu0 0.0
  %1385 = vmatprep.subr.mxu0 0.0
  %1386 = vmatpush2.msra.mxu0 0.0
  %1387 = vmatprep.subr.mxu0 0.0
  %1388 = vmatpush2.msra.mxu0 0.0
  %1389 = vmatprep.subr.mxu0 0.0
  %1390 = vmatpush2.msra.mxu0 0.0
  %1391 = vmatprep.subr.mxu0 0.0
  %1392 = vmatpush2.msra.mxu0 0.0
  %1393 = vmatprep.subr.mxu0 0.0
  %1394 = vmatpush2.msra.mxu0 0.0
  %1395 = vmatprep.subr.mxu0 0.0
  %1396 = vmatpush2.msra.mxu0 0.0
  %1397 = vmatprep.subr.mxu0 0.0
  %1398 = vmatpush2.msra.mxu0 0.0
  %1399 = vmatprep.subr.mxu0 0.0
  %1400 = vmatpush2.msra.mxu0 0.0
  %1401 = vmatprep.subr.mxu0 0.0
  %1402 = vmatpush2.msra.mxu0 0.0
  %1403 = vmatprep.mubr.f32.mxu0 0.0
  %1404 = vmatmul.mubr.f32.gmra.mxu0 %v1337
  %v1405 = vpop.f32.mrf.mxu0
  %v1406 = vadd.f32 0.0, %v1405
  %v1407 = vpop.f32.mrf.mxu0
  %1408 = vdwg.mxu0
  %v1409 = vadd.f32 %v1336, %v1406
  %s1410 = scalar_lea.vmem %s52, 8
  %v1411 = vld [vmem:[%s1410] sm:$0xff]
  %v1412 = vsel %vm91, %v1331, 0
  %1414 = vmatprep.subr.mxu0 0.0
  %1415 = vmatpush1.msra.mxu0 0.0
  %1416 = vmatprep.subr.mxu0 0.0
  %1417 = vmatpush1.msra.mxu0 0.0
  %1418 = vmatprep.subr.mxu0 0.0
  %1419 = vmatpush1.msra.mxu0 0.0
  %1420 = vmatprep.subr.mxu0 0.0
  %1421 = vmatpush1.msra.mxu0 0.0
  %1422 = vmatprep.subr.mxu0 0.0
  %1423 = vmatpush1.msra.mxu0 0.0
  %1424 = vmatprep.subr.mxu0 0.0
  %1425 = vmatpush1.msra.mxu0 0.0
  %1426 = vmatprep.subr.mxu0 0.0
  %1427 = vmatpush1.msra.mxu0 0.0
  %1428 = vmatprep.subr.mxu0 0.0
  %1429 = vmatpush1.msra.mxu0 0.0
  %1430 = vmatprep.subr.mxu0 0.0
  %1431 = vmatpush1.msra.mxu0 0.0
  %1432 = vmatprep.subr.mxu0 0.0
  %1433 = vmatpush1.msra.mxu0 0.0
  %1434 = vmatprep.subr.mxu0 0.0
  %1435 = vmatpush1.msra.mxu0 0.0
  %1436 = vmatprep.subr.mxu0 0.0
  %1437 = vmatpush1.msra.mxu0 0.0
  %1438 = vmatprep.subr.mxu0 0.0
  %1439 = vmatpush1.msra.mxu0 %v85
  %1440 = vmatprep.subr.mxu0 0.0
  %1441 = vmatpush1.msra.mxu0 %v84
  %1442 = vmatprep.subr.mxu0 0.0
  %1443 = vmatpush1.msra.mxu0 %v83
  %1444 = vmatprep.subr.mxu0 0.0
  %1445 = vmatpush1.msra.mxu0 %v82
  %1446 = vmatprep.subr.mxu0 0.0
  %1447 = vmatpush2.msra.mxu0 0.0
  %1448 = vmatprep.subr.mxu0 0.0
  %1449 = vmatpush2.msra.mxu0 0.0
  %1450 = vmatprep.subr.mxu0 0.0
  %1451 = vmatpush2.msra.mxu0 0.0
  %1452 = vmatprep.subr.mxu0 0.0
  %1453 = vmatpush2.msra.mxu0 0.0
  %1454 = vmatprep.subr.mxu0 0.0
  %1455 = vmatpush2.msra.mxu0 0.0
  %1456 = vmatprep.subr.mxu0 0.0
  %1457 = vmatpush2.msra.mxu0 0.0
  %1458 = vmatprep.subr.mxu0 0.0
  %1459 = vmatpush2.msra.mxu0 0.0
  %1460 = vmatprep.subr.mxu0 0.0
  %1461 = vmatpush2.msra.mxu0 0.0
  %1462 = vmatprep.subr.mxu0 0.0
  %1463 = vmatpush2.msra.mxu0 0.0
  %1464 = vmatprep.subr.mxu0 0.0
  %1465 = vmatpush2.msra.mxu0 0.0
  %1466 = vmatprep.subr.mxu0 0.0
  %1467 = vmatpush2.msra.mxu0 0.0
  %1468 = vmatprep.subr.mxu0 0.0
  %1469 = vmatpush2.msra.mxu0 0.0
  %1470 = vmatprep.subr.mxu0 0.0
  %1471 = vmatpush2.msra.mxu0 0.0
  %1472 = vmatprep.subr.mxu0 0.0
  %1473 = vmatpush2.msra.mxu0 0.0
  %1474 = vmatprep.subr.mxu0 0.0
  %1475 = vmatpush2.msra.mxu0 0.0
  %1476 = vmatprep.subr.mxu0 0.0
  %1477 = vmatpush2.msra.mxu0 0.0
  %1478 = vmatprep.mubr.f32.mxu0 0.0
  %1479 = vmatmul.mubr.f32.gmra.mxu0 %v1412
  %v1480 = vpop.f32.mrf.mxu0
  %v1481 = vadd.f32 0.0, %v1480
  %v1482 = vpop.f32.mrf.mxu0
  %1483 = vdwg.mxu0
  %v1484 = vadd.f32 %v1411, %v1481
  %v1485 = vmul.f32 %v1409, 0.5
  %v1486 = vtanh.pop %v1485
  %v1487 = vmul.f32 %v1486, 0.5
  %v1488 = vadd.f32 %v1487, 0.5
  %v1489 = vtanh.pop %v1409
  %v1490 = vmul.f32 %v1484, 0.5
  %v1491 = vtanh.pop %v1490
  %v1492 = vmul.f32 %v1491, 0.5
  %v1493 = vadd.f32 %v1492, 0.5
  %v1494 = vtanh.pop %v1484
  %v1495 = vmul.f32 %v1488, %v1299
  %1497 = vrot.lane.b32.xlu0 %v1489, 64
  %v1498 = vpop.permute.xlu0 %1497
  %v1500 = vmul.f32 %v1488, %v1498
  %1502 = vrot.lane.b32.xlu0 %v1500, 32
  %v1503 = vpop.permute.xlu0 %1502
  %v1505 = vadd.f32 %v1495, %v1503
  %v1506 = vtanh.pop %v1505
  %1508 = vrot.lane.b32.xlu0 %v1506, 64
  %v1509 = vpop.permute.xlu0 %1508
  %v1511 = vmul.f32 %v1488, %v1509
  %v1512 = vmul.f32 %v1493, %v1316
  %1514 = vrot.lane.b32.xlu0 %v1494, 64
  %v1515 = vpop.permute.xlu0 %1514
  %v1517 = vmul.f32 %v1493, %v1515
  %1519 = vrot.lane.b32.xlu0 %v1517, 32
  %v1520 = vpop.permute.xlu0 %1519
  %v1522 = vadd.f32 %v1512, %v1520
  %v1523 = vtanh.pop %v1522
  %1525 = vrot.lane.b32.xlu0 %v1523, 64
  %v1526 = vpop.permute.xlu0 %1525
  %v1528 = vmul.f32 %v1493, %v1526
  %1530 = vrot.lane.b32.xlu0 %v1511, 32
  %v1531 = vpop.permute.xlu0 %1530
  %s1533 = scalar_lea.vmem %s6, 48
  %1534 = vst.msk [vmem:[%s1533] sm:$0xff] %vm91, %v1531
  %1536 = vrot.lane.b32.xlu0 %v1528, 32
  %v1537 = vpop.permute.xlu0 %1536
  %s1539 = scalar_lea.vmem %s60, 8
  %1540 = vst.msk [vmem:[%s1539] sm:$0xff] %vm91, %v1537
  %s1541 = scalar_lea.vmem %s0, 56
  %v1542 = vld [vmem:[%s1541] sm:$0xff]
  %v1543 = vsel %vm91, %v1531, 0
  %1545 = vmatprep.subr.mxu0 0.0
  %1546 = vmatpush1.msra.mxu0 0.0
  %1547 = vmatprep.subr.mxu0 0.0
  %1548 = vmatpush1.msra.mxu0 0.0
  %1549 = vmatprep.subr.mxu0 0.0
  %1550 = vmatpush1.msra.mxu0 0.0
  %1551 = vmatprep.subr.mxu0 0.0
  %1552 = vmatpush1.msra.mxu0 0.0
  %1553 = vmatprep.subr.mxu0 0.0
  %1554 = vmatpush1.msra.mxu0 0.0
  %1555 = vmatprep.subr.mxu0 0.0
  %1556 = vmatpush1.msra.mxu0 0.0
  %1557 = vmatprep.subr.mxu0 0.0
  %1558 = vmatpush1.msra.mxu0 0.0
  %1559 = vmatprep.subr.mxu0 0.0
  %1560 = vmatpush1.msra.mxu0 0.0
  %1561 = vmatprep.subr.mxu0 0.0
  %1562 = vmatpush1.msra.mxu0 0.0
  %1563 = vmatprep.subr.mxu0 0.0
  %1564 = vmatpush1.msra.mxu0 0.0
  %1565 = vmatprep.subr.mxu0 0.0
  %1566 = vmatpush1.msra.mxu0 0.0
  %1567 = vmatprep.subr.mxu0 0.0
  %1568 = vmatpush1.msra.mxu0 0.0
  %1569 = vmatprep.subr.mxu0 0.0
  %1570 = vmatpush1.msra.mxu0 %v81
  %1571 = vmatprep.subr.mxu0 0.0
  %1572 = vmatpush1.msra.mxu0 %v80
  %1573 = vmatprep.subr.mxu0 0.0
  %1574 = vmatpush1.msra.mxu0 %v79
  %1575 = vmatprep.subr.mxu0 0.0
  %1576 = vmatpush1.msra.mxu0 %v78
  %1577 = vmatprep.subr.mxu0 0.0
  %1578 = vmatpush2.msra.mxu0 0.0
  %1579 = vmatprep.subr.mxu0 0.0
  %1580 = vmatpush2.msra.mxu0 0.0
  %1581 = vmatprep.subr.mxu0 0.0
  %1582 = vmatpush2.msra.mxu0 0.0
  %1583 = vmatprep.subr.mxu0 0.0
  %1584 = vmatpush2.msra.mxu0 0.0
  %1585 = vmatprep.subr.mxu0 0.0
  %1586 = vmatpush2.msra.mxu0 0.0
  %1587 = vmatprep.subr.mxu0 0.0
  %1588 = vmatpush2.msra.mxu0 0.0
  %1589 = vmatprep.subr.mxu0 0.0
  %1590 = vmatpush2.msra.mxu0 0.0
  %1591 = vmatprep.subr.mxu0 0.0
  %1592 = vmatpush2.msra.mxu0 0.0
  %1593 = vmatprep.subr.mxu0 0.0
  %1594 = vmatpush2.msra.mxu0 0.0
  %1595 = vmatprep.subr.mxu0 0.0
  %1596 = vmatpush2.msra.mxu0 0.0
  %1597 = vmatprep.subr.mxu0 0.0
  %1598 = vmatpush2.msra.mxu0 0.0
  %1599 = vmatprep.subr.mxu0 0.0
  %1600 = vmatpush2.msra.mxu0 0.0
  %1601 = vmatprep.subr.mxu0 0.0
  %1602 = vmatpush2.msra.mxu0 0.0
  %1603 = vmatprep.subr.mxu0 0.0
  %1604 = vmatpush2.msra.mxu0 0.0
  %1605 = vmatprep.subr.mxu0 0.0
  %1606 = vmatpush2.msra.mxu0 0.0
  %1607 = vmatprep.subr.mxu0 0.0
  %1608 = vmatpush2.msra.mxu0 0.0
  %1609 = vmatprep.mubr.f32.mxu0 0.0
  %1610 = vmatmul.mubr.f32.gmra.mxu0 %v1543
  %v1611 = vpop.f32.mrf.mxu0
  %v1612 = vadd.f32 0.0, %v1611
  %v1613 = vpop.f32.mrf.mxu0
  %1614 = vdwg.mxu0
  %v1615 = vadd.f32 %v1542, %v1612
  %v1616 = vld [vmem:[%s52] sm:$0xff]
  %v1617 = vsel %vm91, %v1537, 0
  %1619 = vmatprep.subr.mxu0 0.0
  %1620 = vmatpush1.msra.mxu0 0.0
  %1621 = vmatprep.subr.mxu0 0.0
  %1622 = vmatpush1.msra.mxu0 0.0
  %1623 = vmatprep.subr.mxu0 0.0
  %1624 = vmatpush1.msra.mxu0 0.0
  %1625 = vmatprep.subr.mxu0 0.0
  %1626 = vmatpush1.msra.mxu0 0.0
  %1627 = vmatprep.subr.mxu0 0.0
  %1628 = vmatpush1.msra.mxu0 0.0
  %1629 = vmatprep.subr.mxu0 0.0
  %1630 = vmatpush1.msra.mxu0 0.0
  %1631 = vmatprep.subr.mxu0 0.0
  %1632 = vmatpush1.msra.mxu0 0.0
  %1633 = vmatprep.subr.mxu0 0.0
  %1634 = vmatpush1.msra.mxu0 0.0
  %1635 = vmatprep.subr.mxu0 0.0
  %1636 = vmatpush1.msra.mxu0 0.0
  %1637 = vmatprep.subr.mxu0 0.0
  %1638 = vmatpush1.msra.mxu0 0.0
  %1639 = vmatprep.subr.mxu0 0.0
  %1640 = vmatpush1.msra.mxu0 0.0
  %1641 = vmatprep.subr.mxu0 0.0
  %1642 = vmatpush1.msra.mxu0 0.0
  %1643 = vmatprep.subr.mxu0 0.0
  %1644 = vmatpush1.msra.mxu0 %v85
  %1645 = vmatprep.subr.mxu0 0.0
  %1646 = vmatpush1.msra.mxu0 %v84
  %1647 = vmatprep.subr.mxu0 0.0
  %1648 = vmatpush1.msra.mxu0 %v83
  %1649 = vmatprep.subr.mxu0 0.0
  %1650 = vmatpush1.msra.mxu0 %v82
  %1651 = vmatprep.subr.mxu0 0.0
  %1652 = vmatpush2.msra.mxu0 0.0
  %1653 = vmatprep.subr.mxu0 0.0
  %1654 = vmatpush2.msra.mxu0 0.0
  %1655 = vmatprep.subr.mxu0 0.0
  %1656 = vmatpush2.msra.mxu0 0.0
  %1657 = vmatprep.subr.mxu0 0.0
  %1658 = vmatpush2.msra.mxu0 0.0
  %1659 = vmatprep.subr.mxu0 0.0
  %1660 = vmatpush2.msra.mxu0 0.0
  %1661 = vmatprep.subr.mxu0 0.0
  %1662 = vmatpush2.msra.mxu0 0.0
  %1663 = vmatprep.subr.mxu0 0.0
  %1664 = vmatpush2.msra.mxu0 0.0
  %1665 = vmatprep.subr.mxu0 0.0
  %1666 = vmatpush2.msra.mxu0 0.0
  %1667 = vmatprep.subr.mxu0 0.0
  %1668 = vmatpush2.msra.mxu0 0.0
  %1669 = vmatprep.subr.mxu0 0.0
  %1670 = vmatpush2.msra.mxu0 0.0
  %1671 = vmatprep.subr.mxu0 0.0
  %1672 = vmatpush2.msra.mxu0 0.0
  %1673 = vmatprep.subr.mxu0 0.0
  %1674 = vmatpush2.msra.mxu0 0.0
  %1675 = vmatprep.subr.mxu0 0.0
  %1676 = vmatpush2.msra.mxu0 0.0
  %1677 = vmatprep.subr.mxu0 0.0
  %1678 = vmatpush2.msra.mxu0 0.0
  %1679 = vmatprep.subr.mxu0 0.0
  %1680 = vmatpush2.msra.mxu0 0.0
  %1681 = vmatprep.subr.mxu0 0.0
  %1682 = vmatpush2.msra.mxu0 0.0
  %1683 = vmatprep.mubr.f32.mxu0 0.0
  %1684 = vmatmul.mubr.f32.gmra.mxu0 %v1617
  %v1685 = vpop.f32.mrf.mxu0
  %v1686 = vadd.f32 0.0, %v1685
  %v1687 = vpop.f32.mrf.mxu0
  %1688 = vdwg.mxu0
  %v1689 = vadd.f32 %v1616, %v1686
  %v1690 = vmul.f32 %v1615, 0.5
  %v1691 = vtanh.pop %v1690
  %v1692 = vmul.f32 %v1691, 0.5
  %v1693 = vadd.f32 %v1692, 0.5
  %v1694 = vtanh.pop %v1615
  %v1695 = vmul.f32 %v1689, 0.5
  %v1696 = vtanh.pop %v1695
  %v1697 = vmul.f32 %v1696, 0.5
  %v1698 = vadd.f32 %v1697, 0.5
  %v1699 = vtanh.pop %v1689
  %v1700 = vmul.f32 %v1693, %v1505
  %1702 = vrot.lane.b32.xlu0 %v1694, 64
  %v1703 = vpop.permute.xlu0 %1702
  %v1705 = vmul.f32 %v1693, %v1703
  %1707 = vrot.lane.b32.xlu0 %v1705, 32
  %v1708 = vpop.permute.xlu0 %1707
  %v1710 = vadd.f32 %v1700, %v1708
  %v1711 = vtanh.pop %v1710
  %1713 = vrot.lane.b32.xlu0 %v1711, 64
  %v1714 = vpop.permute.xlu0 %1713
  %v1716 = vmul.f32 %v1693, %v1714
  %v1717 = vmul.f32 %v1698, %v1522
  %1719 = vrot.lane.b32.xlu0 %v1699, 64
  %v1720 = vpop.permute.xlu0 %1719
  %v1722 = vmul.f32 %v1698, %v1720
  %1724 = vrot.lane.b32.xlu0 %v1722, 32
  %v1725 = vpop.permute.xlu0 %1724
  %v1727 = vadd.f32 %v1717, %v1725
  %v1728 = vtanh.pop %v1727
  %1730 = vrot.lane.b32.xlu0 %v1728, 64
  %v1731 = vpop.permute.xlu0 %1730
  %v1733 = vmul.f32 %v1698, %v1731
  %1735 = vrot.lane.b32.xlu0 %v1716, 32
  %v1736 = vpop.permute.xlu0 %1735
  %s1738 = scalar_lea.vmem %s6, 56
  %1739 = vst.msk [vmem:[%s1738] sm:$0xff] %vm91, %v1736
  %1741 = vrot.lane.b32.xlu0 %v1733, 32
  %v1742 = vpop.permute.xlu0 %1741
  %1744 = vst.msk [vmem:[%s60] sm:$0xff] %vm91, %v1742
  %1745 = vst.msk [vmem:[#allocation2] sm:$0xff] %vm91, %v1736
  %1747 = vrot.lane.b32.xlu0 %v1710, 96
  %v1748 = vpop.permute.xlu0 %1747
  %1750 = vst.msk [vmem:[#allocation3] sm:$0xff] %vm91, %v1748
  %1751 = vst.msk [vmem:[#allocation4] sm:$0xff] %vm91, %v1742
  %1753 = vrot.lane.b32.xlu0 %v1727, 96
  %v1754 = vpop.permute.xlu0 %1753
  %1756 = vst.msk [vmem:[#allocation5] sm:$0xff] %vm91, %v1754
  %1757 = vst.msk [vmem:[%s8] sm:$0xff] %vm91, %v1736
  %s1758 = scalar_lea.vmem %s8, 8
  %1759 = vst.msk [vmem:[%s1758] sm:$0xff] %vm91, %v1742
  %1760 = vst.msk [vmem:[%s9] sm:$0xff] %vm91, %v1748
  %s1761 = scalar_lea.vmem %s9, 8
  %1762 = vst.msk [vmem:[%s1761] sm:$0xff] %vm91, %v1754
  %s1763 = ssub.s32 0, 0
  %s1764 = smul.u32 8, %s1763
  %p1765 = scmp.lt.s32.totalorder %s1764, 7
  %s1766 = scalar_select %p1765, %s1764, 7
  %s1767 = smul.addr %s1766, 8
  %s1768 = scalar_lea.vmem %s7, %s1767
  // Predicated region
  $region30: #{encoder_lstm_forward.1} parent=0 // pred_check
    _
  $region31: #{encoder_lstm_forward.1} parent=0 // pred_check_branch
    %1770 = sbr.rel (0) target = $region33
  $region32: #{encoder_lstm_forward.1} parent=0 // pred_region
    _
  $region33: #{encoder_lstm_forward.1} parent=0 // pred_fallthru
    _
  // Predicated region
  $region34: #{encoder_lstm_forward.1} parent=0 // pred_check
    _
  $region35: #{encoder_lstm_forward.1} parent=0 // pred_check_branch
    %1772 = sbr.rel (0) target = $region37
  $region36: #{encoder_lstm_forward.1} parent=0 // pred_region
    %s1773 = ssub.s32 0, 0
    %s1774 = smul.u32 8, %s1773
  $region37: #{encoder_lstm_forward.1} parent=0 // pred_fallthru
    _
  // Predicated region
  $region38: #{encoder_lstm_forward.1} parent=0 // pred_check
    _
  $region39: #{encoder_lstm_forward.1} parent=0 // pred_check_branch
    %1776 = sbr.rel (0) target = $region41
  $region40: #{encoder_lstm_forward.1} parent=0 // pred_region
    _
  $region41: #{encoder_lstm_forward.1} parent=0 // pred_fallthru
    _
  // Predicated region
  $region42: #{encoder_lstm_forward.1} parent=0 // pred_check
    _
  $region43: #{encoder_lstm_forward.1} parent=0 // pred_check_branch
    %1778 = sbr.rel (0) target = $region45
  $region44: #{encoder_lstm_forward.1} parent=0 // pred_region
    _
  $region45: #{encoder_lstm_forward.1} parent=0 // pred_fallthru
    _
  // Predicated region
  $region46: #{encoder_lstm_forward.1} parent=0 // pred_check
    _
  $region47: #{encoder_lstm_forward.1} parent=0 // pred_check_branch
    %1780 = sbr.rel (0) target = $region49
  $region48: #{encoder_lstm_forward.1} parent=0 // pred_region
    _
  $region49: #{encoder_lstm_forward.1} parent=0 // pred_fallthru
    _
  // Predicated region
  $region50: #{encoder_lstm_forward.1} parent=0 // pred_check
    _
  $region51: #{encoder_lstm_forward.1} parent=0 // pred_check_branch
    %1782 = sbr.rel (0) target = $region53
  $region52: #{encoder_lstm_forward.1} parent=0 // pred_region
    %s1783 = ssub.s32 0, 0
    %s1784 = smul.u32 8, %s1783
    %p1785 = scmp.lt.s32.totalorder %s1784, 7
    %s1786 = scalar_select %p1785, %s1784, 7
    %s1787 = smul.addr %s1786, 8
    %s1788 = scalar_lea.vmem %s7, %s1787
  $region53: #{encoder_lstm_forward.1} parent=0 // pred_fallthru
    _
  // Predicated region
  $region54: #{encoder_lstm_forward.1} parent=0 // pred_check
    _
  $region55: #{encoder_lstm_forward.1} parent=0 // pred_check_branch
    %1790 = sbr.rel (0) target = $region57
  $region56: #{encoder_lstm_forward.1} parent=0 // pred_region
    _
  $region57: #{encoder_lstm_forward.1} parent=0 // pred_fallthru
    _
  // Predicated region
  $region58: #{encoder_lstm_forward.1} parent=0 // pred_check
    _
  $region59: #{encoder_lstm_forward.1} parent=0 // pred_check_branch
    %1792 = sbr.rel (0) target = $region61
  $region60: #{encoder_lstm_forward.1} parent=0 // pred_region
    _
  $region61: #{encoder_lstm_forward.1} parent=0 // pred_fallthru
    _

</llo_original>
